<compile_context>
chip_gen: v7x
topology: tpu7x:2x2x1
jax: 0.10.0
libtpu: 0.0.40
codegen_flags: <defaults>
</compile_context>

<pallas_src>
import math
import functools

import jax
import jax.numpy as jnp
from jax.experimental import pallas as pl
from jax.experimental.pallas import tpu as pltpu


# ----------------------------- kernel helpers -------------------------------

def _layernorm(x, g, b, eps=1e-5):
    # x: (S, E) f32, g/b: (1, E) f32  -- matches torch.nn.LayerNorm (biased variance)
    mu = jnp.mean(x, axis=-1, keepdims=True)
    var = jnp.mean((x - mu) ** 2, axis=-1, keepdims=True)
    return (x - mu) * jax.lax.rsqrt(var + eps) * g + b


# ----------------------------- fused Pallas kernel ---------------------------

def fused_encoder_kernel(x_ref,
                         ln0g_ref, ln0b_ref,
                         wqkv_ref, bqkv_ref,
                         wo_ref, bo_ref,
                         ln1g_ref, ln1b_ref,
                         w1_ref, b1_ref, w2_ref, b2_ref,
                         ln2g_ref, ln2b_ref,
                         o_ref, *, num_heads, num_layers):
    """Whole encoder stack for one batch element (grid over batch)."""
    H = num_heads
    x = x_ref[0].astype(jnp.float32)                      # (S, E)
    S, E = x.shape

    # top-level LayerNorm (applied before the layer stack, per the module spec)
    x = _layernorm(x, ln0g_ref[...], ln0b_ref[...])

    for li in range(num_layers):                           # static unroll over layers
        # --- self attention: fused QKV projection, head-batched ---
        xb = jnp.broadcast_to(x, (3 * H, S, E))            # (3H, S, E)
        # 1/sqrt(D) scale pre-folded into the Q block of wqkv/bqkv at init time.
        qkv = jnp.einsum('hse,hed->hsd', xb, wqkv_ref[li],
                         preferred_element_type=jnp.float32) + bqkv_ref[li]   # (3H, S, D)
        q = qkv[0 * H:1 * H]                                # (H, S, D) leading-axis slices
        k = qkv[1 * H:2 * H]                                # (free: no lane/sublane moves)
        v = qkv[2 * H:3 * H]

        s = jnp.einsum('hqd,hkd->hqk', q, k,
                       preferred_element_type=jnp.float32)                    # (H, S, S)
        s = s - jnp.max(s, axis=-1, keepdims=True)
        p = jnp.exp(s)
        p = p * pl.reciprocal(jnp.sum(p, axis=-1, keepdims=True), approx=True)

        ctx = jnp.einsum('hqk,hkd->hqd', p, v,
                         preferred_element_type=jnp.float32)                  # (H, S, D)
        # per-head output projection, then reduce over heads (== concat @ Wo^T);
        # the head reduce is a leading-axis vector sum (VPU), not an XLU reduce.
        attn = jnp.sum(jnp.einsum('hsd,hde->hse', ctx, wo_ref[li],
                                  preferred_element_type=jnp.float32),
                       axis=0) + bo_ref[li]                                   # (S, E)

        # --- add & norm 1 ---
        y = _layernorm(attn + x, ln1g_ref[li], ln1b_ref[li])

        # --- feed forward (dense1 -> ReLU -> dense2), dropouts = identity ---
        h1 = jnp.dot(y, w1_ref[li], preferred_element_type=jnp.float32) + b1_ref[li]
        h1 = jnp.maximum(h1, 0.0)
        z = jnp.dot(h1, w2_ref[li], preferred_element_type=jnp.float32) + b2_ref[li]

        # --- add & norm 2 ---
        x = _layernorm(z + y, ln2g_ref[li], ln2b_ref[li])

    o_ref[0] = x.astype(o_ref.dtype)


# ----------------------------- wrapper ----------------------------------------

def _full_spec(shape):
    """BlockSpec covering a whole (non-batched) parameter array; fetched once
    (constant index_map => Pallas skips re-DMA across grid steps)."""
    n = len(shape)
    return pl.BlockSpec(shape, lambda b, _n=n: (0,) * _n)


def transformer_encoder_forward(x, params):
    B, S, E = x.shape
    H = params["num_heads"]
    L = params["wqkv"].shape[0]
    F = params["w1"].shape[2]

    kernel = functools.partial(fused_encoder_kernel, num_heads=H, num_layers=L)

    weight_args = (
        params["ln_g"], params["ln_b"],
        params["wqkv"], params["bqkv"],
        params["wo"], params["bo"],
        params["ln1_g"], params["ln1_b"],
        params["w1"], params["b1"], params["w2"], params["b2"],
        params["ln2_g"], params["ln2_b"],
    )

    in_specs = [pl.BlockSpec((1, S, E), lambda b: (b, 0, 0))] + \
               [_full_spec(a.shape) for a in weight_args]

    # Advisory cost hint for the XLA scheduler.
    flops_per_b_per_l = (
        2 * S * E * E * 3        # fused q/k/v projections
        + 2 * S * S * E * 2      # scores + attention context
        + 2 * S * E * E          # output projection
        + 2 * S * E * F * 2      # feed-forward
    )
    flops = int(B * L * flops_per_b_per_l)
    transcendentals = int(B * L * H * S * S)               # softmax exps
    weight_bytes = int(sum(int(a.size) * a.dtype.itemsize for a in weight_args))
    bytes_accessed = int(2 * B * S * E * 4 + weight_bytes)

    return pl.pallas_call(
        kernel,
        out_shape=jax.ShapeDtypeStruct((B, S, E), x.dtype),
        grid=(B,),
        in_specs=in_specs,
        out_specs=pl.BlockSpec((1, S, E), lambda b: (b, 0, 0)),
        compiler_params=pltpu.CompilerParams(dimension_semantics=("parallel",)),
        cost_estimate=pl.CostEstimate(flops=flops,
                                      transcendentals=transcendentals,
                                      bytes_accessed=bytes_accessed),
    )(x, *weight_args)


# ----------------------------- parameter init --------------------------------

def init_params(key, embed_dim, num_heads, ff_dim, num_layers):
    E, H, F, L = embed_dim, num_heads, ff_dim, num_layers
    D = E // H
    scale = 1.0 / math.sqrt(D)

    def nrm(k, shape, s=0.05):
        return (s * jax.random.normal(k, shape)).astype(jnp.float32)

    keys = jax.random.split(key, L)
    acc = {n: [] for n in ("wqkv", "bqkv", "wo", "bo",
                           "ln1_g", "ln1_b", "w1", "b1", "w2", "b2", "ln2_g", "ln2_b")}
    for li in range(L):
        ks = jax.random.split(keys[li], 8)
        # torch shapes: in_proj_weight (3E,E), out_proj (E,E), dense1 (F,E), dense2 (E,F)
        in_proj_w = nrm(ks[0], (3 * E, E))
        in_proj_b = nrm(ks[1], (3 * E,))
        out_proj_w = nrm(ks[2], (E, E))
        out_proj_b = nrm(ks[3], (E,))
        d1_w = nrm(ks[4], (F, E)); d1_b = nrm(ks[5], (F,))
        d2_w = nrm(ks[6], (E, F)); d2_b = nrm(ks[7], (E,))

        # head-major projection weights (H, E, D): q = x @ W^T split per head
        def head_w(w_slice):
            return w_slice.T.reshape(E, H, D).transpose(1, 0, 2)     # (H, E, D)

        def head_b(b_slice):
            return b_slice.reshape(H, 1, D)                          # (H, 1, D)

        wq = head_w(in_proj_w[0 * E:1 * E]) * scale   # fold 1/sqrt(D) into Q
        wk = head_w(in_proj_w[1 * E:2 * E])
        wv = head_w(in_proj_w[2 * E:3 * E])
        bq = head_b(in_proj_b[0 * E:1 * E]) * scale
        bk = head_b(in_proj_b[1 * E:2 * E])
        bv = head_b(in_proj_b[2 * E:3 * E])

        acc["wqkv"].append(jnp.concatenate([wq, wk, wv], axis=0))    # (3H, E, D)
        acc["bqkv"].append(jnp.concatenate([bq, bk, bv], axis=0))    # (3H, 1, D)
        acc["wo"].append(out_proj_w.T.reshape(H, D, E))              # (H, D, E)
        acc["bo"].append(out_proj_b.reshape(1, E))
        acc["ln1_g"].append(jnp.ones((1, E), jnp.float32))
        acc["ln1_b"].append(jnp.zeros((1, E), jnp.float32))
        acc["w1"].append(d1_w.T)                                     # (E, F)
        acc["b1"].append(d1_b.reshape(1, F))
        acc["w2"].append(d2_w.T)                                     # (F, E)
        acc["b2"].append(d2_b.reshape(1, E))
        acc["ln2_g"].append(jnp.ones((1, E), jnp.float32))
        acc["ln2_b"].append(jnp.zeros((1, E), jnp.float32))

    params = {k: jnp.stack(v, axis=0) for k, v in acc.items()}
    params["num_heads"] = H
    params["ln_g"] = jnp.ones((1, E), jnp.float32)
    params["ln_b"] = jnp.zeros((1, E), jnp.float32)
    return params


# ----------------------------- pure-JAX reference -----------------------------

def reference_forward(x, params):
    def ln(v, g, b, eps=1e-5):
        mu = jnp.mean(v, -1, keepdims=True)
        var = jnp.mean((v - mu) ** 2, -1, keepdims=True)
        return (v - mu) / jnp.sqrt(var + eps) * g + b

    H = params["num_heads"]
    L = params["wqkv"].shape[0]
    x = ln(x, params["ln_g"], params["ln_b"])
    for li in range(L):
        wqkv = params["wqkv"][li]; bqkv = params["bqkv"][li]
        wq, wk, wv = wqkv[0:H], wqkv[H:2 * H], wqkv[2 * H:3 * H]
        bq, bk, bv = bqkv[0:H], bqkv[H:2 * H], bqkv[2 * H:3 * H]
        q = jnp.einsum('bse,hed->bhsd', x, wq) + bq[None]
        k = jnp.einsum('bse,hed->bhsd', x, wk) + bk[None]
        v = jnp.einsum('bse,hed->bhsd', x, wv) + bv[None]
        s = jnp.einsum('bhqd,bhkd->bhqk', q, k)
        p = jax.nn.softmax(s, axis=-1)
        ctx = jnp.einsum('bhqk,bhkd->bhqd', p, v)
        attn = jnp.einsum('bhsd,hde->bse', ctx, params["wo"][li]) + params["bo"][li]
        y = ln(attn + x, params["ln1_g"][li], params["ln1_b"][li])
        h1 = jax.nn.relu(jnp.einsum('bse,ef->bsf', y, params["w1"][li]) + params["b1"][li])
        z = jnp.einsum('bsf,fe->bse', h1, params["w2"][li]) + params["b2"][li]
        x = ln(z + y, params["ln2_g"][li], params["ln2_b"][li])
    return x


# ----------------------------- main -------------------------------------------

if __name__ == "__main__":
    B, S, E = 2, 8, 32          # batch, seq len, embedding dim
    H, F = 4, 64                # heads, ff_dim
    NUM_LAYERS = 2

    key = jax.random.PRNGKey(0)
    k_x, k_p = jax.random.split(key)
    x = jax.random.normal(k_x, (B, S, E), dtype=jnp.float32)
    params = init_params(k_p, E, H, F, NUM_LAYERS)

    out = transformer_encoder_forward(x, params)
    out = jax.block_until_ready(out)
    assert out.shape == (B, S, E)
    assert bool(jnp.all(jnp.isfinite(out)))

    ref = reference_forward(x, params)
    max_err = float(jnp.max(jnp.abs(out - ref)))
    assert max_err < 2e-2, f"max abs error vs reference: {max_err}"
    print("KERNEL_OK")
</pallas_src>

<mosaic_0001>
module attributes {stable_mosaic.version = 11 : i64} {
  func.func @fused_encoder_kernel(%arg0: i32, %arg1: memref<1x8x32xf32, #tpu.memory_space<vmem>>, %arg2: memref<1x32xf32, #tpu.memory_space<vmem>>, %arg3: memref<1x32xf32, #tpu.memory_space<vmem>>, %arg4: memref<2x12x32x8xf32, #tpu.memory_space<vmem>>, %arg5: memref<2x12x1x8xf32, #tpu.memory_space<vmem>>, %arg6: memref<2x4x8x32xf32, #tpu.memory_space<vmem>>, %arg7: memref<2x1x32xf32, #tpu.memory_space<vmem>>, %arg8: memref<2x1x32xf32, #tpu.memory_space<vmem>>, %arg9: memref<2x1x32xf32, #tpu.memory_space<vmem>>, %arg10: memref<2x32x64xf32, #tpu.memory_space<vmem>>, %arg11: memref<2x1x64xf32, #tpu.memory_space<vmem>>, %arg12: memref<2x64x32xf32, #tpu.memory_space<vmem>>, %arg13: memref<2x1x32xf32, #tpu.memory_space<vmem>>, %arg14: memref<2x1x32xf32, #tpu.memory_space<vmem>>, %arg15: memref<2x1x32xf32, #tpu.memory_space<vmem>>, %arg16: memref<1x8x32xf32, #tpu.memory_space<vmem>>) attributes {dimension_semantics = [#tpu.dimension_semantics<parallel>], iteration_bounds = array<i64: 2>, scalar_prefetch = 0 : i64, scratch_operands = 0 : i64, tpu.core_type = #tpu.core_type<tc>, window_params = [{transform_indices = @transform_0, window_bounds = array<i64: 1, 8, 32>}, {pipeline_mode = #tpu.pipeline_mode<synchronous>, transform_indices = @transform_1, window_bounds = array<i64: 1, 32>}, {pipeline_mode = #tpu.pipeline_mode<synchronous>, transform_indices = @transform_2, window_bounds = array<i64: 1, 32>}, {pipeline_mode = #tpu.pipeline_mode<synchronous>, transform_indices = @transform_3, window_bounds = array<i64: 2, 12, 32, 8>}, {pipeline_mode = #tpu.pipeline_mode<synchronous>, transform_indices = @transform_4, window_bounds = array<i64: 2, 12, 1, 8>}, {pipeline_mode = #tpu.pipeline_mode<synchronous>, transform_indices = @transform_5, window_bounds = array<i64: 2, 4, 8, 32>}, {pipeline_mode = #tpu.pipeline_mode<synchronous>, transform_indices = @transform_6, window_bounds = array<i64: 2, 1, 32>}, {pipeline_mode = #tpu.pipeline_mode<synchronous>, transform_indices = @transform_7, window_bounds = array<i64: 2, 1, 32>}, {pipeline_mode = #tpu.pipeline_mode<synchronous>, transform_indices = @transform_8, window_bounds = array<i64: 2, 1, 32>}, {pipeline_mode = #tpu.pipeline_mode<synchronous>, transform_indices = @transform_9, window_bounds = array<i64: 2, 32, 64>}, {pipeline_mode = #tpu.pipeline_mode<synchronous>, transform_indices = @transform_10, window_bounds = array<i64: 2, 1, 64>}, {pipeline_mode = #tpu.pipeline_mode<synchronous>, transform_indices = @transform_11, window_bounds = array<i64: 2, 64, 32>}, {pipeline_mode = #tpu.pipeline_mode<synchronous>, transform_indices = @transform_12, window_bounds = array<i64: 2, 1, 32>}, {pipeline_mode = #tpu.pipeline_mode<synchronous>, transform_indices = @transform_13, window_bounds = array<i64: 2, 1, 32>}, {pipeline_mode = #tpu.pipeline_mode<synchronous>, transform_indices = @transform_14, window_bounds = array<i64: 2, 1, 32>}, {transform_indices = @transform_15, window_bounds = array<i64: 1, 8, 32>}]} {
    %c0 = arith.constant 0 : index
    %c0_0 = arith.constant 0 : index
    %c0_1 = arith.constant 0 : index
    %0 = vector.load %arg1[%c0, %c0_0, %c0_1] : memref<1x8x32xf32, #tpu.memory_space<vmem>>, vector<1x8x32xf32>
    %1 = vector.shape_cast %0 : vector<1x8x32xf32> to vector<8x32xf32>
    %c0_2 = arith.constant 0 : index
    %c0_3 = arith.constant 0 : index
    %2 = vector.load %arg2[%c0_2, %c0_3] : memref<1x32xf32, #tpu.memory_space<vmem>>, vector<1x32xf32>
    %c0_4 = arith.constant 0 : index
    %c0_5 = arith.constant 0 : index
    %3 = vector.load %arg3[%c0_4, %c0_5] : memref<1x32xf32, #tpu.memory_space<vmem>>, vector<1x32xf32>
    %cst = arith.constant dense<0.000000e+00> : vector<8xf32>
    %4 = vector.multi_reduction <add>, %1, %cst [1] : vector<8x32xf32> to vector<8xf32>
    %5 = vector.shape_cast %4 : vector<8xf32> to vector<8x1xf32>
    %cst_6 = arith.constant 3.200000e+01 : f32
    %6 = vector.broadcast %cst_6 : f32 to vector<8x1xf32>
    %7 = arith.divf %5, %6 : vector<8x1xf32>
    %8 = vector.broadcast %7 : vector<8x1xf32> to vector<8x32xf32>
    %9 = arith.subf %1, %8 : vector<8x32xf32>
    %10 = arith.mulf %9, %9 : vector<8x32xf32>
    %cst_7 = arith.constant dense<0.000000e+00> : vector<8xf32>
    %11 = vector.multi_reduction <add>, %10, %cst_7 [1] : vector<8x32xf32> to vector<8xf32>
    %12 = vector.shape_cast %11 : vector<8xf32> to vector<8x1xf32>
    %cst_8 = arith.constant 3.200000e+01 : f32
    %13 = vector.broadcast %cst_8 : f32 to vector<8x1xf32>
    %14 = arith.divf %12, %13 : vector<8x1xf32>
    %15 = vector.broadcast %7 : vector<8x1xf32> to vector<8x32xf32>
    %16 = arith.subf %1, %15 : vector<8x32xf32>
    %cst_9 = arith.constant 9.99999974E-6 : f32
    %17 = vector.broadcast %cst_9 : f32 to vector<8x1xf32>
    %18 = arith.addf %14, %17 : vector<8x1xf32>
    %19 = math.rsqrt %18 : vector<8x1xf32>
    %20 = vector.broadcast %19 : vector<8x1xf32> to vector<8x32xf32>
    %21 = arith.mulf %16, %20 : vector<8x32xf32>
    %22 = vector.broadcast %2 : vector<1x32xf32> to vector<8x32xf32>
    %23 = arith.mulf %21, %22 : vector<8x32xf32>
    %24 = vector.broadcast %3 : vector<1x32xf32> to vector<8x32xf32>
    %25 = arith.addf %23, %24 : vector<8x32xf32>
    %26 = vector.shape_cast %25 : vector<8x32xf32> to vector<1x8x32xf32>
    %27 = vector.broadcast %26 : vector<1x8x32xf32> to vector<12x8x32xf32>
    %c0_10 = arith.constant 0 : index
    %c0_11 = arith.constant 0 : index
    %c0_12 = arith.constant 0 : index
    %c0_13 = arith.constant 0 : index
    %28 = vector.load %arg4[%c0_10, %c0_11, %c0_12, %c0_13] : memref<2x12x32x8xf32, #tpu.memory_space<vmem>>, vector<1x12x32x8xf32>
    %29 = vector.shape_cast %28 : vector<1x12x32x8xf32> to vector<12x32x8xf32>
    "tpu.trace_start"() <{level = 10 : i32, message = "hse,hed->hsd"}> : () -> ()
    %cst_14 = arith.constant dense<0.000000e+00> : vector<12x8x8xf32>
    %30 = tpu.matmul %27, %29, %cst_14 {dimension_numbers = #tpu.dot_dimension_numbers<[2], [1], [1], [2], [0, 0, 0, 1, 1, 2], [0], [0]>} : vector<12x8x32xf32>, vector<12x32x8xf32>, vector<12x8x8xf32> -> vector<12x8x8xf32>
    "tpu.trace_stop"() : () -> ()
    %c0_15 = arith.constant 0 : index
    %c0_16 = arith.constant 0 : index
    %c0_17 = arith.constant 0 : index
    %c0_18 = arith.constant 0 : index
    %31 = vector.load %arg5[%c0_15, %c0_16, %c0_17, %c0_18] : memref<2x12x1x8xf32, #tpu.memory_space<vmem>>, vector<1x12x1x8xf32>
    %32 = vector.shape_cast %31 : vector<1x12x1x8xf32> to vector<12x1x8xf32>
    %33 = vector.broadcast %32 : vector<12x1x8xf32> to vector<12x8x8xf32>
    %34 = arith.addf %30, %33 : vector<12x8x8xf32>
    %35 = vector.extract_strided_slice %34 {offsets = [0, 0, 0], sizes = [4, 8, 8], strides = [1, 1, 1]} : vector<12x8x8xf32> to vector<4x8x8xf32>
    %36 = vector.extract_strided_slice %34 {offsets = [4, 0, 0], sizes = [4, 8, 8], strides = [1, 1, 1]} : vector<12x8x8xf32> to vector<4x8x8xf32>
    %37 = vector.extract_strided_slice %34 {offsets = [8, 0, 0], sizes = [4, 8, 8], strides = [1, 1, 1]} : vector<12x8x8xf32> to vector<4x8x8xf32>
    "tpu.trace_start"() <{level = 10 : i32, message = "hqd,hkd->hqk"}> : () -> ()
    %cst_19 = arith.constant dense<0.000000e+00> : vector<4x8x8xf32>
    %38 = tpu.matmul %35, %36, %cst_19 {dimension_numbers = #tpu.dot_dimension_numbers<[2], [2], [1], [1], [0, 0, 0, 1, 1, 1], [0], [0]>} : vector<4x8x8xf32>, vector<4x8x8xf32>, vector<4x8x8xf32> -> vector<4x8x8xf32>
    "tpu.trace_stop"() : () -> ()
    %cst_20 = arith.constant dense<0xFF800000> : vector<4x8xf32>
    %39 = vector.multi_reduction <maximumf>, %38, %cst_20 [2] : vector<4x8x8xf32> to vector<4x8xf32>
    %40 = vector.shape_cast %39 : vector<4x8xf32> to vector<4x8x1xf32>
    %41 = vector.broadcast %40 : vector<4x8x1xf32> to vector<4x8x8xf32>
    %42 = arith.subf %38, %41 : vector<4x8x8xf32>
    %43 = math.exp %42 : vector<4x8x8xf32>
    %cst_21 = arith.constant dense<0.000000e+00> : vector<4x8xf32>
    %44 = vector.multi_reduction <add>, %43, %cst_21 [2] : vector<4x8x8xf32> to vector<4x8xf32>
    %45 = vector.shape_cast %44 : vector<4x8xf32> to vector<4x8x1xf32>
    %46 = tpu.reciprocal %45 {approx = true} : vector<4x8x1xf32> -> vector<4x8x1xf32>
    %47 = vector.broadcast %46 : vector<4x8x1xf32> to vector<4x8x8xf32>
    %48 = arith.mulf %43, %47 : vector<4x8x8xf32>
    "tpu.trace_start"() <{level = 10 : i32, message = "hqk,hkd->hqd"}> : () -> ()
    %cst_22 = arith.constant dense<0.000000e+00> : vector<4x8x8xf32>
    %49 = tpu.matmul %48, %37, %cst_22 {dimension_numbers = #tpu.dot_dimension_numbers<[2], [1], [1], [2], [0, 0, 0, 1, 1, 2], [0], [0]>} : vector<4x8x8xf32>, vector<4x8x8xf32>, vector<4x8x8xf32> -> vector<4x8x8xf32>
    "tpu.trace_stop"() : () -> ()
    %c0_23 = arith.constant 0 : index
    %c0_24 = arith.constant 0 : index
    %c0_25 = arith.constant 0 : index
    %c0_26 = arith.constant 0 : index
    %50 = vector.load %arg6[%c0_23, %c0_24, %c0_25, %c0_26] : memref<2x4x8x32xf32, #tpu.memory_space<vmem>>, vector<1x4x8x32xf32>
    %51 = vector.shape_cast %50 : vector<1x4x8x32xf32> to vector<4x8x32xf32>
    "tpu.trace_start"() <{level = 10 : i32, message = "hsd,hde->hse"}> : () -> ()
    %cst_27 = arith.constant dense<0.000000e+00> : vector<4x8x32xf32>
    %52 = tpu.matmul %49, %51, %cst_27 {dimension_numbers = #tpu.dot_dimension_numbers<[2], [1], [1], [2], [0, 0, 0, 1, 1, 2], [0], [0]>} : vector<4x8x8xf32>, vector<4x8x32xf32>, vector<4x8x32xf32> -> vector<4x8x32xf32>
    "tpu.trace_stop"() : () -> ()
    %cst_28 = arith.constant dense<0.000000e+00> : vector<8x32xf32>
    %53 = vector.multi_reduction <add>, %52, %cst_28 [0] : vector<4x8x32xf32> to vector<8x32xf32>
    %c0_29 = arith.constant 0 : index
    %c0_30 = arith.constant 0 : index
    %c0_31 = arith.constant 0 : index
    %54 = vector.load %arg7[%c0_29, %c0_30, %c0_31] : memref<2x1x32xf32, #tpu.memory_space<vmem>>, vector<1x1x32xf32>
    %55 = vector.shape_cast %54 : vector<1x1x32xf32> to vector<1x32xf32>
    %56 = vector.broadcast %55 : vector<1x32xf32> to vector<8x32xf32>
    %57 = arith.addf %53, %56 : vector<8x32xf32>
    %58 = arith.addf %57, %25 : vector<8x32xf32>
    %c0_32 = arith.constant 0 : index
    %c0_33 = arith.constant 0 : index
    %c0_34 = arith.constant 0 : index
    %59 = vector.load %arg8[%c0_32, %c0_33, %c0_34] : memref<2x1x32xf32, #tpu.memory_space<vmem>>, vector<1x1x32xf32>
    %60 = vector.shape_cast %59 : vector<1x1x32xf32> to vector<1x32xf32>
    %c0_35 = arith.constant 0 : index
    %c0_36 = arith.constant 0 : index
    %c0_37 = arith.constant 0 : index
    %61 = vector.load %arg9[%c0_35, %c0_36, %c0_37] : memref<2x1x32xf32, #tpu.memory_space<vmem>>, vector<1x1x32xf32>
    %62 = vector.shape_cast %61 : vector<1x1x32xf32> to vector<1x32xf32>
    %cst_38 = arith.constant dense<0.000000e+00> : vector<8xf32>
    %63 = vector.multi_reduction <add>, %58, %cst_38 [1] : vector<8x32xf32> to vector<8xf32>
    %64 = vector.shape_cast %63 : vector<8xf32> to vector<8x1xf32>
    %cst_39 = arith.constant 3.200000e+01 : f32
    %65 = vector.broadcast %cst_39 : f32 to vector<8x1xf32>
    %66 = arith.divf %64, %65 : vector<8x1xf32>
    %67 = vector.broadcast %66 : vector<8x1xf32> to vector<8x32xf32>
    %68 = arith.subf %58, %67 : vector<8x32xf32>
    %69 = arith.mulf %68, %68 : vector<8x32xf32>
    %cst_40 = arith.constant dense<0.000000e+00> : vector<8xf32>
    %70 = vector.multi_reduction <add>, %69, %cst_40 [1] : vector<8x32xf32> to vector<8xf32>
    %71 = vector.shape_cast %70 : vector<8xf32> to vector<8x1xf32>
    %cst_41 = arith.constant 3.200000e+01 : f32
    %72 = vector.broadcast %cst_41 : f32 to vector<8x1xf32>
    %73 = arith.divf %71, %72 : vector<8x1xf32>
    %74 = vector.broadcast %66 : vector<8x1xf32> to vector<8x32xf32>
    %75 = arith.subf %58, %74 : vector<8x32xf32>
    %cst_42 = arith.constant 9.99999974E-6 : f32
    %76 = vector.broadcast %cst_42 : f32 to vector<8x1xf32>
    %77 = arith.addf %73, %76 : vector<8x1xf32>
    %78 = math.rsqrt %77 : vector<8x1xf32>
    %79 = vector.broadcast %78 : vector<8x1xf32> to vector<8x32xf32>
    %80 = arith.mulf %75, %79 : vector<8x32xf32>
    %81 = vector.broadcast %60 : vector<1x32xf32> to vector<8x32xf32>
    %82 = arith.mulf %80, %81 : vector<8x32xf32>
    %83 = vector.broadcast %62 : vector<1x32xf32> to vector<8x32xf32>
    %84 = arith.addf %82, %83 : vector<8x32xf32>
    %c0_43 = arith.constant 0 : index
    %c0_44 = arith.constant 0 : index
    %c0_45 = arith.constant 0 : index
    %85 = vector.load %arg10[%c0_43, %c0_44, %c0_45] : memref<2x32x64xf32, #tpu.memory_space<vmem>>, vector<1x32x64xf32>
    %86 = vector.shape_cast %85 : vector<1x32x64xf32> to vector<32x64xf32>
    %cst_46 = arith.constant dense<0.000000e+00> : vector<8x64xf32>
    %87 = tpu.matmul %84, %86, %cst_46 {dimension_numbers = #tpu.dot_dimension_numbers<[1], [0], [0], [1], [0, 0, 1, 1], [], []>} : vector<8x32xf32>, vector<32x64xf32>, vector<8x64xf32> -> vector<8x64xf32>
    %c0_47 = arith.constant 0 : index
    %c0_48 = arith.constant 0 : index
    %c0_49 = arith.constant 0 : index
    %88 = vector.load %arg11[%c0_47, %c0_48, %c0_49] : memref<2x1x64xf32, #tpu.memory_space<vmem>>, vector<1x1x64xf32>
    %89 = vector.shape_cast %88 : vector<1x1x64xf32> to vector<1x64xf32>
    %90 = vector.broadcast %89 : vector<1x64xf32> to vector<8x64xf32>
    %91 = arith.addf %87, %90 : vector<8x64xf32>
    %cst_50 = arith.constant 0.000000e+00 : f32
    %92 = vector.broadcast %cst_50 : f32 to vector<8x64xf32>
    %93 = arith.maximumf %91, %92 : vector<8x64xf32>
    %c0_51 = arith.constant 0 : index
    %c0_52 = arith.constant 0 : index
    %c0_53 = arith.constant 0 : index
    %94 = vector.load %arg12[%c0_51, %c0_52, %c0_53] : memref<2x64x32xf32, #tpu.memory_space<vmem>>, vector<1x64x32xf32>
    %95 = vector.shape_cast %94 : vector<1x64x32xf32> to vector<64x32xf32>
    %cst_54 = arith.constant dense<0.000000e+00> : vector<8x32xf32>
    %96 = tpu.matmul %93, %95, %cst_54 {dimension_numbers = #tpu.dot_dimension_numbers<[1], [0], [0], [1], [0, 0, 1, 1], [], []>} : vector<8x64xf32>, vector<64x32xf32>, vector<8x32xf32> -> vector<8x32xf32>
    %c0_55 = arith.constant 0 : index
    %c0_56 = arith.constant 0 : index
    %c0_57 = arith.constant 0 : index
    %97 = vector.load %arg13[%c0_55, %c0_56, %c0_57] : memref<2x1x32xf32, #tpu.memory_space<vmem>>, vector<1x1x32xf32>
    %98 = vector.shape_cast %97 : vector<1x1x32xf32> to vector<1x32xf32>
    %99 = vector.broadcast %98 : vector<1x32xf32> to vector<8x32xf32>
    %100 = arith.addf %96, %99 : vector<8x32xf32>
    %101 = arith.addf %100, %84 : vector<8x32xf32>
    %c0_58 = arith.constant 0 : index
    %c0_59 = arith.constant 0 : index
    %c0_60 = arith.constant 0 : index
    %102 = vector.load %arg14[%c0_58, %c0_59, %c0_60] : memref<2x1x32xf32, #tpu.memory_space<vmem>>, vector<1x1x32xf32>
    %103 = vector.shape_cast %102 : vector<1x1x32xf32> to vector<1x32xf32>
    %c0_61 = arith.constant 0 : index
    %c0_62 = arith.constant 0 : index
    %c0_63 = arith.constant 0 : index
    %104 = vector.load %arg15[%c0_61, %c0_62, %c0_63] : memref<2x1x32xf32, #tpu.memory_space<vmem>>, vector<1x1x32xf32>
    %105 = vector.shape_cast %104 : vector<1x1x32xf32> to vector<1x32xf32>
    %cst_64 = arith.constant dense<0.000000e+00> : vector<8xf32>
    %106 = vector.multi_reduction <add>, %101, %cst_64 [1] : vector<8x32xf32> to vector<8xf32>
    %107 = vector.shape_cast %106 : vector<8xf32> to vector<8x1xf32>
    %cst_65 = arith.constant 3.200000e+01 : f32
    %108 = vector.broadcast %cst_65 : f32 to vector<8x1xf32>
    %109 = arith.divf %107, %108 : vector<8x1xf32>
    %110 = vector.broadcast %109 : vector<8x1xf32> to vector<8x32xf32>
    %111 = arith.subf %101, %110 : vector<8x32xf32>
    %112 = arith.mulf %111, %111 : vector<8x32xf32>
    %cst_66 = arith.constant dense<0.000000e+00> : vector<8xf32>
    %113 = vector.multi_reduction <add>, %112, %cst_66 [1] : vector<8x32xf32> to vector<8xf32>
    %114 = vector.shape_cast %113 : vector<8xf32> to vector<8x1xf32>
    %cst_67 = arith.constant 3.200000e+01 : f32
    %115 = vector.broadcast %cst_67 : f32 to vector<8x1xf32>
    %116 = arith.divf %114, %115 : vector<8x1xf32>
    %117 = vector.broadcast %109 : vector<8x1xf32> to vector<8x32xf32>
    %118 = arith.subf %101, %117 : vector<8x32xf32>
    %cst_68 = arith.constant 9.99999974E-6 : f32
    %119 = vector.broadcast %cst_68 : f32 to vector<8x1xf32>
    %120 = arith.addf %116, %119 : vector<8x1xf32>
    %121 = math.rsqrt %120 : vector<8x1xf32>
    %122 = vector.broadcast %121 : vector<8x1xf32> to vector<8x32xf32>
    %123 = arith.mulf %118, %122 : vector<8x32xf32>
    %124 = vector.broadcast %103 : vector<1x32xf32> to vector<8x32xf32>
    %125 = arith.mulf %123, %124 : vector<8x32xf32>
    %126 = vector.broadcast %105 : vector<1x32xf32> to vector<8x32xf32>
    %127 = arith.addf %125, %126 : vector<8x32xf32>
    %128 = vector.shape_cast %127 : vector<8x32xf32> to vector<1x8x32xf32>
    %129 = vector.broadcast %128 : vector<1x8x32xf32> to vector<12x8x32xf32>
    %c1 = arith.constant 1 : index
    %c0_69 = arith.constant 0 : index
    %c0_70 = arith.constant 0 : index
    %c0_71 = arith.constant 0 : index
    %130 = vector.load %arg4[%c1, %c0_69, %c0_70, %c0_71] : memref<2x12x32x8xf32, #tpu.memory_space<vmem>>, vector<1x12x32x8xf32>
    %131 = vector.shape_cast %130 : vector<1x12x32x8xf32> to vector<12x32x8xf32>
    "tpu.trace_start"() <{level = 10 : i32, message = "hse,hed->hsd"}> : () -> ()
    %cst_72 = arith.constant dense<0.000000e+00> : vector<12x8x8xf32>
    %132 = tpu.matmul %129, %131, %cst_72 {dimension_numbers = #tpu.dot_dimension_numbers<[2], [1], [1], [2], [0, 0, 0, 1, 1, 2], [0], [0]>} : vector<12x8x32xf32>, vector<12x32x8xf32>, vector<12x8x8xf32> -> vector<12x8x8xf32>
    "tpu.trace_stop"() : () -> ()
    %c1_73 = arith.constant 1 : index
    %c0_74 = arith.constant 0 : index
    %c0_75 = arith.constant 0 : index
    %c0_76 = arith.constant 0 : index
    %133 = vector.load %arg5[%c1_73, %c0_74, %c0_75, %c0_76] : memref<2x12x1x8xf32, #tpu.memory_space<vmem>>, vector<1x12x1x8xf32>
    %134 = vector.shape_cast %133 : vector<1x12x1x8xf32> to vector<12x1x8xf32>
    %135 = vector.broadcast %134 : vector<12x1x8xf32> to vector<12x8x8xf32>
    %136 = arith.addf %132, %135 : vector<12x8x8xf32>
    %137 = vector.extract_strided_slice %136 {offsets = [0, 0, 0], sizes = [4, 8, 8], strides = [1, 1, 1]} : vector<12x8x8xf32> to vector<4x8x8xf32>
    %138 = vector.extract_strided_slice %136 {offsets = [4, 0, 0], sizes = [4, 8, 8], strides = [1, 1, 1]} : vector<12x8x8xf32> to vector<4x8x8xf32>
    %139 = vector.extract_strided_slice %136 {offsets = [8, 0, 0], sizes = [4, 8, 8], strides = [1, 1, 1]} : vector<12x8x8xf32> to vector<4x8x8xf32>
    "tpu.trace_start"() <{level = 10 : i32, message = "hqd,hkd->hqk"}> : () -> ()
    %cst_77 = arith.constant dense<0.000000e+00> : vector<4x8x8xf32>
    %140 = tpu.matmul %137, %138, %cst_77 {dimension_numbers = #tpu.dot_dimension_numbers<[2], [2], [1], [1], [0, 0, 0, 1, 1, 1], [0], [0]>} : vector<4x8x8xf32>, vector<4x8x8xf32>, vector<4x8x8xf32> -> vector<4x8x8xf32>
    "tpu.trace_stop"() : () -> ()
    %cst_78 = arith.constant dense<0xFF800000> : vector<4x8xf32>
    %141 = vector.multi_reduction <maximumf>, %140, %cst_78 [2] : vector<4x8x8xf32> to vector<4x8xf32>
    %142 = vector.shape_cast %141 : vector<4x8xf32> to vector<4x8x1xf32>
    %143 = vector.broadcast %142 : vector<4x8x1xf32> to vector<4x8x8xf32>
    %144 = arith.subf %140, %143 : vector<4x8x8xf32>
    %145 = math.exp %144 : vector<4x8x8xf32>
    %cst_79 = arith.constant dense<0.000000e+00> : vector<4x8xf32>
    %146 = vector.multi_reduction <add>, %145, %cst_79 [2] : vector<4x8x8xf32> to vector<4x8xf32>
    %147 = vector.shape_cast %146 : vector<4x8xf32> to vector<4x8x1xf32>
    %148 = tpu.reciprocal %147 {approx = true} : vector<4x8x1xf32> -> vector<4x8x1xf32>
    %149 = vector.broadcast %148 : vector<4x8x1xf32> to vector<4x8x8xf32>
    %150 = arith.mulf %145, %149 : vector<4x8x8xf32>
    "tpu.trace_start"() <{level = 10 : i32, message = "hqk,hkd->hqd"}> : () -> ()
    %cst_80 = arith.constant dense<0.000000e+00> : vector<4x8x8xf32>
    %151 = tpu.matmul %150, %139, %cst_80 {dimension_numbers = #tpu.dot_dimension_numbers<[2], [1], [1], [2], [0, 0, 0, 1, 1, 2], [0], [0]>} : vector<4x8x8xf32>, vector<4x8x8xf32>, vector<4x8x8xf32> -> vector<4x8x8xf32>
    "tpu.trace_stop"() : () -> ()
    %c1_81 = arith.constant 1 : index
    %c0_82 = arith.constant 0 : index
    %c0_83 = arith.constant 0 : index
    %c0_84 = arith.constant 0 : index
    %152 = vector.load %arg6[%c1_81, %c0_82, %c0_83, %c0_84] : memref<2x4x8x32xf32, #tpu.memory_space<vmem>>, vector<1x4x8x32xf32>
    %153 = vector.shape_cast %152 : vector<1x4x8x32xf32> to vector<4x8x32xf32>
    "tpu.trace_start"() <{level = 10 : i32, message = "hsd,hde->hse"}> : () -> ()
    %cst_85 = arith.constant dense<0.000000e+00> : vector<4x8x32xf32>
    %154 = tpu.matmul %151, %153, %cst_85 {dimension_numbers = #tpu.dot_dimension_numbers<[2], [1], [1], [2], [0, 0, 0, 1, 1, 2], [0], [0]>} : vector<4x8x8xf32>, vector<4x8x32xf32>, vector<4x8x32xf32> -> vector<4x8x32xf32>
    "tpu.trace_stop"() : () -> ()
    %cst_86 = arith.constant dense<0.000000e+00> : vector<8x32xf32>
    %155 = vector.multi_reduction <add>, %154, %cst_86 [0] : vector<4x8x32xf32> to vector<8x32xf32>
    %c1_87 = arith.constant 1 : index
    %c0_88 = arith.constant 0 : index
    %c0_89 = arith.constant 0 : index
    %156 = vector.load %arg7[%c1_87, %c0_88, %c0_89] : memref<2x1x32xf32, #tpu.memory_space<vmem>>, vector<1x1x32xf32>
    %157 = vector.shape_cast %156 : vector<1x1x32xf32> to vector<1x32xf32>
    %158 = vector.broadcast %157 : vector<1x32xf32> to vector<8x32xf32>
    %159 = arith.addf %155, %158 : vector<8x32xf32>
    %160 = arith.addf %159, %127 : vector<8x32xf32>
    %c1_90 = arith.constant 1 : index
    %c0_91 = arith.constant 0 : index
    %c0_92 = arith.constant 0 : index
    %161 = vector.load %arg8[%c1_90, %c0_91, %c0_92] : memref<2x1x32xf32, #tpu.memory_space<vmem>>, vector<1x1x32xf32>
    %162 = vector.shape_cast %161 : vector<1x1x32xf32> to vector<1x32xf32>
    %c1_93 = arith.constant 1 : index
    %c0_94 = arith.constant 0 : index
    %c0_95 = arith.constant 0 : index
    %163 = vector.load %arg9[%c1_93, %c0_94, %c0_95] : memref<2x1x32xf32, #tpu.memory_space<vmem>>, vector<1x1x32xf32>
    %164 = vector.shape_cast %163 : vector<1x1x32xf32> to vector<1x32xf32>
    %cst_96 = arith.constant dense<0.000000e+00> : vector<8xf32>
    %165 = vector.multi_reduction <add>, %160, %cst_96 [1] : vector<8x32xf32> to vector<8xf32>
    %166 = vector.shape_cast %165 : vector<8xf32> to vector<8x1xf32>
    %cst_97 = arith.constant 3.200000e+01 : f32
    %167 = vector.broadcast %cst_97 : f32 to vector<8x1xf32>
    %168 = arith.divf %166, %167 : vector<8x1xf32>
    %169 = vector.broadcast %168 : vector<8x1xf32> to vector<8x32xf32>
    %170 = arith.subf %160, %169 : vector<8x32xf32>
    %171 = arith.mulf %170, %170 : vector<8x32xf32>
    %cst_98 = arith.constant dense<0.000000e+00> : vector<8xf32>
    %172 = vector.multi_reduction <add>, %171, %cst_98 [1] : vector<8x32xf32> to vector<8xf32>
    %173 = vector.shape_cast %172 : vector<8xf32> to vector<8x1xf32>
    %cst_99 = arith.constant 3.200000e+01 : f32
    %174 = vector.broadcast %cst_99 : f32 to vector<8x1xf32>
    %175 = arith.divf %173, %174 : vector<8x1xf32>
    %176 = vector.broadcast %168 : vector<8x1xf32> to vector<8x32xf32>
    %177 = arith.subf %160, %176 : vector<8x32xf32>
    %cst_100 = arith.constant 9.99999974E-6 : f32
    %178 = vector.broadcast %cst_100 : f32 to vector<8x1xf32>
    %179 = arith.addf %175, %178 : vector<8x1xf32>
    %180 = math.rsqrt %179 : vector<8x1xf32>
    %181 = vector.broadcast %180 : vector<8x1xf32> to vector<8x32xf32>
    %182 = arith.mulf %177, %181 : vector<8x32xf32>
    %183 = vector.broadcast %162 : vector<1x32xf32> to vector<8x32xf32>
    %184 = arith.mulf %182, %183 : vector<8x32xf32>
    %185 = vector.broadcast %164 : vector<1x32xf32> to vector<8x32xf32>
    %186 = arith.addf %184, %185 : vector<8x32xf32>
    %c1_101 = arith.constant 1 : index
    %c0_102 = arith.constant 0 : index
    %c0_103 = arith.constant 0 : index
    %187 = vector.load %arg10[%c1_101, %c0_102, %c0_103] : memref<2x32x64xf32, #tpu.memory_space<vmem>>, vector<1x32x64xf32>
    %188 = vector.shape_cast %187 : vector<1x32x64xf32> to vector<32x64xf32>
    %cst_104 = arith.constant dense<0.000000e+00> : vector<8x64xf32>
    %189 = tpu.matmul %186, %188, %cst_104 {dimension_numbers = #tpu.dot_dimension_numbers<[1], [0], [0], [1], [0, 0, 1, 1], [], []>} : vector<8x32xf32>, vector<32x64xf32>, vector<8x64xf32> -> vector<8x64xf32>
    %c1_105 = arith.constant 1 : index
    %c0_106 = arith.constant 0 : index
    %c0_107 = arith.constant 0 : index
    %190 = vector.load %arg11[%c1_105, %c0_106, %c0_107] : memref<2x1x64xf32, #tpu.memory_space<vmem>>, vector<1x1x64xf32>
    %191 = vector.shape_cast %190 : vector<1x1x64xf32> to vector<1x64xf32>
    %192 = vector.broadcast %191 : vector<1x64xf32> to vector<8x64xf32>
    %193 = arith.addf %189, %192 : vector<8x64xf32>
    %cst_108 = arith.constant 0.000000e+00 : f32
    %194 = vector.broadcast %cst_108 : f32 to vector<8x64xf32>
    %195 = arith.maximumf %193, %194 : vector<8x64xf32>
    %c1_109 = arith.constant 1 : index
    %c0_110 = arith.constant 0 : index
    %c0_111 = arith.constant 0 : index
    %196 = vector.load %arg12[%c1_109, %c0_110, %c0_111] : memref<2x64x32xf32, #tpu.memory_space<vmem>>, vector<1x64x32xf32>
    %197 = vector.shape_cast %196 : vector<1x64x32xf32> to vector<64x32xf32>
    %cst_112 = arith.constant dense<0.000000e+00> : vector<8x32xf32>
    %198 = tpu.matmul %195, %197, %cst_112 {dimension_numbers = #tpu.dot_dimension_numbers<[1], [0], [0], [1], [0, 0, 1, 1], [], []>} : vector<8x64xf32>, vector<64x32xf32>, vector<8x32xf32> -> vector<8x32xf32>
    %c1_113 = arith.constant 1 : index
    %c0_114 = arith.constant 0 : index
    %c0_115 = arith.constant 0 : index
    %199 = vector.load %arg13[%c1_113, %c0_114, %c0_115] : memref<2x1x32xf32, #tpu.memory_space<vmem>>, vector<1x1x32xf32>
    %200 = vector.shape_cast %199 : vector<1x1x32xf32> to vector<1x32xf32>
    %201 = vector.broadcast %200 : vector<1x32xf32> to vector<8x32xf32>
    %202 = arith.addf %198, %201 : vector<8x32xf32>
    %203 = arith.addf %202, %186 : vector<8x32xf32>
    %c1_116 = arith.constant 1 : index
    %c0_117 = arith.constant 0 : index
    %c0_118 = arith.constant 0 : index
    %204 = vector.load %arg14[%c1_116, %c0_117, %c0_118] : memref<2x1x32xf32, #tpu.memory_space<vmem>>, vector<1x1x32xf32>
    %205 = vector.shape_cast %204 : vector<1x1x32xf32> to vector<1x32xf32>
    %c1_119 = arith.constant 1 : index
    %c0_120 = arith.constant 0 : index
    %c0_121 = arith.constant 0 : index
    %206 = vector.load %arg15[%c1_119, %c0_120, %c0_121] : memref<2x1x32xf32, #tpu.memory_space<vmem>>, vector<1x1x32xf32>
    %207 = vector.shape_cast %206 : vector<1x1x32xf32> to vector<1x32xf32>
    %cst_122 = arith.constant dense<0.000000e+00> : vector<8xf32>
    %208 = vector.multi_reduction <add>, %203, %cst_122 [1] : vector<8x32xf32> to vector<8xf32>
    %209 = vector.shape_cast %208 : vector<8xf32> to vector<8x1xf32>
    %cst_123 = arith.constant 3.200000e+01 : f32
    %210 = vector.broadcast %cst_123 : f32 to vector<8x1xf32>
    %211 = arith.divf %209, %210 : vector<8x1xf32>
    %212 = vector.broadcast %211 : vector<8x1xf32> to vector<8x32xf32>
    %213 = arith.subf %203, %212 : vector<8x32xf32>
    %214 = arith.mulf %213, %213 : vector<8x32xf32>
    %cst_124 = arith.constant dense<0.000000e+00> : vector<8xf32>
    %215 = vector.multi_reduction <add>, %214, %cst_124 [1] : vector<8x32xf32> to vector<8xf32>
    %216 = vector.shape_cast %215 : vector<8xf32> to vector<8x1xf32>
    %cst_125 = arith.constant 3.200000e+01 : f32
    %217 = vector.broadcast %cst_125 : f32 to vector<8x1xf32>
    %218 = arith.divf %216, %217 : vector<8x1xf32>
    %219 = vector.broadcast %211 : vector<8x1xf32> to vector<8x32xf32>
    %220 = arith.subf %203, %219 : vector<8x32xf32>
    %cst_126 = arith.constant 9.99999974E-6 : f32
    %221 = vector.broadcast %cst_126 : f32 to vector<8x1xf32>
    %222 = arith.addf %218, %221 : vector<8x1xf32>
    %223 = math.rsqrt %222 : vector<8x1xf32>
    %224 = vector.broadcast %223 : vector<8x1xf32> to vector<8x32xf32>
    %225 = arith.mulf %220, %224 : vector<8x32xf32>
    %226 = vector.broadcast %205 : vector<1x32xf32> to vector<8x32xf32>
    %227 = arith.mulf %225, %226 : vector<8x32xf32>
    %228 = vector.broadcast %207 : vector<1x32xf32> to vector<8x32xf32>
    %229 = arith.addf %227, %228 : vector<8x32xf32>
    %c0_127 = arith.constant 0 : index
    %c0_128 = arith.constant 0 : index
    %c0_129 = arith.constant 0 : index
    %230 = vector.load %arg16[%c0_127, %c0_128, %c0_129] : memref<1x8x32xf32, #tpu.memory_space<vmem>>, vector<1x8x32xf32>
    %231 = vector.shape_cast %230 : vector<1x8x32xf32> to vector<8x32xf32>
    %232 = vector.shape_cast %229 : vector<8x32xf32> to vector<1x8x32xf32>
    tpu.vector_store %arg16[%c0_127, %c0_128, %c0_129], %232 {strides = array<i32>} : memref<1x8x32xf32, #tpu.memory_space<vmem>>, vector<1x8x32xf32>,
    return
  }
  func.func @transform_0(%arg0: i32) -> (i32, i32, i32) {
    %c0_i32 = arith.constant 0 : i32
    %c0_i32_0 = arith.constant 0 : i32
    %c0_i32_1 = arith.constant 0 : i32
    return %arg0, %c0_i32, %c0_i32_0 : i32, i32, i32
  }
  func.func @transform_1(%arg0: i32) -> (i32, i32) {
    %c0_i32 = arith.constant 0 : i32
    %c0_i32_0 = arith.constant 0 : i32
    %c0_i32_1 = arith.constant 0 : i32
    return %c0_i32, %c0_i32_0 : i32, i32
  }
  func.func @transform_2(%arg0: i32) -> (i32, i32) {
    %c0_i32 = arith.constant 0 : i32
    %c0_i32_0 = arith.constant 0 : i32
    %c0_i32_1 = arith.constant 0 : i32
    return %c0_i32, %c0_i32_0 : i32, i32
  }
  func.func @transform_3(%arg0: i32) -> (i32, i32, i32, i32) {
    %c0_i32 = arith.constant 0 : i32
    %c0_i32_0 = arith.constant 0 : i32
    %c0_i32_1 = arith.constant 0 : i32
    %c0_i32_2 = arith.constant 0 : i32
    %c0_i32_3 = arith.constant 0 : i32
    return %c0_i32, %c0_i32_0, %c0_i32_1, %c0_i32_2 : i32, i32, i32, i32
  }
  func.func @transform_4(%arg0: i32) -> (i32, i32, i32, i32) {
    %c0_i32 = arith.constant 0 : i32
    %c0_i32_0 = arith.constant 0 : i32
    %c0_i32_1 = arith.constant 0 : i32
    %c0_i32_2 = arith.constant 0 : i32
    %c0_i32_3 = arith.constant 0 : i32
    return %c0_i32, %c0_i32_0, %c0_i32_1, %c0_i32_2 : i32, i32, i32, i32
  }
  func.func @transform_5(%arg0: i32) -> (i32, i32, i32, i32) {
    %c0_i32 = arith.constant 0 : i32
    %c0_i32_0 = arith.constant 0 : i32
    %c0_i32_1 = arith.constant 0 : i32
    %c0_i32_2 = arith.constant 0 : i32
    %c0_i32_3 = arith.constant 0 : i32
    return %c0_i32, %c0_i32_0, %c0_i32_1, %c0_i32_2 : i32, i32, i32, i32
  }
  func.func @transform_6(%arg0: i32) -> (i32, i32, i32) {
    %c0_i32 = arith.constant 0 : i32
    %c0_i32_0 = arith.constant 0 : i32
    %c0_i32_1 = arith.constant 0 : i32
    %c0_i32_2 = arith.constant 0 : i32
    return %c0_i32, %c0_i32_0, %c0_i32_1 : i32, i32, i32
  }
  func.func @transform_7(%arg0: i32) -> (i32, i32, i32) {
    %c0_i32 = arith.constant 0 : i32
    %c0_i32_0 = arith.constant 0 : i32
    %c0_i32_1 = arith.constant 0 : i32
    %c0_i32_2 = arith.constant 0 : i32
    return %c0_i32, %c0_i32_0, %c0_i32_1 : i32, i32, i32
  }
  func.func @transform_8(%arg0: i32) -> (i32, i32, i32) {
    %c0_i32 = arith.constant 0 : i32
    %c0_i32_0 = arith.constant 0 : i32
    %c0_i32_1 = arith.constant 0 : i32
    %c0_i32_2 = arith.constant 0 : i32
    return %c0_i32, %c0_i32_0, %c0_i32_1 : i32, i32, i32
  }
  func.func @transform_9(%arg0: i32) -> (i32, i32, i32) {
    %c0_i32 = arith.constant 0 : i32
    %c0_i32_0 = arith.constant 0 : i32
    %c0_i32_1 = arith.constant 0 : i32
    %c0_i32_2 = arith.constant 0 : i32
    return %c0_i32, %c0_i32_0, %c0_i32_1 : i32, i32, i32
  }
  func.func @transform_10(%arg0: i32) -> (i32, i32, i32) {
    %c0_i32 = arith.constant 0 : i32
    %c0_i32_0 = arith.constant 0 : i32
    %c0_i32_1 = arith.constant 0 : i32
    %c0_i32_2 = arith.constant 0 : i32
    return %c0_i32, %c0_i32_0, %c0_i32_1 : i32, i32, i32
  }
  func.func @transform_11(%arg0: i32) -> (i32, i32, i32) {
    %c0_i32 = arith.constant 0 : i32
    %c0_i32_0 = arith.constant 0 : i32
    %c0_i32_1 = arith.constant 0 : i32
    %c0_i32_2 = arith.constant 0 : i32
    return %c0_i32, %c0_i32_0, %c0_i32_1 : i32, i32, i32
  }
  func.func @transform_12(%arg0: i32) -> (i32, i32, i32) {
    %c0_i32 = arith.constant 0 : i32
    %c0_i32_0 = arith.constant 0 : i32
    %c0_i32_1 = arith.constant 0 : i32
    %c0_i32_2 = arith.constant 0 : i32
    return %c0_i32, %c0_i32_0, %c0_i32_1 : i32, i32, i32
  }
  func.func @transform_13(%arg0: i32) -> (i32, i32, i32) {
    %c0_i32 = arith.constant 0 : i32
    %c0_i32_0 = arith.constant 0 : i32
    %c0_i32_1 = arith.constant 0 : i32
    %c0_i32_2 = arith.constant 0 : i32
    return %c0_i32, %c0_i32_0, %c0_i32_1 : i32, i32, i32
  }
  func.func @transform_14(%arg0: i32) -> (i32, i32, i32) {
    %c0_i32 = arith.constant 0 : i32
    %c0_i32_0 = arith.constant 0 : i32
    %c0_i32_1 = arith.constant 0 : i32
    %c0_i32_2 = arith.constant 0 : i32
    return %c0_i32, %c0_i32_0, %c0_i32_1 : i32, i32, i32
  }
  func.func @transform_15(%arg0: i32) -> (i32, i32, i32) {
    %c0_i32 = arith.constant 0 : i32
    %c0_i32_0 = arith.constant 0 : i32
    %c0_i32_1 = arith.constant 0 : i32
    return %arg0, %c0_i32, %c0_i32_0 : i32, i32, i32
  }
}

</mosaic_0001>

<llo_original>
// kernel: tpu_custom_call.1
$region0: #{tpu_custom_call.1}
  #allocation0 [shape = 'u32[]', space=smem, size = 0x4, offset = 0x4, fixed_abs, tag = 'smem constant byte address 0x4 - core index']
  #allocation1 [shape = 'u32[144,128]{1,0:T(1,128)}', space=vmem, size = 0x12000, scoped, tag = 'internal scratch']
  %s0 = inlined_call_operand.vmem [shape: f32[2,8,32], index: 0, kind: input, shape index: {}]
  %s1 = inlined_call_operand.vmem [shape: f32[1,32], index: 1, kind: input, shape index: {}]
  %s2 = inlined_call_operand.vmem [shape: f32[1,32], index: 2, kind: input, shape index: {}]
  %s3 = inlined_call_operand.vmem [shape: f32[2,12,32,8], index: 3, kind: input, shape index: {}]
  %s4 = inlined_call_operand.vmem [shape: f32[2,12,1,8], index: 4, kind: input, shape index: {}]
  %s5 = inlined_call_operand.vmem [shape: f32[2,4,8,32], index: 5, kind: input, shape index: {}]
  %s6 = inlined_call_operand.vmem [shape: f32[2,1,32], index: 6, kind: input, shape index: {}]
  %s7 = inlined_call_operand.vmem [shape: f32[2,1,32], index: 7, kind: input, shape index: {}]
  %s8 = inlined_call_operand.vmem [shape: f32[2,1,32], index: 8, kind: input, shape index: {}]
  %s9 = inlined_call_operand.vmem [shape: f32[2,32,64], index: 9, kind: input, shape index: {}]
  %s10 = inlined_call_operand.vmem [shape: f32[2,1,64], index: 10, kind: input, shape index: {}]
  %s11 = inlined_call_operand.vmem [shape: f32[2,64,32], index: 11, kind: input, shape index: {}]
  %s12 = inlined_call_operand.vmem [shape: f32[2,1,32], index: 12, kind: input, shape index: {}]
  %s13 = inlined_call_operand.vmem [shape: f32[2,1,32], index: 13, kind: input, shape index: {}]
  %s14 = inlined_call_operand.vmem [shape: f32[2,1,32], index: 14, kind: input, shape index: {}]
  %s15 = inlined_call_operand.hbm [shape: f32[2,8,32], index: 15, kind: output, shape index: {}]
  %s16 = sld [smem:[#allocation0]]
  $region93: #{tpu_custom_call.1} parent=0
    _
  %s18 = ssub.s32 1, %s16
  %s19 = scalar_select 0, %s18, %s16
  $region1: #{tpu_custom_call.1} parent=0
    #allocation2 [shape = 'u8[8192]{0}', space=vmem, size = 0x2000, scoped, tag = 'output window, operand 0']
    #allocation3 [shape = 's32[2]{0}', space=sflag, size = 0x8, scoped, tag = 'scoped memory for tpu_custom_call.1']
    %20 = vsyncpa [#allocation3], 0
    %s21 = scalar_lea.sflag [#allocation3], 1
    %22 = vsyncpa %s21, 0
    loop: start=0, step=1, limit=4
    $region2: #{tpu_custom_call.1} parent=1 // loop_pre_header
      _
    $region3: #{tpu_custom_call.1} parent=1 // loop_header
      %s24 = sphi 0, %s28
      %p25 = scmp.ge.s32.totalorder %s24, 4
      %s34 = sphi 0, %s36
      %s37 = sphi 0, %s34
      %s38 = sphi 0, %s37
      %s54 = sphi 0, %s38
      %s58 = sphi 0, %s58
      %s60 = sphi 0, %s58
      %s61 = sphi 0, %s60
      %s75 = sphi 0, %s61
      %s79 = sphi 0, %s79
      %s81 = sphi 0, %s79
      %s82 = sphi 0, %s81
      %s96 = sphi 0, %s82
      %s100 = sphi 0, %s100
      %s102 = sphi 0, %s100
      %s103 = sphi 0, %s102
      %s117 = sphi 0, %s103
      %s121 = sphi 0, %s121
      %s123 = sphi 0, %s121
      %s124 = sphi 0, %s123
      %s138 = sphi 0, %s124
      %s142 = sphi 0, %s142
      %s144 = sphi 0, %s142
      %s145 = sphi 0, %s144
      %s159 = sphi 0, %s145
      %s163 = sphi 0, %s163
      %s165 = sphi 0, %s163
      %s166 = sphi 0, %s165
      %s180 = sphi 0, %s166
      %s184 = sphi 0, %s184
      %s186 = sphi 0, %s184
      %s187 = sphi 0, %s186
      %s201 = sphi 0, %s187
      %s205 = sphi 0, %s205
      %s207 = sphi 0, %s205
      %s208 = sphi 0, %s207
      %s222 = sphi 0, %s208
      %s226 = sphi 0, %s226
      %s228 = sphi 0, %s226
      %s229 = sphi 0, %s228
      %s243 = sphi 0, %s229
      %s247 = sphi 0, %s247
      %s249 = sphi 0, %s247
      %s250 = sphi 0, %s249
      %s264 = sphi 0, %s250
      %s268 = sphi 0, %s268
      %s270 = sphi 0, %s268
      %s271 = sphi 0, %s270
      %s285 = sphi 0, %s271
      %s289 = sphi 0, %s289
      %s291 = sphi 0, %s289
      %s292 = sphi 0, %s291
      %s306 = sphi 0, %s292
      %s310 = sphi 0, %s310
      %s312 = sphi 0, %s310
      %s313 = sphi 0, %s312
      %s327 = sphi 0, %s313
      %s331 = sphi 0, %s331
      %s333 = sphi 0, %s331
      %s334 = sphi 0, %s333
      %s348 = sphi 0, %s334
      %s354 = sphi 0, %s356
      %s357 = sphi 0, %s354
      %s358 = sphi 0, %s357
      %s374 = sphi 0, %s358
    $region4: #{tpu_custom_call.1} parent=1 // loop_header_branch
      %27 = sbr.rel (%p25) target = $region8
    $region5: #{tpu_custom_call.1} parent=1 // loop_body
      %s29 = ssub.s32 %s24, 1
      %s30 = ssub.s32 %s24, 2
      %s31 = sadd.s32 %s24, 1
      %s32 = ssub.s32 %s24, %s31
      %p33 = scmp.eq.s32.totalorder %s32, 0
      %s35 = sadd.s32 %s34, 1
      %s36 = scalar_select %p33, %s34, %s35
      %p39 = pneg %p33
      %p40 = scmp.eq.s32.totalorder %s24, 1
      %p41 = por %p39, %p40
      %p42 = scmp.ne.s32.totalorder %s34, %s37
      %p43 = scmp.eq.s32.totalorder %s24, 0
      %p44 = por %p42, %p43
      %p45 = scmp.ne.s32.totalorder %s34, %s37
      %p46 = scmp.eq.s32.totalorder %s29, 1
      %p47 = por %p45, %p46
      %p48 = scmp.ne.s32.totalorder %s37, %s38
      %p49 = scmp.eq.s32.totalorder %s29, 0
      %p50 = por %p48, %p49
      %p51 = scmp.ne.s32.totalorder %s37, %s38
      %p52 = scmp.eq.s32.totalorder %s30, 1
      %p53 = por %p51, %p52
      %p55 = scmp.ne.s32.totalorder %s38, %s54
      %p56 = scmp.eq.s32.totalorder %s30, 0
      %p57 = por %p55, %p56
      %s59 = sadd.s32 %s58, 1
      %p62 = scmp.eq.s32.totalorder %s24, 1
      %p63 = scmp.ne.s32.totalorder %s58, %s60
      %p64 = scmp.eq.s32.totalorder %s24, 0
      %p65 = por %p63, %p64
      %p66 = scmp.ne.s32.totalorder %s58, %s60
      %p67 = scmp.eq.s32.totalorder %s29, 1
      %p68 = por %p66, %p67
      %p69 = scmp.ne.s32.totalorder %s60, %s61
      %p70 = scmp.eq.s32.totalorder %s29, 0
      %p71 = por %p69, %p70
      %p72 = scmp.ne.s32.totalorder %s60, %s61
      %p73 = scmp.eq.s32.totalorder %s30, 1
      %p74 = por %p72, %p73
      %p76 = scmp.ne.s32.totalorder %s61, %s75
      %p77 = scmp.eq.s32.totalorder %s30, 0
      %p78 = por %p76, %p77
      %s80 = sadd.s32 %s79, 1
      %p83 = scmp.eq.s32.totalorder %s24, 1
      %p84 = scmp.ne.s32.totalorder %s79, %s81
      %p85 = scmp.eq.s32.totalorder %s24, 0
      %p86 = por %p84, %p85
      %p87 = scmp.ne.s32.totalorder %s79, %s81
      %p88 = scmp.eq.s32.totalorder %s29, 1
      %p89 = por %p87, %p88
      %p90 = scmp.ne.s32.totalorder %s81, %s82
      %p91 = scmp.eq.s32.totalorder %s29, 0
      %p92 = por %p90, %p91
      %p93 = scmp.ne.s32.totalorder %s81, %s82
      %p94 = scmp.eq.s32.totalorder %s30, 1
      %p95 = por %p93, %p94
      %p97 = scmp.ne.s32.totalorder %s82, %s96
      %p98 = scmp.eq.s32.totalorder %s30, 0
      %p99 = por %p97, %p98
      %s101 = sadd.s32 %s100, 1
      %p104 = scmp.eq.s32.totalorder %s24, 1
      %p105 = scmp.ne.s32.totalorder %s100, %s102
      %p106 = scmp.eq.s32.totalorder %s24, 0
      %p107 = por %p105, %p106
      %p108 = scmp.ne.s32.totalorder %s100, %s102
      %p109 = scmp.eq.s32.totalorder %s29, 1
      %p110 = por %p108, %p109
      %p111 = scmp.ne.s32.totalorder %s102, %s103
      %p112 = scmp.eq.s32.totalorder %s29, 0
      %p113 = por %p111, %p112
      %p114 = scmp.ne.s32.totalorder %s102, %s103
      %p115 = scmp.eq.s32.totalorder %s30, 1
      %p116 = por %p114, %p115
      %p118 = scmp.ne.s32.totalorder %s103, %s117
      %p119 = scmp.eq.s32.totalorder %s30, 0
      %p120 = por %p118, %p119
      %s122 = sadd.s32 %s121, 1
      %p125 = scmp.eq.s32.totalorder %s24, 1
      %p126 = scmp.ne.s32.totalorder %s121, %s123
      %p127 = scmp.eq.s32.totalorder %s24, 0
      %p128 = por %p126, %p127
      %p129 = scmp.ne.s32.totalorder %s121, %s123
      %p130 = scmp.eq.s32.totalorder %s29, 1
      %p131 = por %p129, %p130
      %p132 = scmp.ne.s32.totalorder %s123, %s124
      %p133 = scmp.eq.s32.totalorder %s29, 0
      %p134 = por %p132, %p133
      %p135 = scmp.ne.s32.totalorder %s123, %s124
      %p136 = scmp.eq.s32.totalorder %s30, 1
      %p137 = por %p135, %p136
      %p139 = scmp.ne.s32.totalorder %s124, %s138
      %p140 = scmp.eq.s32.totalorder %s30, 0
      %p141 = por %p139, %p140
      %s143 = sadd.s32 %s142, 1
      %p146 = scmp.eq.s32.totalorder %s24, 1
      %p147 = scmp.ne.s32.totalorder %s142, %s144
      %p148 = scmp.eq.s32.totalorder %s24, 0
      %p149 = por %p147, %p148
      %p150 = scmp.ne.s32.totalorder %s142, %s144
      %p151 = scmp.eq.s32.totalorder %s29, 1
      %p152 = por %p150, %p151
      %p153 = scmp.ne.s32.totalorder %s144, %s145
      %p154 = scmp.eq.s32.totalorder %s29, 0
      %p155 = por %p153, %p154
      %p156 = scmp.ne.s32.totalorder %s144, %s145
      %p157 = scmp.eq.s32.totalorder %s30, 1
      %p158 = por %p156, %p157
      %p160 = scmp.ne.s32.totalorder %s145, %s159
      %p161 = scmp.eq.s32.totalorder %s30, 0
      %p162 = por %p160, %p161
      %s164 = sadd.s32 %s163, 1
      %p167 = scmp.eq.s32.totalorder %s24, 1
      %p168 = scmp.ne.s32.totalorder %s163, %s165
      %p169 = scmp.eq.s32.totalorder %s24, 0
      %p170 = por %p168, %p169
      %p171 = scmp.ne.s32.totalorder %s163, %s165
      %p172 = scmp.eq.s32.totalorder %s29, 1
      %p173 = por %p171, %p172
      %p174 = scmp.ne.s32.totalorder %s165, %s166
      %p175 = scmp.eq.s32.totalorder %s29, 0
      %p176 = por %p174, %p175
      %p177 = scmp.ne.s32.totalorder %s165, %s166
      %p178 = scmp.eq.s32.totalorder %s30, 1
      %p179 = por %p177, %p178
      %p181 = scmp.ne.s32.totalorder %s166, %s180
      %p182 = scmp.eq.s32.totalorder %s30, 0
      %p183 = por %p181, %p182
      %s185 = sadd.s32 %s184, 1
      %p188 = scmp.eq.s32.totalorder %s24, 1
      %p189 = scmp.ne.s32.totalorder %s184, %s186
      %p190 = scmp.eq.s32.totalorder %s24, 0
      %p191 = por %p189, %p190
      %p192 = scmp.ne.s32.totalorder %s184, %s186
      %p193 = scmp.eq.s32.totalorder %s29, 1
      %p194 = por %p192, %p193
      %p195 = scmp.ne.s32.totalorder %s186, %s187
      %p196 = scmp.eq.s32.totalorder %s29, 0
      %p197 = por %p195, %p196
      %p198 = scmp.ne.s32.totalorder %s186, %s187
      %p199 = scmp.eq.s32.totalorder %s30, 1
      %p200 = por %p198, %p199
      %p202 = scmp.ne.s32.totalorder %s187, %s201
      %p203 = scmp.eq.s32.totalorder %s30, 0
      %p204 = por %p202, %p203
      %s206 = sadd.s32 %s205, 1
      %p209 = scmp.eq.s32.totalorder %s24, 1
      %p210 = scmp.ne.s32.totalorder %s205, %s207
      %p211 = scmp.eq.s32.totalorder %s24, 0
      %p212 = por %p210, %p211
      %p213 = scmp.ne.s32.totalorder %s205, %s207
      %p214 = scmp.eq.s32.totalorder %s29, 1
      %p215 = por %p213, %p214
      %p216 = scmp.ne.s32.totalorder %s207, %s208
      %p217 = scmp.eq.s32.totalorder %s29, 0
      %p218 = por %p216, %p217
      %p219 = scmp.ne.s32.totalorder %s207, %s208
      %p220 = scmp.eq.s32.totalorder %s30, 1
      %p221 = por %p219, %p220
      %p223 = scmp.ne.s32.totalorder %s208, %s222
      %p224 = scmp.eq.s32.totalorder %s30, 0
      %p225 = por %p223, %p224
      %s227 = sadd.s32 %s226, 1
      %p230 = scmp.eq.s32.totalorder %s24, 1
      %p231 = scmp.ne.s32.totalorder %s226, %s228
      %p232 = scmp.eq.s32.totalorder %s24, 0
      %p233 = por %p231, %p232
      %p234 = scmp.ne.s32.totalorder %s226, %s228
      %p235 = scmp.eq.s32.totalorder %s29, 1
      %p236 = por %p234, %p235
      %p237 = scmp.ne.s32.totalorder %s228, %s229
      %p238 = scmp.eq.s32.totalorder %s29, 0
      %p239 = por %p237, %p238
      %p240 = scmp.ne.s32.totalorder %s228, %s229
      %p241 = scmp.eq.s32.totalorder %s30, 1
      %p242 = por %p240, %p241
      %p244 = scmp.ne.s32.totalorder %s229, %s243
      %p245 = scmp.eq.s32.totalorder %s30, 0
      %p246 = por %p244, %p245
      %s248 = sadd.s32 %s247, 1
      %p251 = scmp.eq.s32.totalorder %s24, 1
      %p252 = scmp.ne.s32.totalorder %s247, %s249
      %p253 = scmp.eq.s32.totalorder %s24, 0
      %p254 = por %p252, %p253
      %p255 = scmp.ne.s32.totalorder %s247, %s249
      %p256 = scmp.eq.s32.totalorder %s29, 1
      %p257 = por %p255, %p256
      %p258 = scmp.ne.s32.totalorder %s249, %s250
      %p259 = scmp.eq.s32.totalorder %s29, 0
      %p260 = por %p258, %p259
      %p261 = scmp.ne.s32.totalorder %s249, %s250
      %p262 = scmp.eq.s32.totalorder %s30, 1
      %p263 = por %p261, %p262
      %p265 = scmp.ne.s32.totalorder %s250, %s264
      %p266 = scmp.eq.s32.totalorder %s30, 0
      %p267 = por %p265, %p266
      %s269 = sadd.s32 %s268, 1
      %p272 = scmp.eq.s32.totalorder %s24, 1
      %p273 = scmp.ne.s32.totalorder %s268, %s270
      %p274 = scmp.eq.s32.totalorder %s24, 0
      %p275 = por %p273, %p274
      %p276 = scmp.ne.s32.totalorder %s268, %s270
      %p277 = scmp.eq.s32.totalorder %s29, 1
      %p278 = por %p276, %p277
      %p279 = scmp.ne.s32.totalorder %s270, %s271
      %p280 = scmp.eq.s32.totalorder %s29, 0
      %p281 = por %p279, %p280
      %p282 = scmp.ne.s32.totalorder %s270, %s271
      %p283 = scmp.eq.s32.totalorder %s30, 1
      %p284 = por %p282, %p283
      %p286 = scmp.ne.s32.totalorder %s271, %s285
      %p287 = scmp.eq.s32.totalorder %s30, 0
      %p288 = por %p286, %p287
      %s290 = sadd.s32 %s289, 1
      %p293 = scmp.eq.s32.totalorder %s24, 1
      %p294 = scmp.ne.s32.totalorder %s289, %s291
      %p295 = scmp.eq.s32.totalorder %s24, 0
      %p296 = por %p294, %p295
      %p297 = scmp.ne.s32.totalorder %s289, %s291
      %p298 = scmp.eq.s32.totalorder %s29, 1
      %p299 = por %p297, %p298
      %p300 = scmp.ne.s32.totalorder %s291, %s292
      %p301 = scmp.eq.s32.totalorder %s29, 0
      %p302 = por %p300, %p301
      %p303 = scmp.ne.s32.totalorder %s291, %s292
      %p304 = scmp.eq.s32.totalorder %s30, 1
      %p305 = por %p303, %p304
      %p307 = scmp.ne.s32.totalorder %s292, %s306
      %p308 = scmp.eq.s32.totalorder %s30, 0
      %p309 = por %p307, %p308
      %s311 = sadd.s32 %s310, 1
      %p314 = scmp.eq.s32.totalorder %s24, 1
      %p315 = scmp.ne.s32.totalorder %s310, %s312
      %p316 = scmp.eq.s32.totalorder %s24, 0
      %p317 = por %p315, %p316
      %p318 = scmp.ne.s32.totalorder %s310, %s312
      %p319 = scmp.eq.s32.totalorder %s29, 1
      %p320 = por %p318, %p319
      %p321 = scmp.ne.s32.totalorder %s312, %s313
      %p322 = scmp.eq.s32.totalorder %s29, 0
      %p323 = por %p321, %p322
      %p324 = scmp.ne.s32.totalorder %s312, %s313
      %p325 = scmp.eq.s32.totalorder %s30, 1
      %p326 = por %p324, %p325
      %p328 = scmp.ne.s32.totalorder %s313, %s327
      %p329 = scmp.eq.s32.totalorder %s30, 0
      %p330 = por %p328, %p329
      %s332 = sadd.s32 %s331, 1
      %p335 = scmp.eq.s32.totalorder %s24, 1
      %p336 = scmp.ne.s32.totalorder %s331, %s333
      %p337 = scmp.eq.s32.totalorder %s24, 0
      %p338 = por %p336, %p337
      %p339 = scmp.ne.s32.totalorder %s331, %s333
      %p340 = scmp.eq.s32.totalorder %s29, 1
      %p341 = por %p339, %p340
      %p342 = scmp.ne.s32.totalorder %s333, %s334
      %p343 = scmp.eq.s32.totalorder %s29, 0
      %p344 = por %p342, %p343
      %p345 = scmp.ne.s32.totalorder %s333, %s334
      %p346 = scmp.eq.s32.totalorder %s30, 1
      %p347 = por %p345, %p346
      %p349 = scmp.ne.s32.totalorder %s334, %s348
      %p350 = scmp.eq.s32.totalorder %s30, 0
      %p351 = por %p349, %p350
      %s352 = ssub.s32 %s24, %s31
      %p353 = scmp.eq.s32.totalorder %s352, 0
      %s355 = sadd.s32 %s354, 1
      %s356 = scalar_select %p353, %s354, %s355
      %p359 = pneg %p353
      %p360 = scmp.eq.s32.totalorder %s24, 1
      %p361 = por %p359, %p360
      %p362 = scmp.ne.s32.totalorder %s354, %s357
      %p363 = scmp.eq.s32.totalorder %s24, 0
      %p364 = por %p362, %p363
      %p365 = scmp.ne.s32.totalorder %s354, %s357
      %p366 = scmp.eq.s32.totalorder %s29, 1
      %p367 = por %p365, %p366
      %p368 = scmp.ne.s32.totalorder %s357, %s358
      %p369 = scmp.eq.s32.totalorder %s29, 0
      %p370 = por %p368, %p369
      %p371 = scmp.ne.s32.totalorder %s357, %s358
      %p372 = scmp.eq.s32.totalorder %s30, 1
      %p373 = por %p371, %p372
      %p375 = scmp.ne.s32.totalorder %s358, %s374
      %p376 = scmp.eq.s32.totalorder %s30, 0
      %p377 = por %p375, %p376
      %p378 = scmp.le.s32.totalorder 1, %s24
      %p379 = scmp.lt.s32.totalorder %s24, 3
      %p380 = pnand %p378, %p379
      %p381 = pneg %p380
      // Predicated region
      $region9: #{tpu_custom_call.1} parent=5 // pred_check
        _
      $region10: #{tpu_custom_call.1} parent=5 // pred_check_branch
        %383 = sbr.rel (%p380) target = $region12
      $region11: #{tpu_custom_call.1} parent=5 // pred_region
        %s384 = ssub.s32 %s24, 1
        // Predicated region
        $region13: #{tpu_custom_call.1} parent=11 // pred_check
          %p385 = pneg %p71
        $region14: #{tpu_custom_call.1} parent=11 // pred_check_branch
          %387 = sbr.rel (%p385) target = $region16
        $region15: #{tpu_custom_call.1} parent=11 // pred_region
          _
        $region16: #{tpu_custom_call.1} parent=11 // pred_fallthru
          _
        // Predicated region
        $region17: #{tpu_custom_call.1} parent=11 // pred_check
          %p388 = pneg %p92
        $region18: #{tpu_custom_call.1} parent=11 // pred_check_branch
          %390 = sbr.rel (%p388) target = $region20
        $region19: #{tpu_custom_call.1} parent=11 // pred_region
          _
        $region20: #{tpu_custom_call.1} parent=11 // pred_fallthru
          _
        // Predicated region
        $region21: #{tpu_custom_call.1} parent=11 // pred_check
          %p391 = pneg %p113
        $region22: #{tpu_custom_call.1} parent=11 // pred_check_branch
          %393 = sbr.rel (%p391) target = $region24
        $region23: #{tpu_custom_call.1} parent=11 // pred_region
          _
        $region24: #{tpu_custom_call.1} parent=11 // pred_fallthru
          _
        // Predicated region
        $region25: #{tpu_custom_call.1} parent=11 // pred_check
          %p394 = pneg %p134
        $region26: #{tpu_custom_call.1} parent=11 // pred_check_branch
          %396 = sbr.rel (%p394) target = $region28
        $region27: #{tpu_custom_call.1} parent=11 // pred_region
          _
        $region28: #{tpu_custom_call.1} parent=11 // pred_fallthru
          _
        // Predicated region
        $region29: #{tpu_custom_call.1} parent=11 // pred_check
          %p397 = pneg %p155
        $region30: #{tpu_custom_call.1} parent=11 // pred_check_branch
          %399 = sbr.rel (%p397) target = $region32
        $region31: #{tpu_custom_call.1} parent=11 // pred_region
          _
        $region32: #{tpu_custom_call.1} parent=11 // pred_fallthru
          _
        // Predicated region
        $region33: #{tpu_custom_call.1} parent=11 // pred_check
          %p400 = pneg %p176
        $region34: #{tpu_custom_call.1} parent=11 // pred_check_branch
          %402 = sbr.rel (%p400) target = $region36
        $region35: #{tpu_custom_call.1} parent=11 // pred_region
          _
        $region36: #{tpu_custom_call.1} parent=11 // pred_fallthru
          _
        // Predicated region
        $region37: #{tpu_custom_call.1} parent=11 // pred_check
          %p403 = pneg %p197
        $region38: #{tpu_custom_call.1} parent=11 // pred_check_branch
          %405 = sbr.rel (%p403) target = $region40
        $region39: #{tpu_custom_call.1} parent=11 // pred_region
          _
        $region40: #{tpu_custom_call.1} parent=11 // pred_fallthru
          _
        // Predicated region
        $region41: #{tpu_custom_call.1} parent=11 // pred_check
          %p406 = pneg %p218
        $region42: #{tpu_custom_call.1} parent=11 // pred_check_branch
          %408 = sbr.rel (%p406) target = $region44
        $region43: #{tpu_custom_call.1} parent=11 // pred_region
          _
        $region44: #{tpu_custom_call.1} parent=11 // pred_fallthru
          _
        // Predicated region
        $region45: #{tpu_custom_call.1} parent=11 // pred_check
          %p409 = pneg %p239
        $region46: #{tpu_custom_call.1} parent=11 // pred_check_branch
          %411 = sbr.rel (%p409) target = $region48
        $region47: #{tpu_custom_call.1} parent=11 // pred_region
          _
        $region48: #{tpu_custom_call.1} parent=11 // pred_fallthru
          _
        // Predicated region
        $region49: #{tpu_custom_call.1} parent=11 // pred_check
          %p412 = pneg %p260
        $region50: #{tpu_custom_call.1} parent=11 // pred_check_branch
          %414 = sbr.rel (%p412) target = $region52
        $region51: #{tpu_custom_call.1} parent=11 // pred_region
          _
        $region52: #{tpu_custom_call.1} parent=11 // pred_fallthru
          _
        // Predicated region
        $region53: #{tpu_custom_call.1} parent=11 // pred_check
          %p415 = pneg %p281
        $region54: #{tpu_custom_call.1} parent=11 // pred_check_branch
          %417 = sbr.rel (%p415) target = $region56
        $region55: #{tpu_custom_call.1} parent=11 // pred_region
          _
        $region56: #{tpu_custom_call.1} parent=11 // pred_fallthru
          _
        // Predicated region
        $region57: #{tpu_custom_call.1} parent=11 // pred_check
          %p418 = pneg %p302
        $region58: #{tpu_custom_call.1} parent=11 // pred_check_branch
          %420 = sbr.rel (%p418) target = $region60
        $region59: #{tpu_custom_call.1} parent=11 // pred_region
          _
        $region60: #{tpu_custom_call.1} parent=11 // pred_fallthru
          _
        // Predicated region
        $region61: #{tpu_custom_call.1} parent=11 // pred_check
          %p421 = pneg %p323
        $region62: #{tpu_custom_call.1} parent=11 // pred_check_branch
          %423 = sbr.rel (%p421) target = $region64
        $region63: #{tpu_custom_call.1} parent=11 // pred_region
          _
        $region64: #{tpu_custom_call.1} parent=11 // pred_fallthru
          _
        // Predicated region
        $region65: #{tpu_custom_call.1} parent=11 // pred_check
          %p424 = pneg %p344
        $region66: #{tpu_custom_call.1} parent=11 // pred_check_branch
          %426 = sbr.rel (%p424) target = $region68
        $region67: #{tpu_custom_call.1} parent=11 // pred_region
          _
        $region68: #{tpu_custom_call.1} parent=11 // pred_fallthru
          _
      $region12: #{tpu_custom_call.1} parent=5 // pred_fallthru
        _
      %p427 = scmp.lt.s32.totalorder %s24, 2
      // Predicated region
      $region69: #{tpu_custom_call.1} parent=5 // pred_check
        %p428 = pneg %p427
      $region70: #{tpu_custom_call.1} parent=5 // pred_check_branch
        %430 = sbr.rel (%p428) target = $region72
      $region71: #{tpu_custom_call.1} parent=5 // pred_region
        // Predicated region
        $region73: #{tpu_custom_call.1} parent=71 // pred_check
          %p431 = pneg %p44
        $region74: #{tpu_custom_call.1} parent=71 // pred_check_branch
          %433 = sbr.rel (%p431) target = $region76
        $region75: #{tpu_custom_call.1} parent=71 // pred_region
          %p434 = scmp.lt.s32.totalorder %s24, 1
          %s435 = scalar_select %p434, %s24, 1
          %s436 = smul.addr %s435, 8
          %s437 = scalar_lea.vmem %s0, %s436
        $region76: #{tpu_custom_call.1} parent=71 // pred_fallthru
          _
      $region72: #{tpu_custom_call.1} parent=5 // pred_fallthru
        _
      %p438 = scmp.le.s32.totalorder 1, %s24
      %p439 = scmp.lt.s32.totalorder %s24, 3
      %p440 = pnand %p438, %p439
      %p441 = pneg %p440
      // Predicated region
      $region77: #{tpu_custom_call.1} parent=5 // pred_check
        _
      $region78: #{tpu_custom_call.1} parent=5 // pred_check_branch
        %443 = sbr.rel (%p440) target = $region80
      $region79: #{tpu_custom_call.1} parent=5 // pred_region
        %s444 = ssub.s32 %s24, 1
        %p445 = scmp.lt.s32.totalorder %s29, 1
        %s446 = scalar_select %p445, %s29, 1
        %s447 = smul.addr %s446, 8
        %s448 = scalar_lea.vmem %s0, %s447
        %p449 = pneg %p50
        %p450 = pneg %p47
        %p451 = pneg %p71
        %p452 = pneg %p68
        %p453 = pneg %p92
        %p454 = pneg %p89
        %p455 = pneg %p113
        %p456 = pneg %p110
        %p457 = pneg %p134
        %p458 = pneg %p131
        %p459 = pneg %p155
        %p460 = pneg %p152
        %p461 = pneg %p176
        %p462 = pneg %p173
        %p463 = pneg %p197
        %p464 = pneg %p194
        %p465 = pneg %p218
        %p466 = pneg %p215
        %p467 = pneg %p239
        %p468 = pneg %p236
        %p469 = pneg %p260
        %p470 = pneg %p257
        %p471 = pneg %p281
        %p472 = pneg %p278
        %p473 = pneg %p302
        %p474 = pneg %p299
        %p475 = pneg %p323
        %p476 = pneg %p320
        %p477 = pneg %p344
        %p478 = pneg %p341
        %p479 = pneg %p370
        %p480 = pneg %p367
        %s481 = sand.u32 %s357, 1
        %s482 = scalar_lea.sflag [#allocation3], %s481
        %s483 = sand.u32 %s357, 1
        %s484 = smul.addr %s483, 8
        %s485 = scalar_lea.vmem [#allocation2], %s484
        %p486 = scmp.lt.s32.totalorder %s29, 1
        %s487 = scalar_select %p486, %s29, 1
        %s488 = smul.addr %s487, 8
        %s489 = scalar_lea.vmem %s0, %s488
        %v490 = vld [vmem:[%s489] sm:$0xff]
        %v491 = vld [vmem:[%s1] sm:$0x1]
        %v492 = vld [vmem:[%s2] sm:$0x1]
        %vm493 = vcmask 261120
        %v494 = vsel %vm493, %v490, 0.0
        %495 = vadd.xlane.f32.xlu0 %v494
        %v496 = vpop.xlane.xlu0 %495
        %v497 = vrcp.pop 32.0
        %v498 = vmul.f32 %v496, %v497
        %v499 = vsub.f32 %v490, %v498
        %v500 = vmul.f32 %v499, %v499
        %v501 = vsel %vm493, %v500, 0.0
        %502 = vadd.xlane.f32.xlu0 %v501
        %v503 = vpop.xlane.xlu0 %502
        %v504 = vmul.f32 %v503, %v497
        %v505 = vadd.f32 %v504, 1e-05
        %v506 = vrsqrt.pop %v505
        %v507 = vmul.f32 %v499, %v506
        %v509 = vlaneseq
        %v510 = vshrl.u32 %v509, 7
        %v511 = vsub.s32 0, %v510
        %v512 = vrot.slane %v491, %v511
        %v514 = vmul.f32 %v507, %v512
        %v516 = vlaneseq
        %v517 = vshrl.u32 %v516, 7
        %v518 = vsub.s32 0, %v517
        %v519 = vrot.slane %v492, %v518
        %v521 = vadd.f32 %v514, %v519
        %v522 = vld [vmem:[%s3] sm:$0xff]
        %v523 = vld [vmem:[%s3 + $0x8] sm:$0xff]
        %v524 = vld [vmem:[%s3 + $0x10] sm:$0xff]
        %v525 = vld [vmem:[%s3 + $0x18] sm:$0xff]
        %v526 = vld [vmem:[%s3 + $0x20] sm:$0xff]
        %v527 = vld [vmem:[%s3 + $0x28] sm:$0xff]
        %v528 = vld [vmem:[%s3 + $0x30] sm:$0xff]
        %v529 = vld [vmem:[%s3 + $0x38] sm:$0xff]
        %v530 = vld [vmem:[%s3 + $0x40] sm:$0xff]
        %v531 = vld [vmem:[%s3 + $0x48] sm:$0xff]
        %v532 = vld [vmem:[%s3 + $0x50] sm:$0xff]
        %v533 = vld [vmem:[%s3 + $0x58] sm:$0xff]
        %v534 = vld [vmem:[%s3 + $0x60] sm:$0xff]
        %v535 = vld [vmem:[%s3 + $0x68] sm:$0xff]
        %v536 = vld [vmem:[%s3 + $0x70] sm:$0xff]
        %v537 = vld [vmem:[%s3 + $0x78] sm:$0xff]
        %v538 = vld [vmem:[%s3 + $0x80] sm:$0xff]
        %v539 = vld [vmem:[%s3 + $0x88] sm:$0xff]
        %v540 = vld [vmem:[%s3 + $0x90] sm:$0xff]
        %v541 = vld [vmem:[%s3 + $0x98] sm:$0xff]
        %v542 = vld [vmem:[%s3 + $0xa0] sm:$0xff]
        %v543 = vld [vmem:[%s3 + $0xa8] sm:$0xff]
        %v544 = vld [vmem:[%s3 + $0xb0] sm:$0xff]
        %v545 = vld [vmem:[%s3 + $0xb8] sm:$0xff]
        %v546 = vld [vmem:[%s3 + $0xc0] sm:$0xff]
        %v547 = vld [vmem:[%s3 + $0xc8] sm:$0xff]
        %v548 = vld [vmem:[%s3 + $0xd0] sm:$0xff]
        %v549 = vld [vmem:[%s3 + $0xd8] sm:$0xff]
        %v550 = vld [vmem:[%s3 + $0xe0] sm:$0xff]
        %v551 = vld [vmem:[%s3 + $0xe8] sm:$0xff]
        %v552 = vld [vmem:[%s3 + $0xf0] sm:$0xff]
        %v553 = vld [vmem:[%s3 + $0xf8] sm:$0xff]
        %v554 = vld [vmem:[%s3 + $0x100] sm:$0xff]
        %v555 = vld [vmem:[%s3 + $0x108] sm:$0xff]
        %v556 = vld [vmem:[%s3 + $0x110] sm:$0xff]
        %v557 = vld [vmem:[%s3 + $0x118] sm:$0xff]
        %v558 = vld [vmem:[%s3 + $0x120] sm:$0xff]
        %v559 = vld [vmem:[%s3 + $0x128] sm:$0xff]
        %v560 = vld [vmem:[%s3 + $0x130] sm:$0xff]
        %v561 = vld [vmem:[%s3 + $0x138] sm:$0xff]
        %v562 = vld [vmem:[%s3 + $0x140] sm:$0xff]
        %v563 = vld [vmem:[%s3 + $0x148] sm:$0xff]
        %v564 = vld [vmem:[%s3 + $0x150] sm:$0xff]
        %v565 = vld [vmem:[%s3 + $0x158] sm:$0xff]
        %v566 = vld [vmem:[%s3 + $0x160] sm:$0xff]
        %v567 = vld [vmem:[%s3 + $0x168] sm:$0xff]
        %v568 = vld [vmem:[%s3 + $0x170] sm:$0xff]
        %v569 = vld [vmem:[%s3 + $0x178] sm:$0xff]
        %v570 = vld [vmem:[%s4] sm:$0x1]
        %v571 = vld [vmem:[%s4 + $0x1] sm:$0x1]
        %v572 = vld [vmem:[%s4 + $0x2] sm:$0x1]
        %v573 = vld [vmem:[%s4 + $0x3] sm:$0x1]
        %v574 = vld [vmem:[%s4 + $0x4] sm:$0x1]
        %v575 = vld [vmem:[%s4 + $0x5] sm:$0x1]
        %v576 = vld [vmem:[%s4 + $0x6] sm:$0x1]
        %v577 = vld [vmem:[%s4 + $0x7] sm:$0x1]
        %v578 = vld [vmem:[%s4 + $0x8] sm:$0x1]
        %v579 = vld [vmem:[%s4 + $0x9] sm:$0x1]
        %v580 = vld [vmem:[%s4 + $0xa] sm:$0x1]
        %v581 = vld [vmem:[%s4 + $0xb] sm:$0x1]
        %v594 = vlaneseq
        %v595 = vshrl.u32 %v594, 7
        %v596 = vsub.s32 0, %v595
        %v597 = vrot.slane %v570, %v596
        %v598 = vlaneseq
        %v599 = vshrl.u32 %v598, 7
        %v600 = vsub.s32 0, %v599
        %v601 = vrot.slane %v571, %v600
        %v602 = vlaneseq
        %v603 = vshrl.u32 %v602, 7
        %v604 = vsub.s32 0, %v603
        %v605 = vrot.slane %v572, %v604
        %v606 = vlaneseq
        %v607 = vshrl.u32 %v606, 7
        %v608 = vsub.s32 0, %v607
        %v609 = vrot.slane %v573, %v608
        %v610 = vlaneseq
        %v611 = vshrl.u32 %v610, 7
        %v612 = vsub.s32 0, %v611
        %v613 = vrot.slane %v574, %v612
        %v614 = vlaneseq
        %v615 = vshrl.u32 %v614, 7
        %v616 = vsub.s32 0, %v615
        %v617 = vrot.slane %v575, %v616
        %v618 = vlaneseq
        %v619 = vshrl.u32 %v618, 7
        %v620 = vsub.s32 0, %v619
        %v621 = vrot.slane %v576, %v620
        %v622 = vlaneseq
        %v623 = vshrl.u32 %v622, 7
        %v624 = vsub.s32 0, %v623
        %v625 = vrot.slane %v577, %v624
        %v626 = vlaneseq
        %v627 = vshrl.u32 %v626, 7
        %v628 = vsub.s32 0, %v627
        %v629 = vrot.slane %v578, %v628
        %v630 = vlaneseq
        %v631 = vshrl.u32 %v630, 7
        %v632 = vsub.s32 0, %v631
        %v633 = vrot.slane %v579, %v632
        %v634 = vlaneseq
        %v635 = vshrl.u32 %v634, 7
        %v636 = vsub.s32 0, %v635
        %v637 = vrot.slane %v580, %v636
        %v638 = vlaneseq
        %v639 = vshrl.u32 %v638, 7
        %v640 = vsub.s32 0, %v639
        %v641 = vrot.slane %v581, %v640
        %v655 = vsel %vm493, %v521, 0
        %657 = vmatprep.subr.mxu0 0.0
        %658 = vmatpush1.msra.mxu0 %v522
        %659 = vmatprep.subr.mxu0 0.0
        %660 = vmatpush1.msra.mxu0 %v523
        %661 = vmatprep.subr.mxu0 0.0
        %662 = vmatpush1.msra.mxu0 %v524
        %663 = vmatprep.subr.mxu0 0.0
        %664 = vmatpush1.msra.mxu0 %v525
        %665 = vmatprep.subr.mxu0 0.0
        %666 = vmatpush1.msra.mxu0 0.0
        %667 = vmatprep.subr.mxu0 0.0
        %668 = vmatpush1.msra.mxu0 0.0
        %669 = vmatprep.subr.mxu0 0.0
        %670 = vmatpush1.msra.mxu0 0.0
        %671 = vmatprep.subr.mxu0 0.0
        %672 = vmatpush1.msra.mxu0 0.0
        %673 = vmatprep.subr.mxu0 0.0
        %674 = vmatpush1.msra.mxu0 0.0
        %675 = vmatprep.subr.mxu0 0.0
        %676 = vmatpush1.msra.mxu0 0.0
        %677 = vmatprep.subr.mxu0 0.0
        %678 = vmatpush1.msra.mxu0 0.0
        %679 = vmatprep.subr.mxu0 0.0
        %680 = vmatpush1.msra.mxu0 0.0
        %681 = vmatprep.subr.mxu0 0.0
        %682 = vmatpush1.msra.mxu0 0.0
        %683 = vmatprep.subr.mxu0 0.0
        %684 = vmatpush1.msra.mxu0 0.0
        %685 = vmatprep.subr.mxu0 0.0
        %686 = vmatpush1.msra.mxu0 0.0
        %687 = vmatprep.subr.mxu0 0.0
        %688 = vmatpush1.msra.mxu0 0.0
        %689 = vmatprep.subr.mxu0 0.0
        %690 = vmatpush1.msra.mxu0 0.0
        %691 = vmatprep.subr.mxu0 0.0
        %692 = vmatpush1.msra.mxu0 0.0
        %693 = vmatprep.subr.mxu0 0.0
        %694 = vmatpush1.msra.mxu0 0.0
        %695 = vmatprep.subr.mxu0 0.0
        %696 = vmatpush1.msra.mxu0 0.0
        %697 = vmatprep.subr.mxu0 0.0
        %698 = vmatpush1.msra.mxu0 0.0
        %699 = vmatprep.subr.mxu0 0.0
        %700 = vmatpush1.msra.mxu0 0.0
        %701 = vmatprep.subr.mxu0 0.0
        %702 = vmatpush1.msra.mxu0 0.0
        %703 = vmatprep.subr.mxu0 0.0
        %704 = vmatpush1.msra.mxu0 0.0
        %705 = vmatprep.subr.mxu0 0.0
        %706 = vmatpush1.msra.mxu0 0.0
        %707 = vmatprep.subr.mxu0 0.0
        %708 = vmatpush1.msra.mxu0 0.0
        %709 = vmatprep.subr.mxu0 0.0
        %710 = vmatpush1.msra.mxu0 0.0
        %711 = vmatprep.subr.mxu0 0.0
        %712 = vmatpush1.msra.mxu0 0.0
        %713 = vmatprep.subr.mxu0 0.0
        %714 = vmatpush1.msra.mxu0 0.0
        %715 = vmatprep.subr.mxu0 0.0
        %716 = vmatpush1.msra.mxu0 0.0
        %717 = vmatprep.subr.mxu0 0.0
        %718 = vmatpush1.msra.mxu0 0.0
        %719 = vmatprep.subr.mxu0 0.0
        %720 = vmatpush1.msra.mxu0 0.0
        %721 = vmatprep.mubr.f32.mxu0 0.0
        %722 = vmatmul.mubr.f32.gmra.mrb[0].mxu0 %v655
        %v723 = vpop.f32.mrb[0].mxu0
        %v724 = vadd.f32 %v597, %v723
        %v725 = vpop.f32.mrb[0].mxu0
        %726 = vdwg.mxu0
        %727 = vmatprep.subr.mxu0 0.0
        %728 = vmatpush1.msra.mxu0 %v526
        %729 = vmatprep.subr.mxu0 0.0
        %730 = vmatpush1.msra.mxu0 %v527
        %731 = vmatprep.subr.mxu0 0.0
        %732 = vmatpush1.msra.mxu0 %v528
        %733 = vmatprep.subr.mxu0 0.0
        %734 = vmatpush1.msra.mxu0 %v529
        %735 = vmatprep.subr.mxu0 0.0
        %736 = vmatpush1.msra.mxu0 0.0
        %737 = vmatprep.subr.mxu0 0.0
        %738 = vmatpush1.msra.mxu0 0.0
        %739 = vmatprep.subr.mxu0 0.0
        %740 = vmatpush1.msra.mxu0 0.0
        %741 = vmatprep.subr.mxu0 0.0
        %742 = vmatpush1.msra.mxu0 0.0
        %743 = vmatprep.subr.mxu0 0.0
        %744 = vmatpush1.msra.mxu0 0.0
        %745 = vmatprep.subr.mxu0 0.0
        %746 = vmatpush1.msra.mxu0 0.0
        %747 = vmatprep.subr.mxu0 0.0
        %748 = vmatpush1.msra.mxu0 0.0
        %749 = vmatprep.subr.mxu0 0.0
        %750 = vmatpush1.msra.mxu0 0.0
        %751 = vmatprep.subr.mxu0 0.0
        %752 = vmatpush1.msra.mxu0 0.0
        %753 = vmatprep.subr.mxu0 0.0
        %754 = vmatpush1.msra.mxu0 0.0
        %755 = vmatprep.subr.mxu0 0.0
        %756 = vmatpush1.msra.mxu0 0.0
        %757 = vmatprep.subr.mxu0 0.0
        %758 = vmatpush1.msra.mxu0 0.0
        %759 = vmatprep.subr.mxu0 0.0
        %760 = vmatpush1.msra.mxu0 0.0
        %761 = vmatprep.subr.mxu0 0.0
        %762 = vmatpush1.msra.mxu0 0.0
        %763 = vmatprep.subr.mxu0 0.0
        %764 = vmatpush1.msra.mxu0 0.0
        %765 = vmatprep.subr.mxu0 0.0
        %766 = vmatpush1.msra.mxu0 0.0
        %767 = vmatprep.subr.mxu0 0.0
        %768 = vmatpush1.msra.mxu0 0.0
        %769 = vmatprep.subr.mxu0 0.0
        %770 = vmatpush1.msra.mxu0 0.0
        %771 = vmatprep.subr.mxu0 0.0
        %772 = vmatpush1.msra.mxu0 0.0
        %773 = vmatprep.subr.mxu0 0.0
        %774 = vmatpush1.msra.mxu0 0.0
        %775 = vmatprep.subr.mxu0 0.0
        %776 = vmatpush1.msra.mxu0 0.0
        %777 = vmatprep.subr.mxu0 0.0
        %778 = vmatpush1.msra.mxu0 0.0
        %779 = vmatprep.subr.mxu0 0.0
        %780 = vmatpush1.msra.mxu0 0.0
        %781 = vmatprep.subr.mxu0 0.0
        %782 = vmatpush1.msra.mxu0 0.0
        %783 = vmatprep.subr.mxu0 0.0
        %784 = vmatpush1.msra.mxu0 0.0
        %785 = vmatprep.subr.mxu0 0.0
        %786 = vmatpush1.msra.mxu0 0.0
        %787 = vmatprep.subr.mxu0 0.0
        %788 = vmatpush1.msra.mxu0 0.0
        %789 = vmatprep.subr.mxu0 0.0
        %790 = vmatpush1.msra.mxu0 0.0
        %791 = vmatprep.mubr.f32.mxu0 0.0
        %792 = vmatmul.mubr.f32.gmra.mrb[0].mxu0 %v655
        %v793 = vpop.f32.mrb[0].mxu0
        %v794 = vadd.f32 %v601, %v793
        %v795 = vpop.f32.mrb[0].mxu0
        %796 = vdwg.mxu0
        %797 = vmatprep.subr.mxu0 0.0
        %798 = vmatpush1.msra.mxu0 %v530
        %799 = vmatprep.subr.mxu0 0.0
        %800 = vmatpush1.msra.mxu0 %v531
        %801 = vmatprep.subr.mxu0 0.0
        %802 = vmatpush1.msra.mxu0 %v532
        %803 = vmatprep.subr.mxu0 0.0
        %804 = vmatpush1.msra.mxu0 %v533
        %805 = vmatprep.subr.mxu0 0.0
        %806 = vmatpush1.msra.mxu0 0.0
        %807 = vmatprep.subr.mxu0 0.0
        %808 = vmatpush1.msra.mxu0 0.0
        %809 = vmatprep.subr.mxu0 0.0
        %810 = vmatpush1.msra.mxu0 0.0
        %811 = vmatprep.subr.mxu0 0.0
        %812 = vmatpush1.msra.mxu0 0.0
        %813 = vmatprep.subr.mxu0 0.0
        %814 = vmatpush1.msra.mxu0 0.0
        %815 = vmatprep.subr.mxu0 0.0
        %816 = vmatpush1.msra.mxu0 0.0
        %817 = vmatprep.subr.mxu0 0.0
        %818 = vmatpush1.msra.mxu0 0.0
        %819 = vmatprep.subr.mxu0 0.0
        %820 = vmatpush1.msra.mxu0 0.0
        %821 = vmatprep.subr.mxu0 0.0
        %822 = vmatpush1.msra.mxu0 0.0
        %823 = vmatprep.subr.mxu0 0.0
        %824 = vmatpush1.msra.mxu0 0.0
        %825 = vmatprep.subr.mxu0 0.0
        %826 = vmatpush1.msra.mxu0 0.0
        %827 = vmatprep.subr.mxu0 0.0
        %828 = vmatpush1.msra.mxu0 0.0
        %829 = vmatprep.subr.mxu0 0.0
        %830 = vmatpush1.msra.mxu0 0.0
        %831 = vmatprep.subr.mxu0 0.0
        %832 = vmatpush1.msra.mxu0 0.0
        %833 = vmatprep.subr.mxu0 0.0
        %834 = vmatpush1.msra.mxu0 0.0
        %835 = vmatprep.subr.mxu0 0.0
        %836 = vmatpush1.msra.mxu0 0.0
        %837 = vmatprep.subr.mxu0 0.0
        %838 = vmatpush1.msra.mxu0 0.0
        %839 = vmatprep.subr.mxu0 0.0
        %840 = vmatpush1.msra.mxu0 0.0
        %841 = vmatprep.subr.mxu0 0.0
        %842 = vmatpush1.msra.mxu0 0.0
        %843 = vmatprep.subr.mxu0 0.0
        %844 = vmatpush1.msra.mxu0 0.0
        %845 = vmatprep.subr.mxu0 0.0
        %846 = vmatpush1.msra.mxu0 0.0
        %847 = vmatprep.subr.mxu0 0.0
        %848 = vmatpush1.msra.mxu0 0.0
        %849 = vmatprep.subr.mxu0 0.0
        %850 = vmatpush1.msra.mxu0 0.0
        %851 = vmatprep.subr.mxu0 0.0
        %852 = vmatpush1.msra.mxu0 0.0
        %853 = vmatprep.subr.mxu0 0.0
        %854 = vmatpush1.msra.mxu0 0.0
        %855 = vmatprep.subr.mxu0 0.0
        %856 = vmatpush1.msra.mxu0 0.0
        %857 = vmatprep.subr.mxu0 0.0
        %858 = vmatpush1.msra.mxu0 0.0
        %859 = vmatprep.subr.mxu0 0.0
        %860 = vmatpush1.msra.mxu0 0.0
        %861 = vmatprep.mubr.f32.mxu0 0.0
        %862 = vmatmul.mubr.f32.gmra.mrb[0].mxu0 %v655
        %v863 = vpop.f32.mrb[0].mxu0
        %v864 = vadd.f32 %v605, %v863
        %v865 = vpop.f32.mrb[0].mxu0
        %866 = vdwg.mxu0
        %867 = vmatprep.subr.mxu0 0.0
        %868 = vmatpush1.msra.mxu0 %v534
        %869 = vmatprep.subr.mxu0 0.0
        %870 = vmatpush1.msra.mxu0 %v535
        %871 = vmatprep.subr.mxu0 0.0
        %872 = vmatpush1.msra.mxu0 %v536
        %873 = vmatprep.subr.mxu0 0.0
        %874 = vmatpush1.msra.mxu0 %v537
        %875 = vmatprep.subr.mxu0 0.0
        %876 = vmatpush1.msra.mxu0 0.0
        %877 = vmatprep.subr.mxu0 0.0
        %878 = vmatpush1.msra.mxu0 0.0
        %879 = vmatprep.subr.mxu0 0.0
        %880 = vmatpush1.msra.mxu0 0.0
        %881 = vmatprep.subr.mxu0 0.0
        %882 = vmatpush1.msra.mxu0 0.0
        %883 = vmatprep.subr.mxu0 0.0
        %884 = vmatpush1.msra.mxu0 0.0
        %885 = vmatprep.subr.mxu0 0.0
        %886 = vmatpush1.msra.mxu0 0.0
        %887 = vmatprep.subr.mxu0 0.0
        %888 = vmatpush1.msra.mxu0 0.0
        %889 = vmatprep.subr.mxu0 0.0
        %890 = vmatpush1.msra.mxu0 0.0
        %891 = vmatprep.subr.mxu0 0.0
        %892 = vmatpush1.msra.mxu0 0.0
        %893 = vmatprep.subr.mxu0 0.0
        %894 = vmatpush1.msra.mxu0 0.0
        %895 = vmatprep.subr.mxu0 0.0
        %896 = vmatpush1.msra.mxu0 0.0
        %897 = vmatprep.subr.mxu0 0.0
        %898 = vmatpush1.msra.mxu0 0.0
        %899 = vmatprep.subr.mxu0 0.0
        %900 = vmatpush1.msra.mxu0 0.0
        %901 = vmatprep.subr.mxu0 0.0
        %902 = vmatpush1.msra.mxu0 0.0
        %903 = vmatprep.subr.mxu0 0.0
        %904 = vmatpush1.msra.mxu0 0.0
        %905 = vmatprep.subr.mxu0 0.0
        %906 = vmatpush1.msra.mxu0 0.0
        %907 = vmatprep.subr.mxu0 0.0
        %908 = vmatpush1.msra.mxu0 0.0
        %909 = vmatprep.subr.mxu0 0.0
        %910 = vmatpush1.msra.mxu0 0.0
        %911 = vmatprep.subr.mxu0 0.0
        %912 = vmatpush1.msra.mxu0 0.0
        %913 = vmatprep.subr.mxu0 0.0
        %914 = vmatpush1.msra.mxu0 0.0
        %915 = vmatprep.subr.mxu0 0.0
        %916 = vmatpush1.msra.mxu0 0.0
        %917 = vmatprep.subr.mxu0 0.0
        %918 = vmatpush1.msra.mxu0 0.0
        %919 = vmatprep.subr.mxu0 0.0
        %920 = vmatpush1.msra.mxu0 0.0
        %921 = vmatprep.subr.mxu0 0.0
        %922 = vmatpush1.msra.mxu0 0.0
        %923 = vmatprep.subr.mxu0 0.0
        %924 = vmatpush1.msra.mxu0 0.0
        %925 = vmatprep.subr.mxu0 0.0
        %926 = vmatpush1.msra.mxu0 0.0
        %927 = vmatprep.subr.mxu0 0.0
        %928 = vmatpush1.msra.mxu0 0.0
        %929 = vmatprep.subr.mxu0 0.0
        %930 = vmatpush1.msra.mxu0 0.0
        %931 = vmatprep.mubr.f32.mxu0 0.0
        %932 = vmatmul.mubr.f32.gmra.mrb[0].mxu0 %v655
        %v933 = vpop.f32.mrb[0].mxu0
        %v934 = vadd.f32 %v609, %v933
        %v935 = vpop.f32.mrb[0].mxu0
        %936 = vdwg.mxu0
        %937 = vmatprep.subr.mxu0 0.0
        %938 = vmatpush1.msra.mxu0 %v538
        %939 = vmatprep.subr.mxu0 0.0
        %940 = vmatpush1.msra.mxu0 %v539
        %941 = vmatprep.subr.mxu0 0.0
        %942 = vmatpush1.msra.mxu0 %v540
        %943 = vmatprep.subr.mxu0 0.0
        %944 = vmatpush1.msra.mxu0 %v541
        %945 = vmatprep.subr.mxu0 0.0
        %946 = vmatpush1.msra.mxu0 0.0
        %947 = vmatprep.subr.mxu0 0.0
        %948 = vmatpush1.msra.mxu0 0.0
        %949 = vmatprep.subr.mxu0 0.0
        %950 = vmatpush1.msra.mxu0 0.0
        %951 = vmatprep.subr.mxu0 0.0
        %952 = vmatpush1.msra.mxu0 0.0
        %953 = vmatprep.subr.mxu0 0.0
        %954 = vmatpush1.msra.mxu0 0.0
        %955 = vmatprep.subr.mxu0 0.0
        %956 = vmatpush1.msra.mxu0 0.0
        %957 = vmatprep.subr.mxu0 0.0
        %958 = vmatpush1.msra.mxu0 0.0
        %959 = vmatprep.subr.mxu0 0.0
        %960 = vmatpush1.msra.mxu0 0.0
        %961 = vmatprep.subr.mxu0 0.0
        %962 = vmatpush1.msra.mxu0 0.0
        %963 = vmatprep.subr.mxu0 0.0
        %964 = vmatpush1.msra.mxu0 0.0
        %965 = vmatprep.subr.mxu0 0.0
        %966 = vmatpush1.msra.mxu0 0.0
        %967 = vmatprep.subr.mxu0 0.0
        %968 = vmatpush1.msra.mxu0 0.0
        %969 = vmatprep.subr.mxu0 0.0
        %970 = vmatpush1.msra.mxu0 0.0
        %971 = vmatprep.subr.mxu0 0.0
        %972 = vmatpush1.msra.mxu0 0.0
        %973 = vmatprep.subr.mxu0 0.0
        %974 = vmatpush1.msra.mxu0 0.0
        %975 = vmatprep.subr.mxu0 0.0
        %976 = vmatpush1.msra.mxu0 0.0
        %977 = vmatprep.subr.mxu0 0.0
        %978 = vmatpush1.msra.mxu0 0.0
        %979 = vmatprep.subr.mxu0 0.0
        %980 = vmatpush1.msra.mxu0 0.0
        %981 = vmatprep.subr.mxu0 0.0
        %982 = vmatpush1.msra.mxu0 0.0
        %983 = vmatprep.subr.mxu0 0.0
        %984 = vmatpush1.msra.mxu0 0.0
        %985 = vmatprep.subr.mxu0 0.0
        %986 = vmatpush1.msra.mxu0 0.0
        %987 = vmatprep.subr.mxu0 0.0
        %988 = vmatpush1.msra.mxu0 0.0
        %989 = vmatprep.subr.mxu0 0.0
        %990 = vmatpush1.msra.mxu0 0.0
        %991 = vmatprep.subr.mxu0 0.0
        %992 = vmatpush1.msra.mxu0 0.0
        %993 = vmatprep.subr.mxu0 0.0
        %994 = vmatpush1.msra.mxu0 0.0
        %995 = vmatprep.subr.mxu0 0.0
        %996 = vmatpush1.msra.mxu0 0.0
        %997 = vmatprep.subr.mxu0 0.0
        %998 = vmatpush1.msra.mxu0 0.0
        %999 = vmatprep.subr.mxu0 0.0
        %1000 = vmatpush1.msra.mxu0 0.0
        %1001 = vmatprep.mubr.f32.mxu0 0.0
        %1002 = vmatmul.mubr.f32.gmra.mrb[0].mxu0 %v655
        %v1003 = vpop.f32.mrb[0].mxu0
        %v1004 = vadd.f32 %v613, %v1003
        %v1005 = vpop.f32.mrb[0].mxu0
        %1006 = vdwg.mxu0
        %1007 = vmatprep.subr.mxu0 0.0
        %1008 = vmatpush1.msra.mxu0 %v542
        %1009 = vmatprep.subr.mxu0 0.0
        %1010 = vmatpush1.msra.mxu0 %v543
        %1011 = vmatprep.subr.mxu0 0.0
        %1012 = vmatpush1.msra.mxu0 %v544
        %1013 = vmatprep.subr.mxu0 0.0
        %1014 = vmatpush1.msra.mxu0 %v545
        %1015 = vmatprep.subr.mxu0 0.0
        %1016 = vmatpush1.msra.mxu0 0.0
        %1017 = vmatprep.subr.mxu0 0.0
        %1018 = vmatpush1.msra.mxu0 0.0
        %1019 = vmatprep.subr.mxu0 0.0
        %1020 = vmatpush1.msra.mxu0 0.0
        %1021 = vmatprep.subr.mxu0 0.0
        %1022 = vmatpush1.msra.mxu0 0.0
        %1023 = vmatprep.subr.mxu0 0.0
        %1024 = vmatpush1.msra.mxu0 0.0
        %1025 = vmatprep.subr.mxu0 0.0
        %1026 = vmatpush1.msra.mxu0 0.0
        %1027 = vmatprep.subr.mxu0 0.0
        %1028 = vmatpush1.msra.mxu0 0.0
        %1029 = vmatprep.subr.mxu0 0.0
        %1030 = vmatpush1.msra.mxu0 0.0
        %1031 = vmatprep.subr.mxu0 0.0
        %1032 = vmatpush1.msra.mxu0 0.0
        %1033 = vmatprep.subr.mxu0 0.0
        %1034 = vmatpush1.msra.mxu0 0.0
        %1035 = vmatprep.subr.mxu0 0.0
        %1036 = vmatpush1.msra.mxu0 0.0
        %1037 = vmatprep.subr.mxu0 0.0
        %1038 = vmatpush1.msra.mxu0 0.0
        %1039 = vmatprep.subr.mxu0 0.0
        %1040 = vmatpush1.msra.mxu0 0.0
        %1041 = vmatprep.subr.mxu0 0.0
        %1042 = vmatpush1.msra.mxu0 0.0
        %1043 = vmatprep.subr.mxu0 0.0
        %1044 = vmatpush1.msra.mxu0 0.0
        %1045 = vmatprep.subr.mxu0 0.0
        %1046 = vmatpush1.msra.mxu0 0.0
        %1047 = vmatprep.subr.mxu0 0.0
        %1048 = vmatpush1.msra.mxu0 0.0
        %1049 = vmatprep.subr.mxu0 0.0
        %1050 = vmatpush1.msra.mxu0 0.0
        %1051 = vmatprep.subr.mxu0 0.0
        %1052 = vmatpush1.msra.mxu0 0.0
        %1053 = vmatprep.subr.mxu0 0.0
        %1054 = vmatpush1.msra.mxu0 0.0
        %1055 = vmatprep.subr.mxu0 0.0
        %1056 = vmatpush1.msra.mxu0 0.0
        %1057 = vmatprep.subr.mxu0 0.0
        %1058 = vmatpush1.msra.mxu0 0.0
        %1059 = vmatprep.subr.mxu0 0.0
        %1060 = vmatpush1.msra.mxu0 0.0
        %1061 = vmatprep.subr.mxu0 0.0
        %1062 = vmatpush1.msra.mxu0 0.0
        %1063 = vmatprep.subr.mxu0 0.0
        %1064 = vmatpush1.msra.mxu0 0.0
        %1065 = vmatprep.subr.mxu0 0.0
        %1066 = vmatpush1.msra.mxu0 0.0
        %1067 = vmatprep.subr.mxu0 0.0
        %1068 = vmatpush1.msra.mxu0 0.0
        %1069 = vmatprep.subr.mxu0 0.0
        %1070 = vmatpush1.msra.mxu0 0.0
        %1071 = vmatprep.mubr.f32.mxu0 0.0
        %1072 = vmatmul.mubr.f32.gmra.mrb[0].mxu0 %v655
        %v1073 = vpop.f32.mrb[0].mxu0
        %v1074 = vadd.f32 %v617, %v1073
        %v1075 = vpop.f32.mrb[0].mxu0
        %1076 = vdwg.mxu0
        %1077 = vmatprep.subr.mxu0 0.0
        %1078 = vmatpush1.msra.mxu0 %v546
        %1079 = vmatprep.subr.mxu0 0.0
        %1080 = vmatpush1.msra.mxu0 %v547
        %1081 = vmatprep.subr.mxu0 0.0
        %1082 = vmatpush1.msra.mxu0 %v548
        %1083 = vmatprep.subr.mxu0 0.0
        %1084 = vmatpush1.msra.mxu0 %v549
        %1085 = vmatprep.subr.mxu0 0.0
        %1086 = vmatpush1.msra.mxu0 0.0
        %1087 = vmatprep.subr.mxu0 0.0
        %1088 = vmatpush1.msra.mxu0 0.0
        %1089 = vmatprep.subr.mxu0 0.0
        %1090 = vmatpush1.msra.mxu0 0.0
        %1091 = vmatprep.subr.mxu0 0.0
        %1092 = vmatpush1.msra.mxu0 0.0
        %1093 = vmatprep.subr.mxu0 0.0
        %1094 = vmatpush1.msra.mxu0 0.0
        %1095 = vmatprep.subr.mxu0 0.0
        %1096 = vmatpush1.msra.mxu0 0.0
        %1097 = vmatprep.subr.mxu0 0.0
        %1098 = vmatpush1.msra.mxu0 0.0
        %1099 = vmatprep.subr.mxu0 0.0
        %1100 = vmatpush1.msra.mxu0 0.0
        %1101 = vmatprep.subr.mxu0 0.0
        %1102 = vmatpush1.msra.mxu0 0.0
        %1103 = vmatprep.subr.mxu0 0.0
        %1104 = vmatpush1.msra.mxu0 0.0
        %1105 = vmatprep.subr.mxu0 0.0
        %1106 = vmatpush1.msra.mxu0 0.0
        %1107 = vmatprep.subr.mxu0 0.0
        %1108 = vmatpush1.msra.mxu0 0.0
        %1109 = vmatprep.subr.mxu0 0.0
        %1110 = vmatpush1.msra.mxu0 0.0
        %1111 = vmatprep.subr.mxu0 0.0
        %1112 = vmatpush1.msra.mxu0 0.0
        %1113 = vmatprep.subr.mxu0 0.0
        %1114 = vmatpush1.msra.mxu0 0.0
        %1115 = vmatprep.subr.mxu0 0.0
        %1116 = vmatpush1.msra.mxu0 0.0
        %1117 = vmatprep.subr.mxu0 0.0
        %1118 = vmatpush1.msra.mxu0 0.0
        %1119 = vmatprep.subr.mxu0 0.0
        %1120 = vmatpush1.msra.mxu0 0.0
        %1121 = vmatprep.subr.mxu0 0.0
        %1122 = vmatpush1.msra.mxu0 0.0
        %1123 = vmatprep.subr.mxu0 0.0
        %1124 = vmatpush1.msra.mxu0 0.0
        %1125 = vmatprep.subr.mxu0 0.0
        %1126 = vmatpush1.msra.mxu0 0.0
        %1127 = vmatprep.subr.mxu0 0.0
        %1128 = vmatpush1.msra.mxu0 0.0
        %1129 = vmatprep.subr.mxu0 0.0
        %1130 = vmatpush1.msra.mxu0 0.0
        %1131 = vmatprep.subr.mxu0 0.0
        %1132 = vmatpush1.msra.mxu0 0.0
        %1133 = vmatprep.subr.mxu0 0.0
        %1134 = vmatpush1.msra.mxu0 0.0
        %1135 = vmatprep.subr.mxu0 0.0
        %1136 = vmatpush1.msra.mxu0 0.0
        %1137 = vmatprep.subr.mxu0 0.0
        %1138 = vmatpush1.msra.mxu0 0.0
        %1139 = vmatprep.subr.mxu0 0.0
        %1140 = vmatpush1.msra.mxu0 0.0
        %1141 = vmatprep.mubr.f32.mxu0 0.0
        %1142 = vmatmul.mubr.f32.gmra.mrb[0].mxu0 %v655
        %v1143 = vpop.f32.mrb[0].mxu0
        %v1144 = vadd.f32 %v621, %v1143
        %v1145 = vpop.f32.mrb[0].mxu0
        %1146 = vdwg.mxu0
        %1147 = vmatprep.subr.mxu0 0.0
        %1148 = vmatpush1.msra.mxu0 %v550
        %1149 = vmatprep.subr.mxu0 0.0
        %1150 = vmatpush1.msra.mxu0 %v551
        %1151 = vmatprep.subr.mxu0 0.0
        %1152 = vmatpush1.msra.mxu0 %v552
        %1153 = vmatprep.subr.mxu0 0.0
        %1154 = vmatpush1.msra.mxu0 %v553
        %1155 = vmatprep.subr.mxu0 0.0
        %1156 = vmatpush1.msra.mxu0 0.0
        %1157 = vmatprep.subr.mxu0 0.0
        %1158 = vmatpush1.msra.mxu0 0.0
        %1159 = vmatprep.subr.mxu0 0.0
        %1160 = vmatpush1.msra.mxu0 0.0
        %1161 = vmatprep.subr.mxu0 0.0
        %1162 = vmatpush1.msra.mxu0 0.0
        %1163 = vmatprep.subr.mxu0 0.0
        %1164 = vmatpush1.msra.mxu0 0.0
        %1165 = vmatprep.subr.mxu0 0.0
        %1166 = vmatpush1.msra.mxu0 0.0
        %1167 = vmatprep.subr.mxu0 0.0
        %1168 = vmatpush1.msra.mxu0 0.0
        %1169 = vmatprep.subr.mxu0 0.0
        %1170 = vmatpush1.msra.mxu0 0.0
        %1171 = vmatprep.subr.mxu0 0.0
        %1172 = vmatpush1.msra.mxu0 0.0
        %1173 = vmatprep.subr.mxu0 0.0
        %1174 = vmatpush1.msra.mxu0 0.0
        %1175 = vmatprep.subr.mxu0 0.0
        %1176 = vmatpush1.msra.mxu0 0.0
        %1177 = vmatprep.subr.mxu0 0.0
        %1178 = vmatpush1.msra.mxu0 0.0
        %1179 = vmatprep.subr.mxu0 0.0
        %1180 = vmatpush1.msra.mxu0 0.0
        %1181 = vmatprep.subr.mxu0 0.0
        %1182 = vmatpush1.msra.mxu0 0.0
        %1183 = vmatprep.subr.mxu0 0.0
        %1184 = vmatpush1.msra.mxu0 0.0
        %1185 = vmatprep.subr.mxu0 0.0
        %1186 = vmatpush1.msra.mxu0 0.0
        %1187 = vmatprep.subr.mxu0 0.0
        %1188 = vmatpush1.msra.mxu0 0.0
        %1189 = vmatprep.subr.mxu0 0.0
        %1190 = vmatpush1.msra.mxu0 0.0
        %1191 = vmatprep.subr.mxu0 0.0
        %1192 = vmatpush1.msra.mxu0 0.0
        %1193 = vmatprep.subr.mxu0 0.0
        %1194 = vmatpush1.msra.mxu0 0.0
        %1195 = vmatprep.subr.mxu0 0.0
        %1196 = vmatpush1.msra.mxu0 0.0
        %1197 = vmatprep.subr.mxu0 0.0
        %1198 = vmatpush1.msra.mxu0 0.0
        %1199 = vmatprep.subr.mxu0 0.0
        %1200 = vmatpush1.msra.mxu0 0.0
        %1201 = vmatprep.subr.mxu0 0.0
        %1202 = vmatpush1.msra.mxu0 0.0
        %1203 = vmatprep.subr.mxu0 0.0
        %1204 = vmatpush1.msra.mxu0 0.0
        %1205 = vmatprep.subr.mxu0 0.0
        %1206 = vmatpush1.msra.mxu0 0.0
        %1207 = vmatprep.subr.mxu0 0.0
        %1208 = vmatpush1.msra.mxu0 0.0
        %1209 = vmatprep.subr.mxu0 0.0
        %1210 = vmatpush1.msra.mxu0 0.0
        %1211 = vmatprep.mubr.f32.mxu0 0.0
        %1212 = vmatmul.mubr.f32.gmra.mrb[0].mxu0 %v655
        %v1213 = vpop.f32.mrb[0].mxu0
        %v1214 = vadd.f32 %v625, %v1213
        %v1215 = vpop.f32.mrb[0].mxu0
        %1216 = vdwg.mxu0
        %1217 = vmatprep.subr.mxu0 0.0
        %1218 = vmatpush1.msra.mxu0 %v554
        %1219 = vmatprep.subr.mxu0 0.0
        %1220 = vmatpush1.msra.mxu0 %v555
        %1221 = vmatprep.subr.mxu0 0.0
        %1222 = vmatpush1.msra.mxu0 %v556
        %1223 = vmatprep.subr.mxu0 0.0
        %1224 = vmatpush1.msra.mxu0 %v557
        %1225 = vmatprep.subr.mxu0 0.0
        %1226 = vmatpush1.msra.mxu0 0.0
        %1227 = vmatprep.subr.mxu0 0.0
        %1228 = vmatpush1.msra.mxu0 0.0
        %1229 = vmatprep.subr.mxu0 0.0
        %1230 = vmatpush1.msra.mxu0 0.0
        %1231 = vmatprep.subr.mxu0 0.0
        %1232 = vmatpush1.msra.mxu0 0.0
        %1233 = vmatprep.subr.mxu0 0.0
        %1234 = vmatpush1.msra.mxu0 0.0
        %1235 = vmatprep.subr.mxu0 0.0
        %1236 = vmatpush1.msra.mxu0 0.0
        %1237 = vmatprep.subr.mxu0 0.0
        %1238 = vmatpush1.msra.mxu0 0.0
        %1239 = vmatprep.subr.mxu0 0.0
        %1240 = vmatpush1.msra.mxu0 0.0
        %1241 = vmatprep.subr.mxu0 0.0
        %1242 = vmatpush1.msra.mxu0 0.0
        %1243 = vmatprep.subr.mxu0 0.0
        %1244 = vmatpush1.msra.mxu0 0.0
        %1245 = vmatprep.subr.mxu0 0.0
        %1246 = vmatpush1.msra.mxu0 0.0
        %1247 = vmatprep.subr.mxu0 0.0
        %1248 = vmatpush1.msra.mxu0 0.0
        %1249 = vmatprep.subr.mxu0 0.0
        %1250 = vmatpush1.msra.mxu0 0.0
        %1251 = vmatprep.subr.mxu0 0.0
        %1252 = vmatpush1.msra.mxu0 0.0
        %1253 = vmatprep.subr.mxu0 0.0
        %1254 = vmatpush1.msra.mxu0 0.0
        %1255 = vmatprep.subr.mxu0 0.0
        %1256 = vmatpush1.msra.mxu0 0.0
        %1257 = vmatprep.subr.mxu0 0.0
        %1258 = vmatpush1.msra.mxu0 0.0
        %1259 = vmatprep.subr.mxu0 0.0
        %1260 = vmatpush1.msra.mxu0 0.0
        %1261 = vmatprep.subr.mxu0 0.0
        %1262 = vmatpush1.msra.mxu0 0.0
        %1263 = vmatprep.subr.mxu0 0.0
        %1264 = vmatpush1.msra.mxu0 0.0
        %1265 = vmatprep.subr.mxu0 0.0
        %1266 = vmatpush1.msra.mxu0 0.0
        %1267 = vmatprep.subr.mxu0 0.0
        %1268 = vmatpush1.msra.mxu0 0.0
        %1269 = vmatprep.subr.mxu0 0.0
        %1270 = vmatpush1.msra.mxu0 0.0
        %1271 = vmatprep.subr.mxu0 0.0
        %1272 = vmatpush1.msra.mxu0 0.0
        %1273 = vmatprep.subr.mxu0 0.0
        %1274 = vmatpush1.msra.mxu0 0.0
        %1275 = vmatprep.subr.mxu0 0.0
        %1276 = vmatpush1.msra.mxu0 0.0
        %1277 = vmatprep.subr.mxu0 0.0
        %1278 = vmatpush1.msra.mxu0 0.0
        %1279 = vmatprep.subr.mxu0 0.0
        %1280 = vmatpush1.msra.mxu0 0.0
        %1281 = vmatprep.mubr.f32.mxu0 0.0
        %1282 = vmatmul.mubr.f32.gmra.mrb[0].mxu0 %v655
        %v1283 = vpop.f32.mrb[0].mxu0
        %v1284 = vadd.f32 %v629, %v1283
        %v1285 = vpop.f32.mrb[0].mxu0
        %1286 = vdwg.mxu0
        %1287 = vmatprep.subr.mxu0 0.0
        %1288 = vmatpush1.msra.mxu0 %v558
        %1289 = vmatprep.subr.mxu0 0.0
        %1290 = vmatpush1.msra.mxu0 %v559
        %1291 = vmatprep.subr.mxu0 0.0
        %1292 = vmatpush1.msra.mxu0 %v560
        %1293 = vmatprep.subr.mxu0 0.0
        %1294 = vmatpush1.msra.mxu0 %v561
        %1295 = vmatprep.subr.mxu0 0.0
        %1296 = vmatpush1.msra.mxu0 0.0
        %1297 = vmatprep.subr.mxu0 0.0
        %1298 = vmatpush1.msra.mxu0 0.0
        %1299 = vmatprep.subr.mxu0 0.0
        %1300 = vmatpush1.msra.mxu0 0.0
        %1301 = vmatprep.subr.mxu0 0.0
        %1302 = vmatpush1.msra.mxu0 0.0
        %1303 = vmatprep.subr.mxu0 0.0
        %1304 = vmatpush1.msra.mxu0 0.0
        %1305 = vmatprep.subr.mxu0 0.0
        %1306 = vmatpush1.msra.mxu0 0.0
        %1307 = vmatprep.subr.mxu0 0.0
        %1308 = vmatpush1.msra.mxu0 0.0
        %1309 = vmatprep.subr.mxu0 0.0
        %1310 = vmatpush1.msra.mxu0 0.0
        %1311 = vmatprep.subr.mxu0 0.0
        %1312 = vmatpush1.msra.mxu0 0.0
        %1313 = vmatprep.subr.mxu0 0.0
        %1314 = vmatpush1.msra.mxu0 0.0
        %1315 = vmatprep.subr.mxu0 0.0
        %1316 = vmatpush1.msra.mxu0 0.0
        %1317 = vmatprep.subr.mxu0 0.0
        %1318 = vmatpush1.msra.mxu0 0.0
        %1319 = vmatprep.subr.mxu0 0.0
        %1320 = vmatpush1.msra.mxu0 0.0
        %1321 = vmatprep.subr.mxu0 0.0
        %1322 = vmatpush1.msra.mxu0 0.0
        %1323 = vmatprep.subr.mxu0 0.0
        %1324 = vmatpush1.msra.mxu0 0.0
        %1325 = vmatprep.subr.mxu0 0.0
        %1326 = vmatpush1.msra.mxu0 0.0
        %1327 = vmatprep.subr.mxu0 0.0
        %1328 = vmatpush1.msra.mxu0 0.0
        %1329 = vmatprep.subr.mxu0 0.0
        %1330 = vmatpush1.msra.mxu0 0.0
        %1331 = vmatprep.subr.mxu0 0.0
        %1332 = vmatpush1.msra.mxu0 0.0
        %1333 = vmatprep.subr.mxu0 0.0
        %1334 = vmatpush1.msra.mxu0 0.0
        %1335 = vmatprep.subr.mxu0 0.0
        %1336 = vmatpush1.msra.mxu0 0.0
        %1337 = vmatprep.subr.mxu0 0.0
        %1338 = vmatpush1.msra.mxu0 0.0
        %1339 = vmatprep.subr.mxu0 0.0
        %1340 = vmatpush1.msra.mxu0 0.0
        %1341 = vmatprep.subr.mxu0 0.0
        %1342 = vmatpush1.msra.mxu0 0.0
        %1343 = vmatprep.subr.mxu0 0.0
        %1344 = vmatpush1.msra.mxu0 0.0
        %1345 = vmatprep.subr.mxu0 0.0
        %1346 = vmatpush1.msra.mxu0 0.0
        %1347 = vmatprep.subr.mxu0 0.0
        %1348 = vmatpush1.msra.mxu0 0.0
        %1349 = vmatprep.subr.mxu0 0.0
        %1350 = vmatpush1.msra.mxu0 0.0
        %1351 = vmatprep.mubr.f32.mxu0 0.0
        %1352 = vmatmul.mubr.f32.gmra.mrb[0].mxu0 %v655
        %v1353 = vpop.f32.mrb[0].mxu0
        %v1354 = vadd.f32 %v633, %v1353
        %v1355 = vpop.f32.mrb[0].mxu0
        %1356 = vdwg.mxu0
        %1357 = vmatprep.subr.mxu0 0.0
        %1358 = vmatpush1.msra.mxu0 %v562
        %1359 = vmatprep.subr.mxu0 0.0
        %1360 = vmatpush1.msra.mxu0 %v563
        %1361 = vmatprep.subr.mxu0 0.0
        %1362 = vmatpush1.msra.mxu0 %v564
        %1363 = vmatprep.subr.mxu0 0.0
        %1364 = vmatpush1.msra.mxu0 %v565
        %1365 = vmatprep.subr.mxu0 0.0
        %1366 = vmatpush1.msra.mxu0 0.0
        %1367 = vmatprep.subr.mxu0 0.0
        %1368 = vmatpush1.msra.mxu0 0.0
        %1369 = vmatprep.subr.mxu0 0.0
        %1370 = vmatpush1.msra.mxu0 0.0
        %1371 = vmatprep.subr.mxu0 0.0
        %1372 = vmatpush1.msra.mxu0 0.0
        %1373 = vmatprep.subr.mxu0 0.0
        %1374 = vmatpush1.msra.mxu0 0.0
        %1375 = vmatprep.subr.mxu0 0.0
        %1376 = vmatpush1.msra.mxu0 0.0
        %1377 = vmatprep.subr.mxu0 0.0
        %1378 = vmatpush1.msra.mxu0 0.0
        %1379 = vmatprep.subr.mxu0 0.0
        %1380 = vmatpush1.msra.mxu0 0.0
        %1381 = vmatprep.subr.mxu0 0.0
        %1382 = vmatpush1.msra.mxu0 0.0
        %1383 = vmatprep.subr.mxu0 0.0
        %1384 = vmatpush1.msra.mxu0 0.0
        %1385 = vmatprep.subr.mxu0 0.0
        %1386 = vmatpush1.msra.mxu0 0.0
        %1387 = vmatprep.subr.mxu0 0.0
        %1388 = vmatpush1.msra.mxu0 0.0
        %1389 = vmatprep.subr.mxu0 0.0
        %1390 = vmatpush1.msra.mxu0 0.0
        %1391 = vmatprep.subr.mxu0 0.0
        %1392 = vmatpush1.msra.mxu0 0.0
        %1393 = vmatprep.subr.mxu0 0.0
        %1394 = vmatpush1.msra.mxu0 0.0
        %1395 = vmatprep.subr.mxu0 0.0
        %1396 = vmatpush1.msra.mxu0 0.0
        %1397 = vmatprep.subr.mxu0 0.0
        %1398 = vmatpush1.msra.mxu0 0.0
        %1399 = vmatprep.subr.mxu0 0.0
        %1400 = vmatpush1.msra.mxu0 0.0
        %1401 = vmatprep.subr.mxu0 0.0
        %1402 = vmatpush1.msra.mxu0 0.0
        %1403 = vmatprep.subr.mxu0 0.0
        %1404 = vmatpush1.msra.mxu0 0.0
        %1405 = vmatprep.subr.mxu0 0.0
        %1406 = vmatpush1.msra.mxu0 0.0
        %1407 = vmatprep.subr.mxu0 0.0
        %1408 = vmatpush1.msra.mxu0 0.0
        %1409 = vmatprep.subr.mxu0 0.0
        %1410 = vmatpush1.msra.mxu0 0.0
        %1411 = vmatprep.subr.mxu0 0.0
        %1412 = vmatpush1.msra.mxu0 0.0
        %1413 = vmatprep.subr.mxu0 0.0
        %1414 = vmatpush1.msra.mxu0 0.0
        %1415 = vmatprep.subr.mxu0 0.0
        %1416 = vmatpush1.msra.mxu0 0.0
        %1417 = vmatprep.subr.mxu0 0.0
        %1418 = vmatpush1.msra.mxu0 0.0
        %1419 = vmatprep.subr.mxu0 0.0
        %1420 = vmatpush1.msra.mxu0 0.0
        %1421 = vmatprep.mubr.f32.mxu0 0.0
        %1422 = vmatmul.mubr.f32.gmra.mrb[0].mxu0 %v655
        %v1423 = vpop.f32.mrb[0].mxu0
        %v1424 = vadd.f32 %v637, %v1423
        %v1425 = vpop.f32.mrb[0].mxu0
        %1426 = vdwg.mxu0
        %1427 = vmatprep.subr.mxu0 0.0
        %1428 = vmatpush1.msra.mxu0 %v566
        %1429 = vmatprep.subr.mxu0 0.0
        %1430 = vmatpush1.msra.mxu0 %v567
        %1431 = vmatprep.subr.mxu0 0.0
        %1432 = vmatpush1.msra.mxu0 %v568
        %1433 = vmatprep.subr.mxu0 0.0
        %1434 = vmatpush1.msra.mxu0 %v569
        %1435 = vmatprep.subr.mxu0 0.0
        %1436 = vmatpush1.msra.mxu0 0.0
        %1437 = vmatprep.subr.mxu0 0.0
        %1438 = vmatpush1.msra.mxu0 0.0
        %1439 = vmatprep.subr.mxu0 0.0
        %1440 = vmatpush1.msra.mxu0 0.0
        %1441 = vmatprep.subr.mxu0 0.0
        %1442 = vmatpush1.msra.mxu0 0.0
        %1443 = vmatprep.subr.mxu0 0.0
        %1444 = vmatpush1.msra.mxu0 0.0
        %1445 = vmatprep.subr.mxu0 0.0
        %1446 = vmatpush1.msra.mxu0 0.0
        %1447 = vmatprep.subr.mxu0 0.0
        %1448 = vmatpush1.msra.mxu0 0.0
        %1449 = vmatprep.subr.mxu0 0.0
        %1450 = vmatpush1.msra.mxu0 0.0
        %1451 = vmatprep.subr.mxu0 0.0
        %1452 = vmatpush1.msra.mxu0 0.0
        %1453 = vmatprep.subr.mxu0 0.0
        %1454 = vmatpush1.msra.mxu0 0.0
        %1455 = vmatprep.subr.mxu0 0.0
        %1456 = vmatpush1.msra.mxu0 0.0
        %1457 = vmatprep.subr.mxu0 0.0
        %1458 = vmatpush1.msra.mxu0 0.0
        %1459 = vmatprep.subr.mxu0 0.0
        %1460 = vmatpush1.msra.mxu0 0.0
        %1461 = vmatprep.subr.mxu0 0.0
        %1462 = vmatpush1.msra.mxu0 0.0
        %1463 = vmatprep.subr.mxu0 0.0
        %1464 = vmatpush1.msra.mxu0 0.0
        %1465 = vmatprep.subr.mxu0 0.0
        %1466 = vmatpush1.msra.mxu0 0.0
        %1467 = vmatprep.subr.mxu0 0.0
        %1468 = vmatpush1.msra.mxu0 0.0
        %1469 = vmatprep.subr.mxu0 0.0
        %1470 = vmatpush1.msra.mxu0 0.0
        %1471 = vmatprep.subr.mxu0 0.0
        %1472 = vmatpush1.msra.mxu0 0.0
        %1473 = vmatprep.subr.mxu0 0.0
        %1474 = vmatpush1.msra.mxu0 0.0
        %1475 = vmatprep.subr.mxu0 0.0
        %1476 = vmatpush1.msra.mxu0 0.0
        %1477 = vmatprep.subr.mxu0 0.0
        %1478 = vmatpush1.msra.mxu0 0.0
        %1479 = vmatprep.subr.mxu0 0.0
        %1480 = vmatpush1.msra.mxu0 0.0
        %1481 = vmatprep.subr.mxu0 0.0
        %1482 = vmatpush1.msra.mxu0 0.0
        %1483 = vmatprep.subr.mxu0 0.0
        %1484 = vmatpush1.msra.mxu0 0.0
        %1485 = vmatprep.subr.mxu0 0.0
        %1486 = vmatpush1.msra.mxu0 0.0
        %1487 = vmatprep.subr.mxu0 0.0
        %1488 = vmatpush1.msra.mxu0 0.0
        %1489 = vmatprep.subr.mxu0 0.0
        %1490 = vmatpush1.msra.mxu0 0.0
        %1491 = vmatprep.mubr.f32.mxu0 0.0
        %1492 = vmatmul.mubr.f32.gmra.mrb[0].mxu0 %v655
        %v1493 = vpop.f32.mrb[0].mxu0
        %v1494 = vadd.f32 %v641, %v1493
        %v1495 = vpop.f32.mrb[0].mxu0
        %1496 = vdwg.mxu0
        %vm1497 = vcmask 64512
        %v1499 = vsel %vm1497, %v724, 0
        %v1502 = vsel %vm1497, %v1004, 0
        %1504 = vmatprep.subr.mxu0 0.0
        %1505 = vmatpush1.xpose.msra.mxu0 %v1502
        %1506 = vmatprep.subr.mxu0 0.0
        %1507 = vmatpush1.xpose.msra.mxu0 0.0
        %1508 = vmatprep.subr.mxu0 0.0
        %1509 = vmatpush1.xpose.msra.mxu0 0.0
        %1510 = vmatprep.subr.mxu0 0.0
        %1511 = vmatpush1.xpose.msra.mxu0 0.0
        %1512 = vmatprep.subr.mxu0 0.0
        %1513 = vmatpush1.xpose.msra.mxu0 0.0
        %1514 = vmatprep.subr.mxu0 0.0
        %1515 = vmatpush1.xpose.msra.mxu0 0.0
        %1516 = vmatprep.subr.mxu0 0.0
        %1517 = vmatpush1.xpose.msra.mxu0 0.0
        %1518 = vmatprep.subr.mxu0 0.0
        %1519 = vmatpush1.xpose.msra.mxu0 0.0
        %1520 = vmatprep.subr.mxu0 0.0
        %1521 = vmatpush1.xpose.msra.mxu0 0.0
        %1522 = vmatprep.subr.mxu0 0.0
        %1523 = vmatpush1.xpose.msra.mxu0 0.0
        %1524 = vmatprep.subr.mxu0 0.0
        %1525 = vmatpush1.xpose.msra.mxu0 0.0
        %1526 = vmatprep.subr.mxu0 0.0
        %1527 = vmatpush1.xpose.msra.mxu0 0.0
        %1528 = vmatprep.subr.mxu0 0.0
        %1529 = vmatpush1.xpose.msra.mxu0 0.0
        %1530 = vmatprep.subr.mxu0 0.0
        %1531 = vmatpush1.xpose.msra.mxu0 0.0
        %1532 = vmatprep.subr.mxu0 0.0
        %1533 = vmatpush1.xpose.msra.mxu0 0.0
        %1534 = vmatprep.subr.mxu0 0.0
        %1535 = vmatpush1.xpose.msra.mxu0 0.0
        %1536 = vmatprep.subr.mxu0 0.0
        %1537 = vmatpush1.xpose.msra.mxu0 0.0
        %1538 = vmatprep.subr.mxu0 0.0
        %1539 = vmatpush1.xpose.msra.mxu0 0.0
        %1540 = vmatprep.subr.mxu0 0.0
        %1541 = vmatpush1.xpose.msra.mxu0 0.0
        %1542 = vmatprep.subr.mxu0 0.0
        %1543 = vmatpush1.xpose.msra.mxu0 0.0
        %1544 = vmatprep.subr.mxu0 0.0
        %1545 = vmatpush1.xpose.msra.mxu0 0.0
        %1546 = vmatprep.subr.mxu0 0.0
        %1547 = vmatpush1.xpose.msra.mxu0 0.0
        %1548 = vmatprep.subr.mxu0 0.0
        %1549 = vmatpush1.xpose.msra.mxu0 0.0
        %1550 = vmatprep.subr.mxu0 0.0
        %1551 = vmatpush1.xpose.msra.mxu0 0.0
        %1552 = vmatprep.subr.mxu0 0.0
        %1553 = vmatpush1.xpose.msra.mxu0 0.0
        %1554 = vmatprep.subr.mxu0 0.0
        %1555 = vmatpush1.xpose.msra.mxu0 0.0
        %1556 = vmatprep.subr.mxu0 0.0
        %1557 = vmatpush1.xpose.msra.mxu0 0.0
        %1558 = vmatprep.subr.mxu0 0.0
        %1559 = vmatpush1.xpose.msra.mxu0 0.0
        %1560 = vmatprep.subr.mxu0 0.0
        %1561 = vmatpush1.xpose.msra.mxu0 0.0
        %1562 = vmatprep.subr.mxu0 0.0
        %1563 = vmatpush1.xpose.msra.mxu0 0.0
        %1564 = vmatprep.subr.mxu0 0.0
        %1565 = vmatpush1.xpose.msra.mxu0 0.0
        %1566 = vmatprep.subr.mxu0 0.0
        %1567 = vmatpush1.xpose.msra.mxu0 0.0
        %1568 = vmatprep.mubr.f32.mxu0 0.0
        %1569 = vmatmul.mubr.f32.gmra.mrb[0].mxu0 %v1499
        %v1570 = vpop.f32.mrb[0].mxu0
        %v1571 = vadd.f32 0.0, %v1570
        %v1572 = vpop.f32.mrb[0].mxu0
        %1573 = vdwg.mxu0
        %v1575 = vsel %vm1497, %v794, 0
        %v1578 = vsel %vm1497, %v1074, 0
        %1580 = vmatprep.subr.mxu0 0.0
        %1581 = vmatpush1.xpose.msra.mxu0 %v1578
        %1582 = vmatprep.subr.mxu0 0.0
        %1583 = vmatpush1.xpose.msra.mxu0 0.0
        %1584 = vmatprep.subr.mxu0 0.0
        %1585 = vmatpush1.xpose.msra.mxu0 0.0
        %1586 = vmatprep.subr.mxu0 0.0
        %1587 = vmatpush1.xpose.msra.mxu0 0.0
        %1588 = vmatprep.subr.mxu0 0.0
        %1589 = vmatpush1.xpose.msra.mxu0 0.0
        %1590 = vmatprep.subr.mxu0 0.0
        %1591 = vmatpush1.xpose.msra.mxu0 0.0
        %1592 = vmatprep.subr.mxu0 0.0
        %1593 = vmatpush1.xpose.msra.mxu0 0.0
        %1594 = vmatprep.subr.mxu0 0.0
        %1595 = vmatpush1.xpose.msra.mxu0 0.0
        %1596 = vmatprep.subr.mxu0 0.0
        %1597 = vmatpush1.xpose.msra.mxu0 0.0
        %1598 = vmatprep.subr.mxu0 0.0
        %1599 = vmatpush1.xpose.msra.mxu0 0.0
        %1600 = vmatprep.subr.mxu0 0.0
        %1601 = vmatpush1.xpose.msra.mxu0 0.0
        %1602 = vmatprep.subr.mxu0 0.0
        %1603 = vmatpush1.xpose.msra.mxu0 0.0
        %1604 = vmatprep.subr.mxu0 0.0
        %1605 = vmatpush1.xpose.msra.mxu0 0.0
        %1606 = vmatprep.subr.mxu0 0.0
        %1607 = vmatpush1.xpose.msra.mxu0 0.0
        %1608 = vmatprep.subr.mxu0 0.0
        %1609 = vmatpush1.xpose.msra.mxu0 0.0
        %1610 = vmatprep.subr.mxu0 0.0
        %1611 = vmatpush1.xpose.msra.mxu0 0.0
        %1612 = vmatprep.subr.mxu0 0.0
        %1613 = vmatpush1.xpose.msra.mxu0 0.0
        %1614 = vmatprep.subr.mxu0 0.0
        %1615 = vmatpush1.xpose.msra.mxu0 0.0
        %1616 = vmatprep.subr.mxu0 0.0
        %1617 = vmatpush1.xpose.msra.mxu0 0.0
        %1618 = vmatprep.subr.mxu0 0.0
        %1619 = vmatpush1.xpose.msra.mxu0 0.0
        %1620 = vmatprep.subr.mxu0 0.0
        %1621 = vmatpush1.xpose.msra.mxu0 0.0
        %1622 = vmatprep.subr.mxu0 0.0
        %1623 = vmatpush1.xpose.msra.mxu0 0.0
        %1624 = vmatprep.subr.mxu0 0.0
        %1625 = vmatpush1.xpose.msra.mxu0 0.0
        %1626 = vmatprep.subr.mxu0 0.0
        %1627 = vmatpush1.xpose.msra.mxu0 0.0
        %1628 = vmatprep.subr.mxu0 0.0
        %1629 = vmatpush1.xpose.msra.mxu0 0.0
        %1630 = vmatprep.subr.mxu0 0.0
        %1631 = vmatpush1.xpose.msra.mxu0 0.0
        %1632 = vmatprep.subr.mxu0 0.0
        %1633 = vmatpush1.xpose.msra.mxu0 0.0
        %1634 = vmatprep.subr.mxu0 0.0
        %1635 = vmatpush1.xpose.msra.mxu0 0.0
        %1636 = vmatprep.subr.mxu0 0.0
        %1637 = vmatpush1.xpose.msra.mxu0 0.0
        %1638 = vmatprep.subr.mxu0 0.0
        %1639 = vmatpush1.xpose.msra.mxu0 0.0
        %1640 = vmatprep.subr.mxu0 0.0
        %1641 = vmatpush1.xpose.msra.mxu0 0.0
        %1642 = vmatprep.subr.mxu0 0.0
        %1643 = vmatpush1.xpose.msra.mxu0 0.0
        %1644 = vmatprep.mubr.f32.mxu0 0.0
        %1645 = vmatmul.mubr.f32.gmra.mrb[0].mxu0 %v1575
        %v1646 = vpop.f32.mrb[0].mxu0
        %v1647 = vadd.f32 0.0, %v1646
        %v1648 = vpop.f32.mrb[0].mxu0
        %1649 = vdwg.mxu0
        %v1651 = vsel %vm1497, %v864, 0
        %v1654 = vsel %vm1497, %v1144, 0
        %1656 = vmatprep.subr.mxu0 0.0
        %1657 = vmatpush1.xpose.msra.mxu0 %v1654
        %1658 = vmatprep.subr.mxu0 0.0
        %1659 = vmatpush1.xpose.msra.mxu0 0.0
        %1660 = vmatprep.subr.mxu0 0.0
        %1661 = vmatpush1.xpose.msra.mxu0 0.0
        %1662 = vmatprep.subr.mxu0 0.0
        %1663 = vmatpush1.xpose.msra.mxu0 0.0
        %1664 = vmatprep.subr.mxu0 0.0
        %1665 = vmatpush1.xpose.msra.mxu0 0.0
        %1666 = vmatprep.subr.mxu0 0.0
        %1667 = vmatpush1.xpose.msra.mxu0 0.0
        %1668 = vmatprep.subr.mxu0 0.0
        %1669 = vmatpush1.xpose.msra.mxu0 0.0
        %1670 = vmatprep.subr.mxu0 0.0
        %1671 = vmatpush1.xpose.msra.mxu0 0.0
        %1672 = vmatprep.subr.mxu0 0.0
        %1673 = vmatpush1.xpose.msra.mxu0 0.0
        %1674 = vmatprep.subr.mxu0 0.0
        %1675 = vmatpush1.xpose.msra.mxu0 0.0
        %1676 = vmatprep.subr.mxu0 0.0
        %1677 = vmatpush1.xpose.msra.mxu0 0.0
        %1678 = vmatprep.subr.mxu0 0.0
        %1679 = vmatpush1.xpose.msra.mxu0 0.0
        %1680 = vmatprep.subr.mxu0 0.0
        %1681 = vmatpush1.xpose.msra.mxu0 0.0
        %1682 = vmatprep.subr.mxu0 0.0
        %1683 = vmatpush1.xpose.msra.mxu0 0.0
        %1684 = vmatprep.subr.mxu0 0.0
        %1685 = vmatpush1.xpose.msra.mxu0 0.0
        %1686 = vmatprep.subr.mxu0 0.0
        %1687 = vmatpush1.xpose.msra.mxu0 0.0
        %1688 = vmatprep.subr.mxu0 0.0
        %1689 = vmatpush1.xpose.msra.mxu0 0.0
        %1690 = vmatprep.subr.mxu0 0.0
        %1691 = vmatpush1.xpose.msra.mxu0 0.0
        %1692 = vmatprep.subr.mxu0 0.0
        %1693 = vmatpush1.xpose.msra.mxu0 0.0
        %1694 = vmatprep.subr.mxu0 0.0
        %1695 = vmatpush1.xpose.msra.mxu0 0.0
        %1696 = vmatprep.subr.mxu0 0.0
        %1697 = vmatpush1.xpose.msra.mxu0 0.0
        %1698 = vmatprep.subr.mxu0 0.0
        %1699 = vmatpush1.xpose.msra.mxu0 0.0
        %1700 = vmatprep.subr.mxu0 0.0
        %1701 = vmatpush1.xpose.msra.mxu0 0.0
        %1702 = vmatprep.subr.mxu0 0.0
        %1703 = vmatpush1.xpose.msra.mxu0 0.0
        %1704 = vmatprep.subr.mxu0 0.0
        %1705 = vmatpush1.xpose.msra.mxu0 0.0
        %1706 = vmatprep.subr.mxu0 0.0
        %1707 = vmatpush1.xpose.msra.mxu0 0.0
        %1708 = vmatprep.subr.mxu0 0.0
        %1709 = vmatpush1.xpose.msra.mxu0 0.0
        %1710 = vmatprep.subr.mxu0 0.0
        %1711 = vmatpush1.xpose.msra.mxu0 0.0
        %1712 = vmatprep.subr.mxu0 0.0
        %1713 = vmatpush1.xpose.msra.mxu0 0.0
        %1714 = vmatprep.subr.mxu0 0.0
        %1715 = vmatpush1.xpose.msra.mxu0 0.0
        %1716 = vmatprep.subr.mxu0 0.0
        %1717 = vmatpush1.xpose.msra.mxu0 0.0
        %1718 = vmatprep.subr.mxu0 0.0
        %1719 = vmatpush1.xpose.msra.mxu0 0.0
        %1720 = vmatprep.mubr.f32.mxu0 0.0
        %1721 = vmatmul.mubr.f32.gmra.mrb[0].mxu0 %v1651
        %v1722 = vpop.f32.mrb[0].mxu0
        %v1723 = vadd.f32 0.0, %v1722
        %v1724 = vpop.f32.mrb[0].mxu0
        %1725 = vdwg.mxu0
        %v1727 = vsel %vm1497, %v934, 0
        %v1730 = vsel %vm1497, %v1214, 0
        %1732 = vmatprep.subr.mxu0 0.0
        %1733 = vmatpush1.xpose.msra.mxu0 %v1730
        %1734 = vmatprep.subr.mxu0 0.0
        %1735 = vmatpush1.xpose.msra.mxu0 0.0
        %1736 = vmatprep.subr.mxu0 0.0
        %1737 = vmatpush1.xpose.msra.mxu0 0.0
        %1738 = vmatprep.subr.mxu0 0.0
        %1739 = vmatpush1.xpose.msra.mxu0 0.0
        %1740 = vmatprep.subr.mxu0 0.0
        %1741 = vmatpush1.xpose.msra.mxu0 0.0
        %1742 = vmatprep.subr.mxu0 0.0
        %1743 = vmatpush1.xpose.msra.mxu0 0.0
        %1744 = vmatprep.subr.mxu0 0.0
        %1745 = vmatpush1.xpose.msra.mxu0 0.0
        %1746 = vmatprep.subr.mxu0 0.0
        %1747 = vmatpush1.xpose.msra.mxu0 0.0
        %1748 = vmatprep.subr.mxu0 0.0
        %1749 = vmatpush1.xpose.msra.mxu0 0.0
        %1750 = vmatprep.subr.mxu0 0.0
        %1751 = vmatpush1.xpose.msra.mxu0 0.0
        %1752 = vmatprep.subr.mxu0 0.0
        %1753 = vmatpush1.xpose.msra.mxu0 0.0
        %1754 = vmatprep.subr.mxu0 0.0
        %1755 = vmatpush1.xpose.msra.mxu0 0.0
        %1756 = vmatprep.subr.mxu0 0.0
        %1757 = vmatpush1.xpose.msra.mxu0 0.0
        %1758 = vmatprep.subr.mxu0 0.0
        %1759 = vmatpush1.xpose.msra.mxu0 0.0
        %1760 = vmatprep.subr.mxu0 0.0
        %1761 = vmatpush1.xpose.msra.mxu0 0.0
        %1762 = vmatprep.subr.mxu0 0.0
        %1763 = vmatpush1.xpose.msra.mxu0 0.0
        %1764 = vmatprep.subr.mxu0 0.0
        %1765 = vmatpush1.xpose.msra.mxu0 0.0
        %1766 = vmatprep.subr.mxu0 0.0
        %1767 = vmatpush1.xpose.msra.mxu0 0.0
        %1768 = vmatprep.subr.mxu0 0.0
        %1769 = vmatpush1.xpose.msra.mxu0 0.0
        %1770 = vmatprep.subr.mxu0 0.0
        %1771 = vmatpush1.xpose.msra.mxu0 0.0
        %1772 = vmatprep.subr.mxu0 0.0
        %1773 = vmatpush1.xpose.msra.mxu0 0.0
        %1774 = vmatprep.subr.mxu0 0.0
        %1775 = vmatpush1.xpose.msra.mxu0 0.0
        %1776 = vmatprep.subr.mxu0 0.0
        %1777 = vmatpush1.xpose.msra.mxu0 0.0
        %1778 = vmatprep.subr.mxu0 0.0
        %1779 = vmatpush1.xpose.msra.mxu0 0.0
        %1780 = vmatprep.subr.mxu0 0.0
        %1781 = vmatpush1.xpose.msra.mxu0 0.0
        %1782 = vmatprep.subr.mxu0 0.0
        %1783 = vmatpush1.xpose.msra.mxu0 0.0
        %1784 = vmatprep.subr.mxu0 0.0
        %1785 = vmatpush1.xpose.msra.mxu0 0.0
        %1786 = vmatprep.subr.mxu0 0.0
        %1787 = vmatpush1.xpose.msra.mxu0 0.0
        %1788 = vmatprep.subr.mxu0 0.0
        %1789 = vmatpush1.xpose.msra.mxu0 0.0
        %1790 = vmatprep.subr.mxu0 0.0
        %1791 = vmatpush1.xpose.msra.mxu0 0.0
        %1792 = vmatprep.subr.mxu0 0.0
        %1793 = vmatpush1.xpose.msra.mxu0 0.0
        %1794 = vmatprep.subr.mxu0 0.0
        %1795 = vmatpush1.xpose.msra.mxu0 0.0
        %1796 = vmatprep.mubr.f32.mxu0 0.0
        %1797 = vmatmul.mubr.f32.gmra.mrb[0].mxu0 %v1727
        %v1798 = vpop.f32.mrb[0].mxu0
        %v1799 = vadd.f32 0.0, %v1798
        %v1800 = vpop.f32.mrb[0].mxu0
        %1801 = vdwg.mxu0
        %v1802 = vsel %vm1497, %v1571, -inf
        %1803 = vmax.xlane.f32.xlu0 %v1802
        %v1804 = vpop.xlane.xlu0 %1803
        %v1805 = vsel %vm1497, %v1647, -inf
        %1806 = vmax.xlane.f32.xlu0 %v1805
        %v1807 = vpop.xlane.xlu0 %1806
        %v1808 = vsel %vm1497, %v1723, -inf
        %1809 = vmax.xlane.f32.xlu0 %v1808
        %v1810 = vpop.xlane.xlu0 %1809
        %v1811 = vsel %vm1497, %v1799, -inf
        %1812 = vmax.xlane.f32.xlu0 %v1811
        %v1813 = vpop.xlane.xlu0 %1812
        %v1814 = vsub.f32 %v1571, %v1804
        %v1815 = vsub.f32 %v1647, %v1807
        %v1816 = vsub.f32 %v1723, %v1810
        %v1817 = vsub.f32 %v1799, %v1813
        %v1818 = vmul.f32 %v1814, 1.442695
        %v1819 = vpow.pop %v1818
        %v1820 = vmul.f32 %v1815, 1.442695
        %v1821 = vpow.pop %v1820
        %v1822 = vmul.f32 %v1816, 1.442695
        %v1823 = vpow.pop %v1822
        %v1824 = vmul.f32 %v1817, 1.442695
        %v1825 = vpow.pop %v1824
        %v1826 = vsel %vm1497, %v1819, 0.0
        %1827 = vadd.xlane.f32.xlu0 %v1826
        %v1828 = vpop.xlane.xlu0 %1827
        %v1829 = vsel %vm1497, %v1821, 0.0
        %1830 = vadd.xlane.f32.xlu0 %v1829
        %v1831 = vpop.xlane.xlu0 %1830
        %v1832 = vsel %vm1497, %v1823, 0.0
        %1833 = vadd.xlane.f32.xlu0 %v1832
        %v1834 = vpop.xlane.xlu0 %1833
        %v1835 = vsel %vm1497, %v1825, 0.0
        %1836 = vadd.xlane.f32.xlu0 %v1835
        %v1837 = vpop.xlane.xlu0 %1836
        %v1838 = vrcp.pop %v1828
        %v1839 = vrcp.pop %v1831
        %v1840 = vrcp.pop %v1834
        %v1841 = vrcp.pop %v1837
        %v1842 = vmul.f32 %v1819, %v1838
        %v1843 = vmul.f32 %v1821, %v1839
        %v1844 = vmul.f32 %v1823, %v1840
        %v1845 = vmul.f32 %v1825, %v1841
        %v1847 = vsel %vm1497, %v1842, 0
        %1849 = vmatprep.subr.mxu0 0.0
        %1850 = vmatpush1.msra.mxu0 %v1284
        %1851 = vmatprep.subr.mxu0 0.0
        %1852 = vmatpush1.msra.mxu0 0.0
        %1853 = vmatprep.subr.mxu0 0.0
        %1854 = vmatpush1.msra.mxu0 0.0
        %1855 = vmatprep.subr.mxu0 0.0
        %1856 = vmatpush1.msra.mxu0 0.0
        %1857 = vmatprep.subr.mxu0 0.0
        %1858 = vmatpush1.msra.mxu0 0.0
        %1859 = vmatprep.subr.mxu0 0.0
        %1860 = vmatpush1.msra.mxu0 0.0
        %1861 = vmatprep.subr.mxu0 0.0
        %1862 = vmatpush1.msra.mxu0 0.0
        %1863 = vmatprep.subr.mxu0 0.0
        %1864 = vmatpush1.msra.mxu0 0.0
        %1865 = vmatprep.subr.mxu0 0.0
        %1866 = vmatpush1.msra.mxu0 0.0
        %1867 = vmatprep.subr.mxu0 0.0
        %1868 = vmatpush1.msra.mxu0 0.0
        %1869 = vmatprep.subr.mxu0 0.0
        %1870 = vmatpush1.msra.mxu0 0.0
        %1871 = vmatprep.subr.mxu0 0.0
        %1872 = vmatpush1.msra.mxu0 0.0
        %1873 = vmatprep.subr.mxu0 0.0
        %1874 = vmatpush1.msra.mxu0 0.0
        %1875 = vmatprep.subr.mxu0 0.0
        %1876 = vmatpush1.msra.mxu0 0.0
        %1877 = vmatprep.subr.mxu0 0.0
        %1878 = vmatpush1.msra.mxu0 0.0
        %1879 = vmatprep.subr.mxu0 0.0
        %1880 = vmatpush1.msra.mxu0 0.0
        %1881 = vmatprep.subr.mxu0 0.0
        %1882 = vmatpush1.msra.mxu0 0.0
        %1883 = vmatprep.subr.mxu0 0.0
        %1884 = vmatpush1.msra.mxu0 0.0
        %1885 = vmatprep.subr.mxu0 0.0
        %1886 = vmatpush1.msra.mxu0 0.0
        %1887 = vmatprep.subr.mxu0 0.0
        %1888 = vmatpush1.msra.mxu0 0.0
        %1889 = vmatprep.subr.mxu0 0.0
        %1890 = vmatpush1.msra.mxu0 0.0
        %1891 = vmatprep.subr.mxu0 0.0
        %1892 = vmatpush1.msra.mxu0 0.0
        %1893 = vmatprep.subr.mxu0 0.0
        %1894 = vmatpush1.msra.mxu0 0.0
        %1895 = vmatprep.subr.mxu0 0.0
        %1896 = vmatpush1.msra.mxu0 0.0
        %1897 = vmatprep.subr.mxu0 0.0
        %1898 = vmatpush1.msra.mxu0 0.0
        %1899 = vmatprep.subr.mxu0 0.0
        %1900 = vmatpush1.msra.mxu0 0.0
        %1901 = vmatprep.subr.mxu0 0.0
        %1902 = vmatpush1.msra.mxu0 0.0
        %1903 = vmatprep.subr.mxu0 0.0
        %1904 = vmatpush1.msra.mxu0 0.0
        %1905 = vmatprep.subr.mxu0 0.0
        %1906 = vmatpush1.msra.mxu0 0.0
        %1907 = vmatprep.subr.mxu0 0.0
        %1908 = vmatpush1.msra.mxu0 0.0
        %1909 = vmatprep.subr.mxu0 0.0
        %1910 = vmatpush1.msra.mxu0 0.0
        %1911 = vmatprep.subr.mxu0 0.0
        %1912 = vmatpush1.msra.mxu0 0.0
        %1913 = vmatprep.mubr.f32.mxu0 0.0
        %1914 = vmatmul.mubr.f32.gmra.mrb[0].mxu0 %v1847
        %v1915 = vpop.f32.mrb[0].mxu0
        %v1916 = vadd.f32 0.0, %v1915
        %v1917 = vpop.f32.mrb[0].mxu0
        %1918 = vdwg.mxu0
        %v1920 = vsel %vm1497, %v1843, 0
        %1922 = vmatprep.subr.mxu0 0.0
        %1923 = vmatpush1.msra.mxu0 %v1354
        %1924 = vmatprep.subr.mxu0 0.0
        %1925 = vmatpush1.msra.mxu0 0.0
        %1926 = vmatprep.subr.mxu0 0.0
        %1927 = vmatpush1.msra.mxu0 0.0
        %1928 = vmatprep.subr.mxu0 0.0
        %1929 = vmatpush1.msra.mxu0 0.0
        %1930 = vmatprep.subr.mxu0 0.0
        %1931 = vmatpush1.msra.mxu0 0.0
        %1932 = vmatprep.subr.mxu0 0.0
        %1933 = vmatpush1.msra.mxu0 0.0
        %1934 = vmatprep.subr.mxu0 0.0
        %1935 = vmatpush1.msra.mxu0 0.0
        %1936 = vmatprep.subr.mxu0 0.0
        %1937 = vmatpush1.msra.mxu0 0.0
        %1938 = vmatprep.subr.mxu0 0.0
        %1939 = vmatpush1.msra.mxu0 0.0
        %1940 = vmatprep.subr.mxu0 0.0
        %1941 = vmatpush1.msra.mxu0 0.0
        %1942 = vmatprep.subr.mxu0 0.0
        %1943 = vmatpush1.msra.mxu0 0.0
        %1944 = vmatprep.subr.mxu0 0.0
        %1945 = vmatpush1.msra.mxu0 0.0
        %1946 = vmatprep.subr.mxu0 0.0
        %1947 = vmatpush1.msra.mxu0 0.0
        %1948 = vmatprep.subr.mxu0 0.0
        %1949 = vmatpush1.msra.mxu0 0.0
        %1950 = vmatprep.subr.mxu0 0.0
        %1951 = vmatpush1.msra.mxu0 0.0
        %1952 = vmatprep.subr.mxu0 0.0
        %1953 = vmatpush1.msra.mxu0 0.0
        %1954 = vmatprep.subr.mxu0 0.0
        %1955 = vmatpush1.msra.mxu0 0.0
        %1956 = vmatprep.subr.mxu0 0.0
        %1957 = vmatpush1.msra.mxu0 0.0
        %1958 = vmatprep.subr.mxu0 0.0
        %1959 = vmatpush1.msra.mxu0 0.0
        %1960 = vmatprep.subr.mxu0 0.0
        %1961 = vmatpush1.msra.mxu0 0.0
        %1962 = vmatprep.subr.mxu0 0.0
        %1963 = vmatpush1.msra.mxu0 0.0
        %1964 = vmatprep.subr.mxu0 0.0
        %1965 = vmatpush1.msra.mxu0 0.0
        %1966 = vmatprep.subr.mxu0 0.0
        %1967 = vmatpush1.msra.mxu0 0.0
        %1968 = vmatprep.subr.mxu0 0.0
        %1969 = vmatpush1.msra.mxu0 0.0
        %1970 = vmatprep.subr.mxu0 0.0
        %1971 = vmatpush1.msra.mxu0 0.0
        %1972 = vmatprep.subr.mxu0 0.0
        %1973 = vmatpush1.msra.mxu0 0.0
        %1974 = vmatprep.subr.mxu0 0.0
        %1975 = vmatpush1.msra.mxu0 0.0
        %1976 = vmatprep.subr.mxu0 0.0
        %1977 = vmatpush1.msra.mxu0 0.0
        %1978 = vmatprep.subr.mxu0 0.0
        %1979 = vmatpush1.msra.mxu0 0.0
        %1980 = vmatprep.subr.mxu0 0.0
        %1981 = vmatpush1.msra.mxu0 0.0
        %1982 = vmatprep.subr.mxu0 0.0
        %1983 = vmatpush1.msra.mxu0 0.0
        %1984 = vmatprep.subr.mxu0 0.0
        %1985 = vmatpush1.msra.mxu0 0.0
        %1986 = vmatprep.mubr.f32.mxu0 0.0
        %1987 = vmatmul.mubr.f32.gmra.mrb[0].mxu0 %v1920
        %v1988 = vpop.f32.mrb[0].mxu0
        %v1989 = vadd.f32 0.0, %v1988
        %v1990 = vpop.f32.mrb[0].mxu0
        %1991 = vdwg.mxu0
        %v1993 = vsel %vm1497, %v1844, 0
        %1995 = vmatprep.subr.mxu0 0.0
        %1996 = vmatpush1.msra.mxu0 %v1424
        %1997 = vmatprep.subr.mxu0 0.0
        %1998 = vmatpush1.msra.mxu0 0.0
        %1999 = vmatprep.subr.mxu0 0.0
        %2000 = vmatpush1.msra.mxu0 0.0
        %2001 = vmatprep.subr.mxu0 0.0
        %2002 = vmatpush1.msra.mxu0 0.0
        %2003 = vmatprep.subr.mxu0 0.0
        %2004 = vmatpush1.msra.mxu0 0.0
        %2005 = vmatprep.subr.mxu0 0.0
        %2006 = vmatpush1.msra.mxu0 0.0
        %2007 = vmatprep.subr.mxu0 0.0
        %2008 = vmatpush1.msra.mxu0 0.0
        %2009 = vmatprep.subr.mxu0 0.0
        %2010 = vmatpush1.msra.mxu0 0.0
        %2011 = vmatprep.subr.mxu0 0.0
        %2012 = vmatpush1.msra.mxu0 0.0
        %2013 = vmatprep.subr.mxu0 0.0
        %2014 = vmatpush1.msra.mxu0 0.0
        %2015 = vmatprep.subr.mxu0 0.0
        %2016 = vmatpush1.msra.mxu0 0.0
        %2017 = vmatprep.subr.mxu0 0.0
        %2018 = vmatpush1.msra.mxu0 0.0
        %2019 = vmatprep.subr.mxu0 0.0
        %2020 = vmatpush1.msra.mxu0 0.0
        %2021 = vmatprep.subr.mxu0 0.0
        %2022 = vmatpush1.msra.mxu0 0.0
        %2023 = vmatprep.subr.mxu0 0.0
        %2024 = vmatpush1.msra.mxu0 0.0
        %2025 = vmatprep.subr.mxu0 0.0
        %2026 = vmatpush1.msra.mxu0 0.0
        %2027 = vmatprep.subr.mxu0 0.0
        %2028 = vmatpush1.msra.mxu0 0.0
        %2029 = vmatprep.subr.mxu0 0.0
        %2030 = vmatpush1.msra.mxu0 0.0
        %2031 = vmatprep.subr.mxu0 0.0
        %2032 = vmatpush1.msra.mxu0 0.0
        %2033 = vmatprep.subr.mxu0 0.0
        %2034 = vmatpush1.msra.mxu0 0.0
        %2035 = vmatprep.subr.mxu0 0.0
        %2036 = vmatpush1.msra.mxu0 0.0
        %2037 = vmatprep.subr.mxu0 0.0
        %2038 = vmatpush1.msra.mxu0 0.0
        %2039 = vmatprep.subr.mxu0 0.0
        %2040 = vmatpush1.msra.mxu0 0.0
        %2041 = vmatprep.subr.mxu0 0.0
        %2042 = vmatpush1.msra.mxu0 0.0
        %2043 = vmatprep.subr.mxu0 0.0
        %2044 = vmatpush1.msra.mxu0 0.0
        %2045 = vmatprep.subr.mxu0 0.0
        %2046 = vmatpush1.msra.mxu0 0.0
        %2047 = vmatprep.subr.mxu0 0.0
        %2048 = vmatpush1.msra.mxu0 0.0
        %2049 = vmatprep.subr.mxu0 0.0
        %2050 = vmatpush1.msra.mxu0 0.0
        %2051 = vmatprep.subr.mxu0 0.0
        %2052 = vmatpush1.msra.mxu0 0.0
        %2053 = vmatprep.subr.mxu0 0.0
        %2054 = vmatpush1.msra.mxu0 0.0
        %2055 = vmatprep.subr.mxu0 0.0
        %2056 = vmatpush1.msra.mxu0 0.0
        %2057 = vmatprep.subr.mxu0 0.0
        %2058 = vmatpush1.msra.mxu0 0.0
        %2059 = vmatprep.mubr.f32.mxu0 0.0
        %2060 = vmatmul.mubr.f32.gmra.mrb[0].mxu0 %v1993
        %v2061 = vpop.f32.mrb[0].mxu0
        %v2062 = vadd.f32 0.0, %v2061
        %v2063 = vpop.f32.mrb[0].mxu0
        %2064 = vdwg.mxu0
        %v2066 = vsel %vm1497, %v1845, 0
        %2068 = vmatprep.subr.mxu0 0.0
        %2069 = vmatpush1.msra.mxu0 %v1494
        %2070 = vmatprep.subr.mxu0 0.0
        %2071 = vmatpush1.msra.mxu0 0.0
        %2072 = vmatprep.subr.mxu0 0.0
        %2073 = vmatpush1.msra.mxu0 0.0
        %2074 = vmatprep.subr.mxu0 0.0
        %2075 = vmatpush1.msra.mxu0 0.0
        %2076 = vmatprep.subr.mxu0 0.0
        %2077 = vmatpush1.msra.mxu0 0.0
        %2078 = vmatprep.subr.mxu0 0.0
        %2079 = vmatpush1.msra.mxu0 0.0
        %2080 = vmatprep.subr.mxu0 0.0
        %2081 = vmatpush1.msra.mxu0 0.0
        %2082 = vmatprep.subr.mxu0 0.0
        %2083 = vmatpush1.msra.mxu0 0.0
        %2084 = vmatprep.subr.mxu0 0.0
        %2085 = vmatpush1.msra.mxu0 0.0
        %2086 = vmatprep.subr.mxu0 0.0
        %2087 = vmatpush1.msra.mxu0 0.0
        %2088 = vmatprep.subr.mxu0 0.0
        %2089 = vmatpush1.msra.mxu0 0.0
        %2090 = vmatprep.subr.mxu0 0.0
        %2091 = vmatpush1.msra.mxu0 0.0
        %2092 = vmatprep.subr.mxu0 0.0
        %2093 = vmatpush1.msra.mxu0 0.0
        %2094 = vmatprep.subr.mxu0 0.0
        %2095 = vmatpush1.msra.mxu0 0.0
        %2096 = vmatprep.subr.mxu0 0.0
        %2097 = vmatpush1.msra.mxu0 0.0
        %2098 = vmatprep.subr.mxu0 0.0
        %2099 = vmatpush1.msra.mxu0 0.0
        %2100 = vmatprep.subr.mxu0 0.0
        %2101 = vmatpush1.msra.mxu0 0.0
        %2102 = vmatprep.subr.mxu0 0.0
        %2103 = vmatpush1.msra.mxu0 0.0
        %2104 = vmatprep.subr.mxu0 0.0
        %2105 = vmatpush1.msra.mxu0 0.0
        %2106 = vmatprep.subr.mxu0 0.0
        %2107 = vmatpush1.msra.mxu0 0.0
        %2108 = vmatprep.subr.mxu0 0.0
        %2109 = vmatpush1.msra.mxu0 0.0
        %2110 = vmatprep.subr.mxu0 0.0
        %2111 = vmatpush1.msra.mxu0 0.0
        %2112 = vmatprep.subr.mxu0 0.0
        %2113 = vmatpush1.msra.mxu0 0.0
        %2114 = vmatprep.subr.mxu0 0.0
        %2115 = vmatpush1.msra.mxu0 0.0
        %2116 = vmatprep.subr.mxu0 0.0
        %2117 = vmatpush1.msra.mxu0 0.0
        %2118 = vmatprep.subr.mxu0 0.0
        %2119 = vmatpush1.msra.mxu0 0.0
        %2120 = vmatprep.subr.mxu0 0.0
        %2121 = vmatpush1.msra.mxu0 0.0
        %2122 = vmatprep.subr.mxu0 0.0
        %2123 = vmatpush1.msra.mxu0 0.0
        %2124 = vmatprep.subr.mxu0 0.0
        %2125 = vmatpush1.msra.mxu0 0.0
        %2126 = vmatprep.subr.mxu0 0.0
        %2127 = vmatpush1.msra.mxu0 0.0
        %2128 = vmatprep.subr.mxu0 0.0
        %2129 = vmatpush1.msra.mxu0 0.0
        %2130 = vmatprep.subr.mxu0 0.0
        %2131 = vmatpush1.msra.mxu0 0.0
        %2132 = vmatprep.mubr.f32.mxu0 0.0
        %2133 = vmatmul.mubr.f32.gmra.mrb[0].mxu0 %v2066
        %v2134 = vpop.f32.mrb[0].mxu0
        %v2135 = vadd.f32 0.0, %v2134
        %v2136 = vpop.f32.mrb[0].mxu0
        %2137 = vdwg.mxu0
        %v2138 = vld [vmem:[%s5] sm:$0xff]
        %v2139 = vld [vmem:[%s5 + $0x8] sm:$0xff]
        %v2140 = vld [vmem:[%s5 + $0x10] sm:$0xff]
        %v2141 = vld [vmem:[%s5 + $0x18] sm:$0xff]
        %v2143 = vsel %vm1497, %v1916, 0
        %2145 = vmatprep.subr.mxu0 0.0
        %2146 = vmatpush1.msra.mxu0 %v2138
        %2147 = vmatprep.subr.mxu0 0.0
        %2148 = vmatpush1.msra.mxu0 0.0
        %2149 = vmatprep.subr.mxu0 0.0
        %2150 = vmatpush1.msra.mxu0 0.0
        %2151 = vmatprep.subr.mxu0 0.0
        %2152 = vmatpush1.msra.mxu0 0.0
        %2153 = vmatprep.subr.mxu0 0.0
        %2154 = vmatpush1.msra.mxu0 0.0
        %2155 = vmatprep.subr.mxu0 0.0
        %2156 = vmatpush1.msra.mxu0 0.0
        %2157 = vmatprep.subr.mxu0 0.0
        %2158 = vmatpush1.msra.mxu0 0.0
        %2159 = vmatprep.subr.mxu0 0.0
        %2160 = vmatpush1.msra.mxu0 0.0
        %2161 = vmatprep.subr.mxu0 0.0
        %2162 = vmatpush1.msra.mxu0 0.0
        %2163 = vmatprep.subr.mxu0 0.0
        %2164 = vmatpush1.msra.mxu0 0.0
        %2165 = vmatprep.subr.mxu0 0.0
        %2166 = vmatpush1.msra.mxu0 0.0
        %2167 = vmatprep.subr.mxu0 0.0
        %2168 = vmatpush1.msra.mxu0 0.0
        %2169 = vmatprep.subr.mxu0 0.0
        %2170 = vmatpush1.msra.mxu0 0.0
        %2171 = vmatprep.subr.mxu0 0.0
        %2172 = vmatpush1.msra.mxu0 0.0
        %2173 = vmatprep.subr.mxu0 0.0
        %2174 = vmatpush1.msra.mxu0 0.0
        %2175 = vmatprep.subr.mxu0 0.0
        %2176 = vmatpush1.msra.mxu0 0.0
        %2177 = vmatprep.subr.mxu0 0.0
        %2178 = vmatpush1.msra.mxu0 0.0
        %2179 = vmatprep.subr.mxu0 0.0
        %2180 = vmatpush1.msra.mxu0 0.0
        %2181 = vmatprep.subr.mxu0 0.0
        %2182 = vmatpush1.msra.mxu0 0.0
        %2183 = vmatprep.subr.mxu0 0.0
        %2184 = vmatpush1.msra.mxu0 0.0
        %2185 = vmatprep.subr.mxu0 0.0
        %2186 = vmatpush1.msra.mxu0 0.0
        %2187 = vmatprep.subr.mxu0 0.0
        %2188 = vmatpush1.msra.mxu0 0.0
        %2189 = vmatprep.subr.mxu0 0.0
        %2190 = vmatpush1.msra.mxu0 0.0
        %2191 = vmatprep.subr.mxu0 0.0
        %2192 = vmatpush1.msra.mxu0 0.0
        %2193 = vmatprep.subr.mxu0 0.0
        %2194 = vmatpush1.msra.mxu0 0.0
        %2195 = vmatprep.subr.mxu0 0.0
        %2196 = vmatpush1.msra.mxu0 0.0
        %2197 = vmatprep.subr.mxu0 0.0
        %2198 = vmatpush1.msra.mxu0 0.0
        %2199 = vmatprep.subr.mxu0 0.0
        %2200 = vmatpush1.msra.mxu0 0.0
        %2201 = vmatprep.subr.mxu0 0.0
        %2202 = vmatpush1.msra.mxu0 0.0
        %2203 = vmatprep.subr.mxu0 0.0
        %2204 = vmatpush1.msra.mxu0 0.0
        %2205 = vmatprep.subr.mxu0 0.0
        %2206 = vmatpush1.msra.mxu0 0.0
        %2207 = vmatprep.subr.mxu0 0.0
        %2208 = vmatpush1.msra.mxu0 0.0
        %2209 = vmatprep.mubr.f32.mxu0 0.0
        %2210 = vmatmul.mubr.f32.gmra.mrb[0].mxu0 %v2143
        %v2211 = vpop.f32.mrb[0].mxu0
        %v2212 = vadd.f32 0.0, %v2211
        %v2213 = vpop.f32.mrb[0].mxu0
        %2214 = vdwg.mxu0
        %v2216 = vsel %vm1497, %v1989, 0
        %2218 = vmatprep.subr.mxu0 0.0
        %2219 = vmatpush1.msra.mxu0 %v2139
        %2220 = vmatprep.subr.mxu0 0.0
        %2221 = vmatpush1.msra.mxu0 0.0
        %2222 = vmatprep.subr.mxu0 0.0
        %2223 = vmatpush1.msra.mxu0 0.0
        %2224 = vmatprep.subr.mxu0 0.0
        %2225 = vmatpush1.msra.mxu0 0.0
        %2226 = vmatprep.subr.mxu0 0.0
        %2227 = vmatpush1.msra.mxu0 0.0
        %2228 = vmatprep.subr.mxu0 0.0
        %2229 = vmatpush1.msra.mxu0 0.0
        %2230 = vmatprep.subr.mxu0 0.0
        %2231 = vmatpush1.msra.mxu0 0.0
        %2232 = vmatprep.subr.mxu0 0.0
        %2233 = vmatpush1.msra.mxu0 0.0
        %2234 = vmatprep.subr.mxu0 0.0
        %2235 = vmatpush1.msra.mxu0 0.0
        %2236 = vmatprep.subr.mxu0 0.0
        %2237 = vmatpush1.msra.mxu0 0.0
        %2238 = vmatprep.subr.mxu0 0.0
        %2239 = vmatpush1.msra.mxu0 0.0
        %2240 = vmatprep.subr.mxu0 0.0
        %2241 = vmatpush1.msra.mxu0 0.0
        %2242 = vmatprep.subr.mxu0 0.0
        %2243 = vmatpush1.msra.mxu0 0.0
        %2244 = vmatprep.subr.mxu0 0.0
        %2245 = vmatpush1.msra.mxu0 0.0
        %2246 = vmatprep.subr.mxu0 0.0
        %2247 = vmatpush1.msra.mxu0 0.0
        %2248 = vmatprep.subr.mxu0 0.0
        %2249 = vmatpush1.msra.mxu0 0.0
        %2250 = vmatprep.subr.mxu0 0.0
        %2251 = vmatpush1.msra.mxu0 0.0
        %2252 = vmatprep.subr.mxu0 0.0
        %2253 = vmatpush1.msra.mxu0 0.0
        %2254 = vmatprep.subr.mxu0 0.0
        %2255 = vmatpush1.msra.mxu0 0.0
        %2256 = vmatprep.subr.mxu0 0.0
        %2257 = vmatpush1.msra.mxu0 0.0
        %2258 = vmatprep.subr.mxu0 0.0
        %2259 = vmatpush1.msra.mxu0 0.0
        %2260 = vmatprep.subr.mxu0 0.0
        %2261 = vmatpush1.msra.mxu0 0.0
        %2262 = vmatprep.subr.mxu0 0.0
        %2263 = vmatpush1.msra.mxu0 0.0
        %2264 = vmatprep.subr.mxu0 0.0
        %2265 = vmatpush1.msra.mxu0 0.0
        %2266 = vmatprep.subr.mxu0 0.0
        %2267 = vmatpush1.msra.mxu0 0.0
        %2268 = vmatprep.subr.mxu0 0.0
        %2269 = vmatpush1.msra.mxu0 0.0
        %2270 = vmatprep.subr.mxu0 0.0
        %2271 = vmatpush1.msra.mxu0 0.0
        %2272 = vmatprep.subr.mxu0 0.0
        %2273 = vmatpush1.msra.mxu0 0.0
        %2274 = vmatprep.subr.mxu0 0.0
        %2275 = vmatpush1.msra.mxu0 0.0
        %2276 = vmatprep.subr.mxu0 0.0
        %2277 = vmatpush1.msra.mxu0 0.0
        %2278 = vmatprep.subr.mxu0 0.0
        %2279 = vmatpush1.msra.mxu0 0.0
        %2280 = vmatprep.subr.mxu0 0.0
        %2281 = vmatpush1.msra.mxu0 0.0
        %2282 = vmatprep.mubr.f32.mxu0 0.0
        %2283 = vmatmul.mubr.f32.gmra.mrb[0].mxu0 %v2216
        %v2284 = vpop.f32.mrb[0].mxu0
        %v2285 = vadd.f32 0.0, %v2284
        %v2286 = vpop.f32.mrb[0].mxu0
        %2287 = vdwg.mxu0
        %v2289 = vsel %vm1497, %v2062, 0
        %2291 = vmatprep.subr.mxu0 0.0
        %2292 = vmatpush1.msra.mxu0 %v2140
        %2293 = vmatprep.subr.mxu0 0.0
        %2294 = vmatpush1.msra.mxu0 0.0
        %2295 = vmatprep.subr.mxu0 0.0
        %2296 = vmatpush1.msra.mxu0 0.0
        %2297 = vmatprep.subr.mxu0 0.0
        %2298 = vmatpush1.msra.mxu0 0.0
        %2299 = vmatprep.subr.mxu0 0.0
        %2300 = vmatpush1.msra.mxu0 0.0
        %2301 = vmatprep.subr.mxu0 0.0
        %2302 = vmatpush1.msra.mxu0 0.0
        %2303 = vmatprep.subr.mxu0 0.0
        %2304 = vmatpush1.msra.mxu0 0.0
        %2305 = vmatprep.subr.mxu0 0.0
        %2306 = vmatpush1.msra.mxu0 0.0
        %2307 = vmatprep.subr.mxu0 0.0
        %2308 = vmatpush1.msra.mxu0 0.0
        %2309 = vmatprep.subr.mxu0 0.0
        %2310 = vmatpush1.msra.mxu0 0.0
        %2311 = vmatprep.subr.mxu0 0.0
        %2312 = vmatpush1.msra.mxu0 0.0
        %2313 = vmatprep.subr.mxu0 0.0
        %2314 = vmatpush1.msra.mxu0 0.0
        %2315 = vmatprep.subr.mxu0 0.0
        %2316 = vmatpush1.msra.mxu0 0.0
        %2317 = vmatprep.subr.mxu0 0.0
        %2318 = vmatpush1.msra.mxu0 0.0
        %2319 = vmatprep.subr.mxu0 0.0
        %2320 = vmatpush1.msra.mxu0 0.0
        %2321 = vmatprep.subr.mxu0 0.0
        %2322 = vmatpush1.msra.mxu0 0.0
        %2323 = vmatprep.subr.mxu0 0.0
        %2324 = vmatpush1.msra.mxu0 0.0
        %2325 = vmatprep.subr.mxu0 0.0
        %2326 = vmatpush1.msra.mxu0 0.0
        %2327 = vmatprep.subr.mxu0 0.0
        %2328 = vmatpush1.msra.mxu0 0.0
        %2329 = vmatprep.subr.mxu0 0.0
        %2330 = vmatpush1.msra.mxu0 0.0
        %2331 = vmatprep.subr.mxu0 0.0
        %2332 = vmatpush1.msra.mxu0 0.0
        %2333 = vmatprep.subr.mxu0 0.0
        %2334 = vmatpush1.msra.mxu0 0.0
        %2335 = vmatprep.subr.mxu0 0.0
        %2336 = vmatpush1.msra.mxu0 0.0
        %2337 = vmatprep.subr.mxu0 0.0
        %2338 = vmatpush1.msra.mxu0 0.0
        %2339 = vmatprep.subr.mxu0 0.0
        %2340 = vmatpush1.msra.mxu0 0.0
        %2341 = vmatprep.subr.mxu0 0.0
        %2342 = vmatpush1.msra.mxu0 0.0
        %2343 = vmatprep.subr.mxu0 0.0
        %2344 = vmatpush1.msra.mxu0 0.0
        %2345 = vmatprep.subr.mxu0 0.0
        %2346 = vmatpush1.msra.mxu0 0.0
        %2347 = vmatprep.subr.mxu0 0.0
        %2348 = vmatpush1.msra.mxu0 0.0
        %2349 = vmatprep.subr.mxu0 0.0
        %2350 = vmatpush1.msra.mxu0 0.0
        %2351 = vmatprep.subr.mxu0 0.0
        %2352 = vmatpush1.msra.mxu0 0.0
        %2353 = vmatprep.subr.mxu0 0.0
        %2354 = vmatpush1.msra.mxu0 0.0
        %2355 = vmatprep.mubr.f32.mxu0 0.0
        %2356 = vmatmul.mubr.f32.gmra.mrb[0].mxu0 %v2289
        %v2357 = vpop.f32.mrb[0].mxu0
        %v2358 = vadd.f32 0.0, %v2357
        %v2359 = vpop.f32.mrb[0].mxu0
        %2360 = vdwg.mxu0
        %v2362 = vsel %vm1497, %v2135, 0
        %2364 = vmatprep.subr.mxu0 0.0
        %2365 = vmatpush1.msra.mxu0 %v2141
        %2366 = vmatprep.subr.mxu0 0.0
        %2367 = vmatpush1.msra.mxu0 0.0
        %2368 = vmatprep.subr.mxu0 0.0
        %2369 = vmatpush1.msra.mxu0 0.0
        %2370 = vmatprep.subr.mxu0 0.0
        %2371 = vmatpush1.msra.mxu0 0.0
        %2372 = vmatprep.subr.mxu0 0.0
        %2373 = vmatpush1.msra.mxu0 0.0
        %2374 = vmatprep.subr.mxu0 0.0
        %2375 = vmatpush1.msra.mxu0 0.0
        %2376 = vmatprep.subr.mxu0 0.0
        %2377 = vmatpush1.msra.mxu0 0.0
        %2378 = vmatprep.subr.mxu0 0.0
        %2379 = vmatpush1.msra.mxu0 0.0
        %2380 = vmatprep.subr.mxu0 0.0
        %2381 = vmatpush1.msra.mxu0 0.0
        %2382 = vmatprep.subr.mxu0 0.0
        %2383 = vmatpush1.msra.mxu0 0.0
        %2384 = vmatprep.subr.mxu0 0.0
        %2385 = vmatpush1.msra.mxu0 0.0
        %2386 = vmatprep.subr.mxu0 0.0
        %2387 = vmatpush1.msra.mxu0 0.0
        %2388 = vmatprep.subr.mxu0 0.0
        %2389 = vmatpush1.msra.mxu0 0.0
        %2390 = vmatprep.subr.mxu0 0.0
        %2391 = vmatpush1.msra.mxu0 0.0
        %2392 = vmatprep.subr.mxu0 0.0
        %2393 = vmatpush1.msra.mxu0 0.0
        %2394 = vmatprep.subr.mxu0 0.0
        %2395 = vmatpush1.msra.mxu0 0.0
        %2396 = vmatprep.subr.mxu0 0.0
        %2397 = vmatpush1.msra.mxu0 0.0
        %2398 = vmatprep.subr.mxu0 0.0
        %2399 = vmatpush1.msra.mxu0 0.0
        %2400 = vmatprep.subr.mxu0 0.0
        %2401 = vmatpush1.msra.mxu0 0.0
        %2402 = vmatprep.subr.mxu0 0.0
        %2403 = vmatpush1.msra.mxu0 0.0
        %2404 = vmatprep.subr.mxu0 0.0
        %2405 = vmatpush1.msra.mxu0 0.0
        %2406 = vmatprep.subr.mxu0 0.0
        %2407 = vmatpush1.msra.mxu0 0.0
        %2408 = vmatprep.subr.mxu0 0.0
        %2409 = vmatpush1.msra.mxu0 0.0
        %2410 = vmatprep.subr.mxu0 0.0
        %2411 = vmatpush1.msra.mxu0 0.0
        %2412 = vmatprep.subr.mxu0 0.0
        %2413 = vmatpush1.msra.mxu0 0.0
        %2414 = vmatprep.subr.mxu0 0.0
        %2415 = vmatpush1.msra.mxu0 0.0
        %2416 = vmatprep.subr.mxu0 0.0
        %2417 = vmatpush1.msra.mxu0 0.0
        %2418 = vmatprep.subr.mxu0 0.0
        %2419 = vmatpush1.msra.mxu0 0.0
        %2420 = vmatprep.subr.mxu0 0.0
        %2421 = vmatpush1.msra.mxu0 0.0
        %2422 = vmatprep.subr.mxu0 0.0
        %2423 = vmatpush1.msra.mxu0 0.0
        %2424 = vmatprep.subr.mxu0 0.0
        %2425 = vmatpush1.msra.mxu0 0.0
        %2426 = vmatprep.subr.mxu0 0.0
        %2427 = vmatpush1.msra.mxu0 0.0
        %2428 = vmatprep.mubr.f32.mxu0 0.0
        %2429 = vmatmul.mubr.f32.gmra.mrb[0].mxu0 %v2362
        %v2430 = vpop.f32.mrb[0].mxu0
        %v2431 = vadd.f32 0.0, %v2430
        %v2432 = vpop.f32.mrb[0].mxu0
        %2433 = vdwg.mxu0
        %v2434 = vsel %vm493, %v2212, 0.0
        %v2435 = vsel %vm493, %v2285, 0.0
        %v2436 = vadd.f32 %v2434, %v2435
        %v2437 = vsel %vm493, %v2358, 0.0
        %v2438 = vadd.f32 %v2436, %v2437
        %v2439 = vsel %vm493, %v2431, 0.0
        %v2440 = vadd.f32 %v2438, %v2439
        %v2441 = vld [vmem:[%s6] sm:$0x1]
        %v2443 = vlaneseq
        %v2444 = vshrl.u32 %v2443, 7
        %v2445 = vsub.s32 0, %v2444
        %v2446 = vrot.slane %v2441, %v2445
        %v2448 = vadd.f32 %v2440, %v2446
        %v2449 = vadd.f32 %v2448, %v521
        %v2450 = vld [vmem:[%s7] sm:$0x1]
        %v2451 = vld [vmem:[%s8] sm:$0x1]
        %v2452 = vsel %vm493, %v2449, 0.0
        %2453 = vadd.xlane.f32.xlu0 %v2452
        %v2454 = vpop.xlane.xlu0 %2453
        %v2455 = vmul.f32 %v2454, %v497
        %v2456 = vsub.f32 %v2449, %v2455
        %v2457 = vmul.f32 %v2456, %v2456
        %v2458 = vsel %vm493, %v2457, 0.0
        %2459 = vadd.xlane.f32.xlu0 %v2458
        %v2460 = vpop.xlane.xlu0 %2459
        %v2461 = vmul.f32 %v2460, %v497
        %v2462 = vadd.f32 %v2461, 1e-05
        %v2463 = vrsqrt.pop %v2462
        %v2464 = vmul.f32 %v2456, %v2463
        %v2466 = vlaneseq
        %v2467 = vshrl.u32 %v2466, 7
        %v2468 = vsub.s32 0, %v2467
        %v2469 = vrot.slane %v2450, %v2468
        %v2471 = vmul.f32 %v2464, %v2469
        %v2473 = vlaneseq
        %v2474 = vshrl.u32 %v2473, 7
        %v2475 = vsub.s32 0, %v2474
        %v2476 = vrot.slane %v2451, %v2475
        %v2478 = vadd.f32 %v2471, %v2476
        %v2479 = vld [vmem:[%s9] sm:$0xff]
        %v2480 = vld [vmem:[%s9 + $0x8] sm:$0xff]
        %v2481 = vld [vmem:[%s9 + $0x10] sm:$0xff]
        %v2482 = vld [vmem:[%s9 + $0x18] sm:$0xff]
        %v2483 = vld [vmem:[%s10] sm:$0x1]
        %v2485 = vlaneseq
        %v2486 = vshrl.u32 %v2485, 7
        %v2487 = vsub.s32 0, %v2486
        %v2488 = vrot.slane %v2483, %v2487
        %v2491 = vsel %vm493, %v2478, 0
        %2493 = vmatprep.subr.mxu0 0.0
        %2494 = vmatpush1.msra.mxu0 %v2479
        %2495 = vmatprep.subr.mxu0 0.0
        %2496 = vmatpush1.msra.mxu0 %v2480
        %2497 = vmatprep.subr.mxu0 0.0
        %2498 = vmatpush1.msra.mxu0 %v2481
        %2499 = vmatprep.subr.mxu0 0.0
        %2500 = vmatpush1.msra.mxu0 %v2482
        %2501 = vmatprep.subr.mxu0 0.0
        %2502 = vmatpush1.msra.mxu0 0.0
        %2503 = vmatprep.subr.mxu0 0.0
        %2504 = vmatpush1.msra.mxu0 0.0
        %2505 = vmatprep.subr.mxu0 0.0
        %2506 = vmatpush1.msra.mxu0 0.0
        %2507 = vmatprep.subr.mxu0 0.0
        %2508 = vmatpush1.msra.mxu0 0.0
        %2509 = vmatprep.subr.mxu0 0.0
        %2510 = vmatpush1.msra.mxu0 0.0
        %2511 = vmatprep.subr.mxu0 0.0
        %2512 = vmatpush1.msra.mxu0 0.0
        %2513 = vmatprep.subr.mxu0 0.0
        %2514 = vmatpush1.msra.mxu0 0.0
        %2515 = vmatprep.subr.mxu0 0.0
        %2516 = vmatpush1.msra.mxu0 0.0
        %2517 = vmatprep.subr.mxu0 0.0
        %2518 = vmatpush1.msra.mxu0 0.0
        %2519 = vmatprep.subr.mxu0 0.0
        %2520 = vmatpush1.msra.mxu0 0.0
        %2521 = vmatprep.subr.mxu0 0.0
        %2522 = vmatpush1.msra.mxu0 0.0
        %2523 = vmatprep.subr.mxu0 0.0
        %2524 = vmatpush1.msra.mxu0 0.0
        %2525 = vmatprep.subr.mxu0 0.0
        %2526 = vmatpush1.msra.mxu0 0.0
        %2527 = vmatprep.subr.mxu0 0.0
        %2528 = vmatpush1.msra.mxu0 0.0
        %2529 = vmatprep.subr.mxu0 0.0
        %2530 = vmatpush1.msra.mxu0 0.0
        %2531 = vmatprep.subr.mxu0 0.0
        %2532 = vmatpush1.msra.mxu0 0.0
        %2533 = vmatprep.subr.mxu0 0.0
        %2534 = vmatpush1.msra.mxu0 0.0
        %2535 = vmatprep.subr.mxu0 0.0
        %2536 = vmatpush1.msra.mxu0 0.0
        %2537 = vmatprep.subr.mxu0 0.0
        %2538 = vmatpush1.msra.mxu0 0.0
        %2539 = vmatprep.subr.mxu0 0.0
        %2540 = vmatpush1.msra.mxu0 0.0
        %2541 = vmatprep.subr.mxu0 0.0
        %2542 = vmatpush1.msra.mxu0 0.0
        %2543 = vmatprep.subr.mxu0 0.0
        %2544 = vmatpush1.msra.mxu0 0.0
        %2545 = vmatprep.subr.mxu0 0.0
        %2546 = vmatpush1.msra.mxu0 0.0
        %2547 = vmatprep.subr.mxu0 0.0
        %2548 = vmatpush1.msra.mxu0 0.0
        %2549 = vmatprep.subr.mxu0 0.0
        %2550 = vmatpush1.msra.mxu0 0.0
        %2551 = vmatprep.subr.mxu0 0.0
        %2552 = vmatpush1.msra.mxu0 0.0
        %2553 = vmatprep.subr.mxu0 0.0
        %2554 = vmatpush1.msra.mxu0 0.0
        %2555 = vmatprep.subr.mxu0 0.0
        %2556 = vmatpush1.msra.mxu0 0.0
        %2557 = vmatprep.mubr.f32.mxu0 0.0
        %2558 = vmatmul.mubr.f32.gmra.mrb[0].mxu0 %v2491
        %v2559 = vpop.f32.mrb[0].mxu0
        %v2560 = vadd.f32 %v2488, %v2559
        %v2561 = vpop.f32.mrb[0].mxu0
        %2562 = vdwg.mxu0
        %v2563 = vmax.f32 %v2560, 0.0
        %v2564 = vld [vmem:[%s11] sm:$0xff]
        %v2565 = vld [vmem:[%s11 + $0x8] sm:$0xff]
        %v2566 = vld [vmem:[%s11 + $0x10] sm:$0xff]
        %v2567 = vld [vmem:[%s11 + $0x18] sm:$0xff]
        %v2568 = vld [vmem:[%s11 + $0x20] sm:$0xff]
        %v2569 = vld [vmem:[%s11 + $0x28] sm:$0xff]
        %v2570 = vld [vmem:[%s11 + $0x30] sm:$0xff]
        %v2571 = vld [vmem:[%s11 + $0x38] sm:$0xff]
        %v2572 = vld [vmem:[%s12] sm:$0x1]
        %v2574 = vlaneseq
        %v2575 = vshrl.u32 %v2574, 7
        %v2576 = vsub.s32 0, %v2575
        %v2577 = vrot.slane %v2572, %v2576
        %vm2579 = vcmask 523264
        %v2581 = vsel %vm2579, %v2563, 0
        %2583 = vmatprep.subr.mxu0 0.0
        %2584 = vmatpush1.msra.mxu0 %v2564
        %2585 = vmatprep.subr.mxu0 0.0
        %2586 = vmatpush1.msra.mxu0 %v2565
        %2587 = vmatprep.subr.mxu0 0.0
        %2588 = vmatpush1.msra.mxu0 %v2566
        %2589 = vmatprep.subr.mxu0 0.0
        %2590 = vmatpush1.msra.mxu0 %v2567
        %2591 = vmatprep.subr.mxu0 0.0
        %2592 = vmatpush1.msra.mxu0 %v2568
        %2593 = vmatprep.subr.mxu0 0.0
        %2594 = vmatpush1.msra.mxu0 %v2569
        %2595 = vmatprep.subr.mxu0 0.0
        %2596 = vmatpush1.msra.mxu0 %v2570
        %2597 = vmatprep.subr.mxu0 0.0
        %2598 = vmatpush1.msra.mxu0 %v2571
        %2599 = vmatprep.subr.mxu0 0.0
        %2600 = vmatpush1.msra.mxu0 0.0
        %2601 = vmatprep.subr.mxu0 0.0
        %2602 = vmatpush1.msra.mxu0 0.0
        %2603 = vmatprep.subr.mxu0 0.0
        %2604 = vmatpush1.msra.mxu0 0.0
        %2605 = vmatprep.subr.mxu0 0.0
        %2606 = vmatpush1.msra.mxu0 0.0
        %2607 = vmatprep.subr.mxu0 0.0
        %2608 = vmatpush1.msra.mxu0 0.0
        %2609 = vmatprep.subr.mxu0 0.0
        %2610 = vmatpush1.msra.mxu0 0.0
        %2611 = vmatprep.subr.mxu0 0.0
        %2612 = vmatpush1.msra.mxu0 0.0
        %2613 = vmatprep.subr.mxu0 0.0
        %2614 = vmatpush1.msra.mxu0 0.0
        %2615 = vmatprep.subr.mxu0 0.0
        %2616 = vmatpush1.msra.mxu0 0.0
        %2617 = vmatprep.subr.mxu0 0.0
        %2618 = vmatpush1.msra.mxu0 0.0
        %2619 = vmatprep.subr.mxu0 0.0
        %2620 = vmatpush1.msra.mxu0 0.0
        %2621 = vmatprep.subr.mxu0 0.0
        %2622 = vmatpush1.msra.mxu0 0.0
        %2623 = vmatprep.subr.mxu0 0.0
        %2624 = vmatpush1.msra.mxu0 0.0
        %2625 = vmatprep.subr.mxu0 0.0
        %2626 = vmatpush1.msra.mxu0 0.0
        %2627 = vmatprep.subr.mxu0 0.0
        %2628 = vmatpush1.msra.mxu0 0.0
        %2629 = vmatprep.subr.mxu0 0.0
        %2630 = vmatpush1.msra.mxu0 0.0
        %2631 = vmatprep.subr.mxu0 0.0
        %2632 = vmatpush1.msra.mxu0 0.0
        %2633 = vmatprep.subr.mxu0 0.0
        %2634 = vmatpush1.msra.mxu0 0.0
        %2635 = vmatprep.subr.mxu0 0.0
        %2636 = vmatpush1.msra.mxu0 0.0
        %2637 = vmatprep.subr.mxu0 0.0
        %2638 = vmatpush1.msra.mxu0 0.0
        %2639 = vmatprep.subr.mxu0 0.0
        %2640 = vmatpush1.msra.mxu0 0.0
        %2641 = vmatprep.subr.mxu0 0.0
        %2642 = vmatpush1.msra.mxu0 0.0
        %2643 = vmatprep.subr.mxu0 0.0
        %2644 = vmatpush1.msra.mxu0 0.0
        %2645 = vmatprep.subr.mxu0 0.0
        %2646 = vmatpush1.msra.mxu0 0.0
        %2647 = vmatprep.mubr.f32.mxu0 0.0
        %2648 = vmatmul.mubr.f32.gmra.mrb[0].mxu0 %v2581
        %v2649 = vpop.f32.mrb[0].mxu0
        %v2650 = vadd.f32 %v2577, %v2649
        %v2651 = vpop.f32.mrb[0].mxu0
        %2652 = vdwg.mxu0
        %v2653 = vadd.f32 %v2650, %v2478
        %v2654 = vld [vmem:[%s13] sm:$0x1]
        %v2655 = vld [vmem:[%s14] sm:$0x1]
        %v2656 = vsel %vm493, %v2653, 0.0
        %2657 = vadd.xlane.f32.xlu0 %v2656
        %v2658 = vpop.xlane.xlu0 %2657
        %v2659 = vmul.f32 %v2658, %v497
        %v2660 = vsub.f32 %v2653, %v2659
        %v2661 = vmul.f32 %v2660, %v2660
        %v2662 = vsel %vm493, %v2661, 0.0
        %2663 = vadd.xlane.f32.xlu0 %v2662
        %v2664 = vpop.xlane.xlu0 %2663
        %v2665 = vmul.f32 %v2664, %v497
        %v2666 = vadd.f32 %v2665, 1e-05
        %v2667 = vrsqrt.pop %v2666
        %v2668 = vmul.f32 %v2660, %v2667
        %v2670 = vlaneseq
        %v2671 = vshrl.u32 %v2670, 7
        %v2672 = vsub.s32 0, %v2671
        %v2673 = vrot.slane %v2654, %v2672
        %v2675 = vmul.f32 %v2668, %v2673
        %v2677 = vlaneseq
        %v2678 = vshrl.u32 %v2677, 7
        %v2679 = vsub.s32 0, %v2678
        %v2680 = vrot.slane %v2655, %v2679
        %v2682 = vadd.f32 %v2675, %v2680
        %s2683 = scalar_lea.vmem %s3, 384
        %v2684 = vld [vmem:[%s2683] sm:$0xff]
        %v2685 = vld [vmem:[%s2683 + $0x8] sm:$0xff]
        %v2686 = vld [vmem:[%s2683 + $0x10] sm:$0xff]
        %v2687 = vld [vmem:[%s2683 + $0x18] sm:$0xff]
        %v2688 = vld [vmem:[%s2683 + $0x20] sm:$0xff]
        %v2689 = vld [vmem:[%s2683 + $0x28] sm:$0xff]
        %v2690 = vld [vmem:[%s2683 + $0x30] sm:$0xff]
        %v2691 = vld [vmem:[%s2683 + $0x38] sm:$0xff]
        %v2692 = vld [vmem:[%s2683 + $0x40] sm:$0xff]
        %v2693 = vld [vmem:[%s2683 + $0x48] sm:$0xff]
        %v2694 = vld [vmem:[%s2683 + $0x50] sm:$0xff]
        %v2695 = vld [vmem:[%s2683 + $0x58] sm:$0xff]
        %v2696 = vld [vmem:[%s2683 + $0x60] sm:$0xff]
        %v2697 = vld [vmem:[%s2683 + $0x68] sm:$0xff]
        %v2698 = vld [vmem:[%s2683 + $0x70] sm:$0xff]
        %v2699 = vld [vmem:[%s2683 + $0x78] sm:$0xff]
        %v2700 = vld [vmem:[%s2683 + $0x80] sm:$0xff]
        %v2701 = vld [vmem:[%s2683 + $0x88] sm:$0xff]
        %v2702 = vld [vmem:[%s2683 + $0x90] sm:$0xff]
        %v2703 = vld [vmem:[%s2683 + $0x98] sm:$0xff]
        %v2704 = vld [vmem:[%s2683 + $0xa0] sm:$0xff]
        %v2705 = vld [vmem:[%s2683 + $0xa8] sm:$0xff]
        %v2706 = vld [vmem:[%s2683 + $0xb0] sm:$0xff]
        %v2707 = vld [vmem:[%s2683 + $0xb8] sm:$0xff]
        %v2708 = vld [vmem:[%s2683 + $0xc0] sm:$0xff]
        %v2709 = vld [vmem:[%s2683 + $0xc8] sm:$0xff]
        %v2710 = vld [vmem:[%s2683 + $0xd0] sm:$0xff]
        %v2711 = vld [vmem:[%s2683 + $0xd8] sm:$0xff]
        %v2712 = vld [vmem:[%s2683 + $0xe0] sm:$0xff]
        %v2713 = vld [vmem:[%s2683 + $0xe8] sm:$0xff]
        %v2714 = vld [vmem:[%s2683 + $0xf0] sm:$0xff]
        %v2715 = vld [vmem:[%s2683 + $0xf8] sm:$0xff]
        %v2716 = vld [vmem:[%s2683 + $0x100] sm:$0xff]
        %v2717 = vld [vmem:[%s2683 + $0x108] sm:$0xff]
        %v2718 = vld [vmem:[%s2683 + $0x110] sm:$0xff]
        %v2719 = vld [vmem:[%s2683 + $0x118] sm:$0xff]
        %v2720 = vld [vmem:[%s2683 + $0x120] sm:$0xff]
        %v2721 = vld [vmem:[%s2683 + $0x128] sm:$0xff]
        %v2722 = vld [vmem:[%s2683 + $0x130] sm:$0xff]
        %v2723 = vld [vmem:[%s2683 + $0x138] sm:$0xff]
        %v2724 = vld [vmem:[%s2683 + $0x140] sm:$0xff]
        %v2725 = vld [vmem:[%s2683 + $0x148] sm:$0xff]
        %v2726 = vld [vmem:[%s2683 + $0x150] sm:$0xff]
        %v2727 = vld [vmem:[%s2683 + $0x158] sm:$0xff]
        %v2728 = vld [vmem:[%s2683 + $0x160] sm:$0xff]
        %v2729 = vld [vmem:[%s2683 + $0x168] sm:$0xff]
        %v2730 = vld [vmem:[%s2683 + $0x170] sm:$0xff]
        %v2731 = vld [vmem:[%s2683 + $0x178] sm:$0xff]
        %s2732 = scalar_lea.vmem %s4, 12
        %v2733 = vld [vmem:[%s2732] sm:$0x1]
        %v2734 = vld [vmem:[%s2732 + $0x1] sm:$0x1]
        %v2735 = vld [vmem:[%s2732 + $0x2] sm:$0x1]
        %v2736 = vld [vmem:[%s2732 + $0x3] sm:$0x1]
        %v2737 = vld [vmem:[%s2732 + $0x4] sm:$0x1]
        %v2738 = vld [vmem:[%s2732 + $0x5] sm:$0x1]
        %v2739 = vld [vmem:[%s2732 + $0x6] sm:$0x1]
        %v2740 = vld [vmem:[%s2732 + $0x7] sm:$0x1]
        %v2741 = vld [vmem:[%s2732 + $0x8] sm:$0x1]
        %v2742 = vld [vmem:[%s2732 + $0x9] sm:$0x1]
        %v2743 = vld [vmem:[%s2732 + $0xa] sm:$0x1]
        %v2744 = vld [vmem:[%s2732 + $0xb] sm:$0x1]
        %v2757 = vlaneseq
        %v2758 = vshrl.u32 %v2757, 7
        %v2759 = vsub.s32 0, %v2758
        %v2760 = vrot.slane %v2733, %v2759
        %v2761 = vlaneseq
        %v2762 = vshrl.u32 %v2761, 7
        %v2763 = vsub.s32 0, %v2762
        %v2764 = vrot.slane %v2734, %v2763
        %v2765 = vlaneseq
        %v2766 = vshrl.u32 %v2765, 7
        %v2767 = vsub.s32 0, %v2766
        %v2768 = vrot.slane %v2735, %v2767
        %v2769 = vlaneseq
        %v2770 = vshrl.u32 %v2769, 7
        %v2771 = vsub.s32 0, %v2770
        %v2772 = vrot.slane %v2736, %v2771
        %v2773 = vlaneseq
        %v2774 = vshrl.u32 %v2773, 7
        %v2775 = vsub.s32 0, %v2774
        %v2776 = vrot.slane %v2737, %v2775
        %v2777 = vlaneseq
        %v2778 = vshrl.u32 %v2777, 7
        %v2779 = vsub.s32 0, %v2778
        %v2780 = vrot.slane %v2738, %v2779
        %v2781 = vlaneseq
        %v2782 = vshrl.u32 %v2781, 7
        %v2783 = vsub.s32 0, %v2782
        %v2784 = vrot.slane %v2739, %v2783
        %v2785 = vlaneseq
        %v2786 = vshrl.u32 %v2785, 7
        %v2787 = vsub.s32 0, %v2786
        %v2788 = vrot.slane %v2740, %v2787
        %v2789 = vlaneseq
        %v2790 = vshrl.u32 %v2789, 7
        %v2791 = vsub.s32 0, %v2790
        %v2792 = vrot.slane %v2741, %v2791
        %v2793 = vlaneseq
        %v2794 = vshrl.u32 %v2793, 7
        %v2795 = vsub.s32 0, %v2794
        %v2796 = vrot.slane %v2742, %v2795
        %v2797 = vlaneseq
        %v2798 = vshrl.u32 %v2797, 7
        %v2799 = vsub.s32 0, %v2798
        %v2800 = vrot.slane %v2743, %v2799
        %v2801 = vlaneseq
        %v2802 = vshrl.u32 %v2801, 7
        %v2803 = vsub.s32 0, %v2802
        %v2804 = vrot.slane %v2744, %v2803
        %v2818 = vsel %vm493, %v2682, 0
        %2820 = vmatprep.subr.mxu0 0.0
        %2821 = vmatpush1.msra.mxu0 %v2684
        %2822 = vmatprep.subr.mxu0 0.0
        %2823 = vmatpush1.msra.mxu0 %v2685
        %2824 = vmatprep.subr.mxu0 0.0
        %2825 = vmatpush1.msra.mxu0 %v2686
        %2826 = vmatprep.subr.mxu0 0.0
        %2827 = vmatpush1.msra.mxu0 %v2687
        %2828 = vmatprep.subr.mxu0 0.0
        %2829 = vmatpush1.msra.mxu0 0.0
        %2830 = vmatprep.subr.mxu0 0.0
        %2831 = vmatpush1.msra.mxu0 0.0
        %2832 = vmatprep.subr.mxu0 0.0
        %2833 = vmatpush1.msra.mxu0 0.0
        %2834 = vmatprep.subr.mxu0 0.0
        %2835 = vmatpush1.msra.mxu0 0.0
        %2836 = vmatprep.subr.mxu0 0.0
        %2837 = vmatpush1.msra.mxu0 0.0
        %2838 = vmatprep.subr.mxu0 0.0
        %2839 = vmatpush1.msra.mxu0 0.0
        %2840 = vmatprep.subr.mxu0 0.0
        %2841 = vmatpush1.msra.mxu0 0.0
        %2842 = vmatprep.subr.mxu0 0.0
        %2843 = vmatpush1.msra.mxu0 0.0
        %2844 = vmatprep.subr.mxu0 0.0
        %2845 = vmatpush1.msra.mxu0 0.0
        %2846 = vmatprep.subr.mxu0 0.0
        %2847 = vmatpush1.msra.mxu0 0.0
        %2848 = vmatprep.subr.mxu0 0.0
        %2849 = vmatpush1.msra.mxu0 0.0
        %2850 = vmatprep.subr.mxu0 0.0
        %2851 = vmatpush1.msra.mxu0 0.0
        %2852 = vmatprep.subr.mxu0 0.0
        %2853 = vmatpush1.msra.mxu0 0.0
        %2854 = vmatprep.subr.mxu0 0.0
        %2855 = vmatpush1.msra.mxu0 0.0
        %2856 = vmatprep.subr.mxu0 0.0
        %2857 = vmatpush1.msra.mxu0 0.0
        %2858 = vmatprep.subr.mxu0 0.0
        %2859 = vmatpush1.msra.mxu0 0.0
        %2860 = vmatprep.subr.mxu0 0.0
        %2861 = vmatpush1.msra.mxu0 0.0
        %2862 = vmatprep.subr.mxu0 0.0
        %2863 = vmatpush1.msra.mxu0 0.0
        %2864 = vmatprep.subr.mxu0 0.0
        %2865 = vmatpush1.msra.mxu0 0.0
        %2866 = vmatprep.subr.mxu0 0.0
        %2867 = vmatpush1.msra.mxu0 0.0
        %2868 = vmatprep.subr.mxu0 0.0
        %2869 = vmatpush1.msra.mxu0 0.0
        %2870 = vmatprep.subr.mxu0 0.0
        %2871 = vmatpush1.msra.mxu0 0.0
        %2872 = vmatprep.subr.mxu0 0.0
        %2873 = vmatpush1.msra.mxu0 0.0
        %2874 = vmatprep.subr.mxu0 0.0
        %2875 = vmatpush1.msra.mxu0 0.0
        %2876 = vmatprep.subr.mxu0 0.0
        %2877 = vmatpush1.msra.mxu0 0.0
        %2878 = vmatprep.subr.mxu0 0.0
        %2879 = vmatpush1.msra.mxu0 0.0
        %2880 = vmatprep.subr.mxu0 0.0
        %2881 = vmatpush1.msra.mxu0 0.0
        %2882 = vmatprep.subr.mxu0 0.0
        %2883 = vmatpush1.msra.mxu0 0.0
        %2884 = vmatprep.mubr.f32.mxu0 0.0
        %2885 = vmatmul.mubr.f32.gmra.mrb[0].mxu0 %v2818
        %v2886 = vpop.f32.mrb[0].mxu0
        %v2887 = vadd.f32 %v2760, %v2886
        %v2888 = vpop.f32.mrb[0].mxu0
        %2889 = vdwg.mxu0
        %2890 = vmatprep.subr.mxu0 0.0
        %2891 = vmatpush1.msra.mxu0 %v2688
        %2892 = vmatprep.subr.mxu0 0.0
        %2893 = vmatpush1.msra.mxu0 %v2689
        %2894 = vmatprep.subr.mxu0 0.0
        %2895 = vmatpush1.msra.mxu0 %v2690
        %2896 = vmatprep.subr.mxu0 0.0
        %2897 = vmatpush1.msra.mxu0 %v2691
        %2898 = vmatprep.subr.mxu0 0.0
        %2899 = vmatpush1.msra.mxu0 0.0
        %2900 = vmatprep.subr.mxu0 0.0
        %2901 = vmatpush1.msra.mxu0 0.0
        %2902 = vmatprep.subr.mxu0 0.0
        %2903 = vmatpush1.msra.mxu0 0.0
        %2904 = vmatprep.subr.mxu0 0.0
        %2905 = vmatpush1.msra.mxu0 0.0
        %2906 = vmatprep.subr.mxu0 0.0
        %2907 = vmatpush1.msra.mxu0 0.0
        %2908 = vmatprep.subr.mxu0 0.0
        %2909 = vmatpush1.msra.mxu0 0.0
        %2910 = vmatprep.subr.mxu0 0.0
        %2911 = vmatpush1.msra.mxu0 0.0
        %2912 = vmatprep.subr.mxu0 0.0
        %2913 = vmatpush1.msra.mxu0 0.0
        %2914 = vmatprep.subr.mxu0 0.0
        %2915 = vmatpush1.msra.mxu0 0.0
        %2916 = vmatprep.subr.mxu0 0.0
        %2917 = vmatpush1.msra.mxu0 0.0
        %2918 = vmatprep.subr.mxu0 0.0
        %2919 = vmatpush1.msra.mxu0 0.0
        %2920 = vmatprep.subr.mxu0 0.0
        %2921 = vmatpush1.msra.mxu0 0.0
        %2922 = vmatprep.subr.mxu0 0.0
        %2923 = vmatpush1.msra.mxu0 0.0
        %2924 = vmatprep.subr.mxu0 0.0
        %2925 = vmatpush1.msra.mxu0 0.0
        %2926 = vmatprep.subr.mxu0 0.0
        %2927 = vmatpush1.msra.mxu0 0.0
        %2928 = vmatprep.subr.mxu0 0.0
        %2929 = vmatpush1.msra.mxu0 0.0
        %2930 = vmatprep.subr.mxu0 0.0
        %2931 = vmatpush1.msra.mxu0 0.0
        %2932 = vmatprep.subr.mxu0 0.0
        %2933 = vmatpush1.msra.mxu0 0.0
        %2934 = vmatprep.subr.mxu0 0.0
        %2935 = vmatpush1.msra.mxu0 0.0
        %2936 = vmatprep.subr.mxu0 0.0
        %2937 = vmatpush1.msra.mxu0 0.0
        %2938 = vmatprep.subr.mxu0 0.0
        %2939 = vmatpush1.msra.mxu0 0.0
        %2940 = vmatprep.subr.mxu0 0.0
        %2941 = vmatpush1.msra.mxu0 0.0
        %2942 = vmatprep.subr.mxu0 0.0
        %2943 = vmatpush1.msra.mxu0 0.0
        %2944 = vmatprep.subr.mxu0 0.0
        %2945 = vmatpush1.msra.mxu0 0.0
        %2946 = vmatprep.subr.mxu0 0.0
        %2947 = vmatpush1.msra.mxu0 0.0
        %2948 = vmatprep.subr.mxu0 0.0
        %2949 = vmatpush1.msra.mxu0 0.0
        %2950 = vmatprep.subr.mxu0 0.0
        %2951 = vmatpush1.msra.mxu0 0.0
        %2952 = vmatprep.subr.mxu0 0.0
        %2953 = vmatpush1.msra.mxu0 0.0
        %2954 = vmatprep.mubr.f32.mxu0 0.0
        %2955 = vmatmul.mubr.f32.gmra.mrb[0].mxu0 %v2818
        %v2956 = vpop.f32.mrb[0].mxu0
        %v2957 = vadd.f32 %v2764, %v2956
        %v2958 = vpop.f32.mrb[0].mxu0
        %2959 = vdwg.mxu0
        %2960 = vmatprep.subr.mxu0 0.0
        %2961 = vmatpush1.msra.mxu0 %v2692
        %2962 = vmatprep.subr.mxu0 0.0
        %2963 = vmatpush1.msra.mxu0 %v2693
        %2964 = vmatprep.subr.mxu0 0.0
        %2965 = vmatpush1.msra.mxu0 %v2694
        %2966 = vmatprep.subr.mxu0 0.0
        %2967 = vmatpush1.msra.mxu0 %v2695
        %2968 = vmatprep.subr.mxu0 0.0
        %2969 = vmatpush1.msra.mxu0 0.0
        %2970 = vmatprep.subr.mxu0 0.0
        %2971 = vmatpush1.msra.mxu0 0.0
        %2972 = vmatprep.subr.mxu0 0.0
        %2973 = vmatpush1.msra.mxu0 0.0
        %2974 = vmatprep.subr.mxu0 0.0
        %2975 = vmatpush1.msra.mxu0 0.0
        %2976 = vmatprep.subr.mxu0 0.0
        %2977 = vmatpush1.msra.mxu0 0.0
        %2978 = vmatprep.subr.mxu0 0.0
        %2979 = vmatpush1.msra.mxu0 0.0
        %2980 = vmatprep.subr.mxu0 0.0
        %2981 = vmatpush1.msra.mxu0 0.0
        %2982 = vmatprep.subr.mxu0 0.0
        %2983 = vmatpush1.msra.mxu0 0.0
        %2984 = vmatprep.subr.mxu0 0.0
        %2985 = vmatpush1.msra.mxu0 0.0
        %2986 = vmatprep.subr.mxu0 0.0
        %2987 = vmatpush1.msra.mxu0 0.0
        %2988 = vmatprep.subr.mxu0 0.0
        %2989 = vmatpush1.msra.mxu0 0.0
        %2990 = vmatprep.subr.mxu0 0.0
        %2991 = vmatpush1.msra.mxu0 0.0
        %2992 = vmatprep.subr.mxu0 0.0
        %2993 = vmatpush1.msra.mxu0 0.0
        %2994 = vmatprep.subr.mxu0 0.0
        %2995 = vmatpush1.msra.mxu0 0.0
        %2996 = vmatprep.subr.mxu0 0.0
        %2997 = vmatpush1.msra.mxu0 0.0
        %2998 = vmatprep.subr.mxu0 0.0
        %2999 = vmatpush1.msra.mxu0 0.0
        %3000 = vmatprep.subr.mxu0 0.0
        %3001 = vmatpush1.msra.mxu0 0.0
        %3002 = vmatprep.subr.mxu0 0.0
        %3003 = vmatpush1.msra.mxu0 0.0
        %3004 = vmatprep.subr.mxu0 0.0
        %3005 = vmatpush1.msra.mxu0 0.0
        %3006 = vmatprep.subr.mxu0 0.0
        %3007 = vmatpush1.msra.mxu0 0.0
        %3008 = vmatprep.subr.mxu0 0.0
        %3009 = vmatpush1.msra.mxu0 0.0
        %3010 = vmatprep.subr.mxu0 0.0
        %3011 = vmatpush1.msra.mxu0 0.0
        %3012 = vmatprep.subr.mxu0 0.0
        %3013 = vmatpush1.msra.mxu0 0.0
        %3014 = vmatprep.subr.mxu0 0.0
        %3015 = vmatpush1.msra.mxu0 0.0
        %3016 = vmatprep.subr.mxu0 0.0
        %3017 = vmatpush1.msra.mxu0 0.0
        %3018 = vmatprep.subr.mxu0 0.0
        %3019 = vmatpush1.msra.mxu0 0.0
        %3020 = vmatprep.subr.mxu0 0.0
        %3021 = vmatpush1.msra.mxu0 0.0
        %3022 = vmatprep.subr.mxu0 0.0
        %3023 = vmatpush1.msra.mxu0 0.0
        %3024 = vmatprep.mubr.f32.mxu0 0.0
        %3025 = vmatmul.mubr.f32.gmra.mrb[0].mxu0 %v2818
        %v3026 = vpop.f32.mrb[0].mxu0
        %v3027 = vadd.f32 %v2768, %v3026
        %v3028 = vpop.f32.mrb[0].mxu0
        %3029 = vdwg.mxu0
        %3030 = vmatprep.subr.mxu0 0.0
        %3031 = vmatpush1.msra.mxu0 %v2696
        %3032 = vmatprep.subr.mxu0 0.0
        %3033 = vmatpush1.msra.mxu0 %v2697
        %3034 = vmatprep.subr.mxu0 0.0
        %3035 = vmatpush1.msra.mxu0 %v2698
        %3036 = vmatprep.subr.mxu0 0.0
        %3037 = vmatpush1.msra.mxu0 %v2699
        %3038 = vmatprep.subr.mxu0 0.0
        %3039 = vmatpush1.msra.mxu0 0.0
        %3040 = vmatprep.subr.mxu0 0.0
        %3041 = vmatpush1.msra.mxu0 0.0
        %3042 = vmatprep.subr.mxu0 0.0
        %3043 = vmatpush1.msra.mxu0 0.0
        %3044 = vmatprep.subr.mxu0 0.0
        %3045 = vmatpush1.msra.mxu0 0.0
        %3046 = vmatprep.subr.mxu0 0.0
        %3047 = vmatpush1.msra.mxu0 0.0
        %3048 = vmatprep.subr.mxu0 0.0
        %3049 = vmatpush1.msra.mxu0 0.0
        %3050 = vmatprep.subr.mxu0 0.0
        %3051 = vmatpush1.msra.mxu0 0.0
        %3052 = vmatprep.subr.mxu0 0.0
        %3053 = vmatpush1.msra.mxu0 0.0
        %3054 = vmatprep.subr.mxu0 0.0
        %3055 = vmatpush1.msra.mxu0 0.0
        %3056 = vmatprep.subr.mxu0 0.0
        %3057 = vmatpush1.msra.mxu0 0.0
        %3058 = vmatprep.subr.mxu0 0.0
        %3059 = vmatpush1.msra.mxu0 0.0
        %3060 = vmatprep.subr.mxu0 0.0
        %3061 = vmatpush1.msra.mxu0 0.0
        %3062 = vmatprep.subr.mxu0 0.0
        %3063 = vmatpush1.msra.mxu0 0.0
        %3064 = vmatprep.subr.mxu0 0.0
        %3065 = vmatpush1.msra.mxu0 0.0
        %3066 = vmatprep.subr.mxu0 0.0
        %3067 = vmatpush1.msra.mxu0 0.0
        %3068 = vmatprep.subr.mxu0 0.0
        %3069 = vmatpush1.msra.mxu0 0.0
        %3070 = vmatprep.subr.mxu0 0.0
        %3071 = vmatpush1.msra.mxu0 0.0
        %3072 = vmatprep.subr.mxu0 0.0
        %3073 = vmatpush1.msra.mxu0 0.0
        %3074 = vmatprep.subr.mxu0 0.0
        %3075 = vmatpush1.msra.mxu0 0.0
        %3076 = vmatprep.subr.mxu0 0.0
        %3077 = vmatpush1.msra.mxu0 0.0
        %3078 = vmatprep.subr.mxu0 0.0
        %3079 = vmatpush1.msra.mxu0 0.0
        %3080 = vmatprep.subr.mxu0 0.0
        %3081 = vmatpush1.msra.mxu0 0.0
        %3082 = vmatprep.subr.mxu0 0.0
        %3083 = vmatpush1.msra.mxu0 0.0
        %3084 = vmatprep.subr.mxu0 0.0
        %3085 = vmatpush1.msra.mxu0 0.0
        %3086 = vmatprep.subr.mxu0 0.0
        %3087 = vmatpush1.msra.mxu0 0.0
        %3088 = vmatprep.subr.mxu0 0.0
        %3089 = vmatpush1.msra.mxu0 0.0
        %3090 = vmatprep.subr.mxu0 0.0
        %3091 = vmatpush1.msra.mxu0 0.0
        %3092 = vmatprep.subr.mxu0 0.0
        %3093 = vmatpush1.msra.mxu0 0.0
        %3094 = vmatprep.mubr.f32.mxu0 0.0
        %3095 = vmatmul.mubr.f32.gmra.mrb[0].mxu0 %v2818
        %v3096 = vpop.f32.mrb[0].mxu0
        %v3097 = vadd.f32 %v2772, %v3096
        %v3098 = vpop.f32.mrb[0].mxu0
        %3099 = vdwg.mxu0
        %3100 = vmatprep.subr.mxu0 0.0
        %3101 = vmatpush1.msra.mxu0 %v2700
        %3102 = vmatprep.subr.mxu0 0.0
        %3103 = vmatpush1.msra.mxu0 %v2701
        %3104 = vmatprep.subr.mxu0 0.0
        %3105 = vmatpush1.msra.mxu0 %v2702
        %3106 = vmatprep.subr.mxu0 0.0
        %3107 = vmatpush1.msra.mxu0 %v2703
        %3108 = vmatprep.subr.mxu0 0.0
        %3109 = vmatpush1.msra.mxu0 0.0
        %3110 = vmatprep.subr.mxu0 0.0
        %3111 = vmatpush1.msra.mxu0 0.0
        %3112 = vmatprep.subr.mxu0 0.0
        %3113 = vmatpush1.msra.mxu0 0.0
        %3114 = vmatprep.subr.mxu0 0.0
        %3115 = vmatpush1.msra.mxu0 0.0
        %3116 = vmatprep.subr.mxu0 0.0
        %3117 = vmatpush1.msra.mxu0 0.0
        %3118 = vmatprep.subr.mxu0 0.0
        %3119 = vmatpush1.msra.mxu0 0.0
        %3120 = vmatprep.subr.mxu0 0.0
        %3121 = vmatpush1.msra.mxu0 0.0
        %3122 = vmatprep.subr.mxu0 0.0
        %3123 = vmatpush1.msra.mxu0 0.0
        %3124 = vmatprep.subr.mxu0 0.0
        %3125 = vmatpush1.msra.mxu0 0.0
        %3126 = vmatprep.subr.mxu0 0.0
        %3127 = vmatpush1.msra.mxu0 0.0
        %3128 = vmatprep.subr.mxu0 0.0
        %3129 = vmatpush1.msra.mxu0 0.0
        %3130 = vmatprep.subr.mxu0 0.0
        %3131 = vmatpush1.msra.mxu0 0.0
        %3132 = vmatprep.subr.mxu0 0.0
        %3133 = vmatpush1.msra.mxu0 0.0
        %3134 = vmatprep.subr.mxu0 0.0
        %3135 = vmatpush1.msra.mxu0 0.0
        %3136 = vmatprep.subr.mxu0 0.0
        %3137 = vmatpush1.msra.mxu0 0.0
        %3138 = vmatprep.subr.mxu0 0.0
        %3139 = vmatpush1.msra.mxu0 0.0
        %3140 = vmatprep.subr.mxu0 0.0
        %3141 = vmatpush1.msra.mxu0 0.0
        %3142 = vmatprep.subr.mxu0 0.0
        %3143 = vmatpush1.msra.mxu0 0.0
        %3144 = vmatprep.subr.mxu0 0.0
        %3145 = vmatpush1.msra.mxu0 0.0
        %3146 = vmatprep.subr.mxu0 0.0
        %3147 = vmatpush1.msra.mxu0 0.0
        %3148 = vmatprep.subr.mxu0 0.0
        %3149 = vmatpush1.msra.mxu0 0.0
        %3150 = vmatprep.subr.mxu0 0.0
        %3151 = vmatpush1.msra.mxu0 0.0
        %3152 = vmatprep.subr.mxu0 0.0
        %3153 = vmatpush1.msra.mxu0 0.0
        %3154 = vmatprep.subr.mxu0 0.0
        %3155 = vmatpush1.msra.mxu0 0.0
        %3156 = vmatprep.subr.mxu0 0.0
        %3157 = vmatpush1.msra.mxu0 0.0
        %3158 = vmatprep.subr.mxu0 0.0
        %3159 = vmatpush1.msra.mxu0 0.0
        %3160 = vmatprep.subr.mxu0 0.0
        %3161 = vmatpush1.msra.mxu0 0.0
        %3162 = vmatprep.subr.mxu0 0.0
        %3163 = vmatpush1.msra.mxu0 0.0
        %3164 = vmatprep.mubr.f32.mxu0 0.0
        %3165 = vmatmul.mubr.f32.gmra.mrb[0].mxu0 %v2818
        %v3166 = vpop.f32.mrb[0].mxu0
        %v3167 = vadd.f32 %v2776, %v3166
        %v3168 = vpop.f32.mrb[0].mxu0
        %3169 = vdwg.mxu0
        %3170 = vmatprep.subr.mxu0 0.0
        %3171 = vmatpush1.msra.mxu0 %v2704
        %3172 = vmatprep.subr.mxu0 0.0
        %3173 = vmatpush1.msra.mxu0 %v2705
        %3174 = vmatprep.subr.mxu0 0.0
        %3175 = vmatpush1.msra.mxu0 %v2706
        %3176 = vmatprep.subr.mxu0 0.0
        %3177 = vmatpush1.msra.mxu0 %v2707
        %3178 = vmatprep.subr.mxu0 0.0
        %3179 = vmatpush1.msra.mxu0 0.0
        %3180 = vmatprep.subr.mxu0 0.0
        %3181 = vmatpush1.msra.mxu0 0.0
        %3182 = vmatprep.subr.mxu0 0.0
        %3183 = vmatpush1.msra.mxu0 0.0
        %3184 = vmatprep.subr.mxu0 0.0
        %3185 = vmatpush1.msra.mxu0 0.0
        %3186 = vmatprep.subr.mxu0 0.0
        %3187 = vmatpush1.msra.mxu0 0.0
        %3188 = vmatprep.subr.mxu0 0.0
        %3189 = vmatpush1.msra.mxu0 0.0
        %3190 = vmatprep.subr.mxu0 0.0
        %3191 = vmatpush1.msra.mxu0 0.0
        %3192 = vmatprep.subr.mxu0 0.0
        %3193 = vmatpush1.msra.mxu0 0.0
        %3194 = vmatprep.subr.mxu0 0.0
        %3195 = vmatpush1.msra.mxu0 0.0
        %3196 = vmatprep.subr.mxu0 0.0
        %3197 = vmatpush1.msra.mxu0 0.0
        %3198 = vmatprep.subr.mxu0 0.0
        %3199 = vmatpush1.msra.mxu0 0.0
        %3200 = vmatprep.subr.mxu0 0.0
        %3201 = vmatpush1.msra.mxu0 0.0
        %3202 = vmatprep.subr.mxu0 0.0
        %3203 = vmatpush1.msra.mxu0 0.0
        %3204 = vmatprep.subr.mxu0 0.0
        %3205 = vmatpush1.msra.mxu0 0.0
        %3206 = vmatprep.subr.mxu0 0.0
        %3207 = vmatpush1.msra.mxu0 0.0
        %3208 = vmatprep.subr.mxu0 0.0
        %3209 = vmatpush1.msra.mxu0 0.0
        %3210 = vmatprep.subr.mxu0 0.0
        %3211 = vmatpush1.msra.mxu0 0.0
        %3212 = vmatprep.subr.mxu0 0.0
        %3213 = vmatpush1.msra.mxu0 0.0
        %3214 = vmatprep.subr.mxu0 0.0
        %3215 = vmatpush1.msra.mxu0 0.0
        %3216 = vmatprep.subr.mxu0 0.0
        %3217 = vmatpush1.msra.mxu0 0.0
        %3218 = vmatprep.subr.mxu0 0.0
        %3219 = vmatpush1.msra.mxu0 0.0
        %3220 = vmatprep.subr.mxu0 0.0
        %3221 = vmatpush1.msra.mxu0 0.0
        %3222 = vmatprep.subr.mxu0 0.0
        %3223 = vmatpush1.msra.mxu0 0.0
        %3224 = vmatprep.subr.mxu0 0.0
        %3225 = vmatpush1.msra.mxu0 0.0
        %3226 = vmatprep.subr.mxu0 0.0
        %3227 = vmatpush1.msra.mxu0 0.0
        %3228 = vmatprep.subr.mxu0 0.0
        %3229 = vmatpush1.msra.mxu0 0.0
        %3230 = vmatprep.subr.mxu0 0.0
        %3231 = vmatpush1.msra.mxu0 0.0
        %3232 = vmatprep.subr.mxu0 0.0
        %3233 = vmatpush1.msra.mxu0 0.0
        %3234 = vmatprep.mubr.f32.mxu0 0.0
        %3235 = vmatmul.mubr.f32.gmra.mrb[0].mxu0 %v2818
        %v3236 = vpop.f32.mrb[0].mxu0
        %v3237 = vadd.f32 %v2780, %v3236
        %v3238 = vpop.f32.mrb[0].mxu0
        %3239 = vdwg.mxu0
        %3240 = vmatprep.subr.mxu0 0.0
        %3241 = vmatpush1.msra.mxu0 %v2708
        %3242 = vmatprep.subr.mxu0 0.0
        %3243 = vmatpush1.msra.mxu0 %v2709
        %3244 = vmatprep.subr.mxu0 0.0
        %3245 = vmatpush1.msra.mxu0 %v2710
        %3246 = vmatprep.subr.mxu0 0.0
        %3247 = vmatpush1.msra.mxu0 %v2711
        %3248 = vmatprep.subr.mxu0 0.0
        %3249 = vmatpush1.msra.mxu0 0.0
        %3250 = vmatprep.subr.mxu0 0.0
        %3251 = vmatpush1.msra.mxu0 0.0
        %3252 = vmatprep.subr.mxu0 0.0
        %3253 = vmatpush1.msra.mxu0 0.0
        %3254 = vmatprep.subr.mxu0 0.0
        %3255 = vmatpush1.msra.mxu0 0.0
        %3256 = vmatprep.subr.mxu0 0.0
        %3257 = vmatpush1.msra.mxu0 0.0
        %3258 = vmatprep.subr.mxu0 0.0
        %3259 = vmatpush1.msra.mxu0 0.0
        %3260 = vmatprep.subr.mxu0 0.0
        %3261 = vmatpush1.msra.mxu0 0.0
        %3262 = vmatprep.subr.mxu0 0.0
        %3263 = vmatpush1.msra.mxu0 0.0
        %3264 = vmatprep.subr.mxu0 0.0
        %3265 = vmatpush1.msra.mxu0 0.0
        %3266 = vmatprep.subr.mxu0 0.0
        %3267 = vmatpush1.msra.mxu0 0.0
        %3268 = vmatprep.subr.mxu0 0.0
        %3269 = vmatpush1.msra.mxu0 0.0
        %3270 = vmatprep.subr.mxu0 0.0
        %3271 = vmatpush1.msra.mxu0 0.0
        %3272 = vmatprep.subr.mxu0 0.0
        %3273 = vmatpush1.msra.mxu0 0.0
        %3274 = vmatprep.subr.mxu0 0.0
        %3275 = vmatpush1.msra.mxu0 0.0
        %3276 = vmatprep.subr.mxu0 0.0
        %3277 = vmatpush1.msra.mxu0 0.0
        %3278 = vmatprep.subr.mxu0 0.0
        %3279 = vmatpush1.msra.mxu0 0.0
        %3280 = vmatprep.subr.mxu0 0.0
        %3281 = vmatpush1.msra.mxu0 0.0
        %3282 = vmatprep.subr.mxu0 0.0
        %3283 = vmatpush1.msra.mxu0 0.0
        %3284 = vmatprep.subr.mxu0 0.0
        %3285 = vmatpush1.msra.mxu0 0.0
        %3286 = vmatprep.subr.mxu0 0.0
        %3287 = vmatpush1.msra.mxu0 0.0
        %3288 = vmatprep.subr.mxu0 0.0
        %3289 = vmatpush1.msra.mxu0 0.0
        %3290 = vmatprep.subr.mxu0 0.0
        %3291 = vmatpush1.msra.mxu0 0.0
        %3292 = vmatprep.subr.mxu0 0.0
        %3293 = vmatpush1.msra.mxu0 0.0
        %3294 = vmatprep.subr.mxu0 0.0
        %3295 = vmatpush1.msra.mxu0 0.0
        %3296 = vmatprep.subr.mxu0 0.0
        %3297 = vmatpush1.msra.mxu0 0.0
        %3298 = vmatprep.subr.mxu0 0.0
        %3299 = vmatpush1.msra.mxu0 0.0
        %3300 = vmatprep.subr.mxu0 0.0
        %3301 = vmatpush1.msra.mxu0 0.0
        %3302 = vmatprep.subr.mxu0 0.0
        %3303 = vmatpush1.msra.mxu0 0.0
        %3304 = vmatprep.mubr.f32.mxu0 0.0
        %3305 = vmatmul.mubr.f32.gmra.mrb[0].mxu0 %v2818
        %v3306 = vpop.f32.mrb[0].mxu0
        %v3307 = vadd.f32 %v2784, %v3306
        %v3308 = vpop.f32.mrb[0].mxu0
        %3309 = vdwg.mxu0
        %3310 = vmatprep.subr.mxu0 0.0
        %3311 = vmatpush1.msra.mxu0 %v2712
        %3312 = vmatprep.subr.mxu0 0.0
        %3313 = vmatpush1.msra.mxu0 %v2713
        %3314 = vmatprep.subr.mxu0 0.0
        %3315 = vmatpush1.msra.mxu0 %v2714
        %3316 = vmatprep.subr.mxu0 0.0
        %3317 = vmatpush1.msra.mxu0 %v2715
        %3318 = vmatprep.subr.mxu0 0.0
        %3319 = vmatpush1.msra.mxu0 0.0
        %3320 = vmatprep.subr.mxu0 0.0
        %3321 = vmatpush1.msra.mxu0 0.0
        %3322 = vmatprep.subr.mxu0 0.0
        %3323 = vmatpush1.msra.mxu0 0.0
        %3324 = vmatprep.subr.mxu0 0.0
        %3325 = vmatpush1.msra.mxu0 0.0
        %3326 = vmatprep.subr.mxu0 0.0
        %3327 = vmatpush1.msra.mxu0 0.0
        %3328 = vmatprep.subr.mxu0 0.0
        %3329 = vmatpush1.msra.mxu0 0.0
        %3330 = vmatprep.subr.mxu0 0.0
        %3331 = vmatpush1.msra.mxu0 0.0
        %3332 = vmatprep.subr.mxu0 0.0
        %3333 = vmatpush1.msra.mxu0 0.0
        %3334 = vmatprep.subr.mxu0 0.0
        %3335 = vmatpush1.msra.mxu0 0.0
        %3336 = vmatprep.subr.mxu0 0.0
        %3337 = vmatpush1.msra.mxu0 0.0
        %3338 = vmatprep.subr.mxu0 0.0
        %3339 = vmatpush1.msra.mxu0 0.0
        %3340 = vmatprep.subr.mxu0 0.0
        %3341 = vmatpush1.msra.mxu0 0.0
        %3342 = vmatprep.subr.mxu0 0.0
        %3343 = vmatpush1.msra.mxu0 0.0
        %3344 = vmatprep.subr.mxu0 0.0
        %3345 = vmatpush1.msra.mxu0 0.0
        %3346 = vmatprep.subr.mxu0 0.0
        %3347 = vmatpush1.msra.mxu0 0.0
        %3348 = vmatprep.subr.mxu0 0.0
        %3349 = vmatpush1.msra.mxu0 0.0
        %3350 = vmatprep.subr.mxu0 0.0
        %3351 = vmatpush1.msra.mxu0 0.0
        %3352 = vmatprep.subr.mxu0 0.0
        %3353 = vmatpush1.msra.mxu0 0.0
        %3354 = vmatprep.subr.mxu0 0.0
        %3355 = vmatpush1.msra.mxu0 0.0
        %3356 = vmatprep.subr.mxu0 0.0
        %3357 = vmatpush1.msra.mxu0 0.0
        %3358 = vmatprep.subr.mxu0 0.0
        %3359 = vmatpush1.msra.mxu0 0.0
        %3360 = vmatprep.subr.mxu0 0.0
        %3361 = vmatpush1.msra.mxu0 0.0
        %3362 = vmatprep.subr.mxu0 0.0
        %3363 = vmatpush1.msra.mxu0 0.0
        %3364 = vmatprep.subr.mxu0 0.0
        %3365 = vmatpush1.msra.mxu0 0.0
        %3366 = vmatprep.subr.mxu0 0.0
        %3367 = vmatpush1.msra.mxu0 0.0
        %3368 = vmatprep.subr.mxu0 0.0
        %3369 = vmatpush1.msra.mxu0 0.0
        %3370 = vmatprep.subr.mxu0 0.0
        %3371 = vmatpush1.msra.mxu0 0.0
        %3372 = vmatprep.subr.mxu0 0.0
        %3373 = vmatpush1.msra.mxu0 0.0
        %3374 = vmatprep.mubr.f32.mxu0 0.0
        %3375 = vmatmul.mubr.f32.gmra.mrb[0].mxu0 %v2818
        %v3376 = vpop.f32.mrb[0].mxu0
        %v3377 = vadd.f32 %v2788, %v3376
        %v3378 = vpop.f32.mrb[0].mxu0
        %3379 = vdwg.mxu0
        %3380 = vmatprep.subr.mxu0 0.0
        %3381 = vmatpush1.msra.mxu0 %v2716
        %3382 = vmatprep.subr.mxu0 0.0
        %3383 = vmatpush1.msra.mxu0 %v2717
        %3384 = vmatprep.subr.mxu0 0.0
        %3385 = vmatpush1.msra.mxu0 %v2718
        %3386 = vmatprep.subr.mxu0 0.0
        %3387 = vmatpush1.msra.mxu0 %v2719
        %3388 = vmatprep.subr.mxu0 0.0
        %3389 = vmatpush1.msra.mxu0 0.0
        %3390 = vmatprep.subr.mxu0 0.0
        %3391 = vmatpush1.msra.mxu0 0.0
        %3392 = vmatprep.subr.mxu0 0.0
        %3393 = vmatpush1.msra.mxu0 0.0
        %3394 = vmatprep.subr.mxu0 0.0
        %3395 = vmatpush1.msra.mxu0 0.0
        %3396 = vmatprep.subr.mxu0 0.0
        %3397 = vmatpush1.msra.mxu0 0.0
        %3398 = vmatprep.subr.mxu0 0.0
        %3399 = vmatpush1.msra.mxu0 0.0
        %3400 = vmatprep.subr.mxu0 0.0
        %3401 = vmatpush1.msra.mxu0 0.0
        %3402 = vmatprep.subr.mxu0 0.0
        %3403 = vmatpush1.msra.mxu0 0.0
        %3404 = vmatprep.subr.mxu0 0.0
        %3405 = vmatpush1.msra.mxu0 0.0
        %3406 = vmatprep.subr.mxu0 0.0
        %3407 = vmatpush1.msra.mxu0 0.0
        %3408 = vmatprep.subr.mxu0 0.0
        %3409 = vmatpush1.msra.mxu0 0.0
        %3410 = vmatprep.subr.mxu0 0.0
        %3411 = vmatpush1.msra.mxu0 0.0
        %3412 = vmatprep.subr.mxu0 0.0
        %3413 = vmatpush1.msra.mxu0 0.0
        %3414 = vmatprep.subr.mxu0 0.0
        %3415 = vmatpush1.msra.mxu0 0.0
        %3416 = vmatprep.subr.mxu0 0.0
        %3417 = vmatpush1.msra.mxu0 0.0
        %3418 = vmatprep.subr.mxu0 0.0
        %3419 = vmatpush1.msra.mxu0 0.0
        %3420 = vmatprep.subr.mxu0 0.0
        %3421 = vmatpush1.msra.mxu0 0.0
        %3422 = vmatprep.subr.mxu0 0.0
        %3423 = vmatpush1.msra.mxu0 0.0
        %3424 = vmatprep.subr.mxu0 0.0
        %3425 = vmatpush1.msra.mxu0 0.0
        %3426 = vmatprep.subr.mxu0 0.0
        %3427 = vmatpush1.msra.mxu0 0.0
        %3428 = vmatprep.subr.mxu0 0.0
        %3429 = vmatpush1.msra.mxu0 0.0
        %3430 = vmatprep.subr.mxu0 0.0
        %3431 = vmatpush1.msra.mxu0 0.0
        %3432 = vmatprep.subr.mxu0 0.0
        %3433 = vmatpush1.msra.mxu0 0.0
        %3434 = vmatprep.subr.mxu0 0.0
        %3435 = vmatpush1.msra.mxu0 0.0
        %3436 = vmatprep.subr.mxu0 0.0
        %3437 = vmatpush1.msra.mxu0 0.0
        %3438 = vmatprep.subr.mxu0 0.0
        %3439 = vmatpush1.msra.mxu0 0.0
        %3440 = vmatprep.subr.mxu0 0.0
        %3441 = vmatpush1.msra.mxu0 0.0
        %3442 = vmatprep.subr.mxu0 0.0
        %3443 = vmatpush1.msra.mxu0 0.0
        %3444 = vmatprep.mubr.f32.mxu0 0.0
        %3445 = vmatmul.mubr.f32.gmra.mrb[0].mxu0 %v2818
        %v3446 = vpop.f32.mrb[0].mxu0
        %v3447 = vadd.f32 %v2792, %v3446
        %v3448 = vpop.f32.mrb[0].mxu0
        %3449 = vdwg.mxu0
        %3450 = vmatprep.subr.mxu0 0.0
        %3451 = vmatpush1.msra.mxu0 %v2720
        %3452 = vmatprep.subr.mxu0 0.0
        %3453 = vmatpush1.msra.mxu0 %v2721
        %3454 = vmatprep.subr.mxu0 0.0
        %3455 = vmatpush1.msra.mxu0 %v2722
        %3456 = vmatprep.subr.mxu0 0.0
        %3457 = vmatpush1.msra.mxu0 %v2723
        %3458 = vmatprep.subr.mxu0 0.0
        %3459 = vmatpush1.msra.mxu0 0.0
        %3460 = vmatprep.subr.mxu0 0.0
        %3461 = vmatpush1.msra.mxu0 0.0
        %3462 = vmatprep.subr.mxu0 0.0
        %3463 = vmatpush1.msra.mxu0 0.0
        %3464 = vmatprep.subr.mxu0 0.0
        %3465 = vmatpush1.msra.mxu0 0.0
        %3466 = vmatprep.subr.mxu0 0.0
        %3467 = vmatpush1.msra.mxu0 0.0
        %3468 = vmatprep.subr.mxu0 0.0
        %3469 = vmatpush1.msra.mxu0 0.0
        %3470 = vmatprep.subr.mxu0 0.0
        %3471 = vmatpush1.msra.mxu0 0.0
        %3472 = vmatprep.subr.mxu0 0.0
        %3473 = vmatpush1.msra.mxu0 0.0
        %3474 = vmatprep.subr.mxu0 0.0
        %3475 = vmatpush1.msra.mxu0 0.0
        %3476 = vmatprep.subr.mxu0 0.0
        %3477 = vmatpush1.msra.mxu0 0.0
        %3478 = vmatprep.subr.mxu0 0.0
        %3479 = vmatpush1.msra.mxu0 0.0
        %3480 = vmatprep.subr.mxu0 0.0
        %3481 = vmatpush1.msra.mxu0 0.0
        %3482 = vmatprep.subr.mxu0 0.0
        %3483 = vmatpush1.msra.mxu0 0.0
        %3484 = vmatprep.subr.mxu0 0.0
        %3485 = vmatpush1.msra.mxu0 0.0
        %3486 = vmatprep.subr.mxu0 0.0
        %3487 = vmatpush1.msra.mxu0 0.0
        %3488 = vmatprep.subr.mxu0 0.0
        %3489 = vmatpush1.msra.mxu0 0.0
        %3490 = vmatprep.subr.mxu0 0.0
        %3491 = vmatpush1.msra.mxu0 0.0
        %3492 = vmatprep.subr.mxu0 0.0
        %3493 = vmatpush1.msra.mxu0 0.0
        %3494 = vmatprep.subr.mxu0 0.0
        %3495 = vmatpush1.msra.mxu0 0.0
        %3496 = vmatprep.subr.mxu0 0.0
        %3497 = vmatpush1.msra.mxu0 0.0
        %3498 = vmatprep.subr.mxu0 0.0
        %3499 = vmatpush1.msra.mxu0 0.0
        %3500 = vmatprep.subr.mxu0 0.0
        %3501 = vmatpush1.msra.mxu0 0.0
        %3502 = vmatprep.subr.mxu0 0.0
        %3503 = vmatpush1.msra.mxu0 0.0
        %3504 = vmatprep.subr.mxu0 0.0
        %3505 = vmatpush1.msra.mxu0 0.0
        %3506 = vmatprep.subr.mxu0 0.0
        %3507 = vmatpush1.msra.mxu0 0.0
        %3508 = vmatprep.subr.mxu0 0.0
        %3509 = vmatpush1.msra.mxu0 0.0
        %3510 = vmatprep.subr.mxu0 0.0
        %3511 = vmatpush1.msra.mxu0 0.0
        %3512 = vmatprep.subr.mxu0 0.0
        %3513 = vmatpush1.msra.mxu0 0.0
        %3514 = vmatprep.mubr.f32.mxu0 0.0
        %3515 = vmatmul.mubr.f32.gmra.mrb[0].mxu0 %v2818
        %v3516 = vpop.f32.mrb[0].mxu0
        %v3517 = vadd.f32 %v2796, %v3516
        %v3518 = vpop.f32.mrb[0].mxu0
        %3519 = vdwg.mxu0
        %3520 = vmatprep.subr.mxu0 0.0
        %3521 = vmatpush1.msra.mxu0 %v2724
        %3522 = vmatprep.subr.mxu0 0.0
        %3523 = vmatpush1.msra.mxu0 %v2725
        %3524 = vmatprep.subr.mxu0 0.0
        %3525 = vmatpush1.msra.mxu0 %v2726
        %3526 = vmatprep.subr.mxu0 0.0
        %3527 = vmatpush1.msra.mxu0 %v2727
        %3528 = vmatprep.subr.mxu0 0.0
        %3529 = vmatpush1.msra.mxu0 0.0
        %3530 = vmatprep.subr.mxu0 0.0
        %3531 = vmatpush1.msra.mxu0 0.0
        %3532 = vmatprep.subr.mxu0 0.0
        %3533 = vmatpush1.msra.mxu0 0.0
        %3534 = vmatprep.subr.mxu0 0.0
        %3535 = vmatpush1.msra.mxu0 0.0
        %3536 = vmatprep.subr.mxu0 0.0
        %3537 = vmatpush1.msra.mxu0 0.0
        %3538 = vmatprep.subr.mxu0 0.0
        %3539 = vmatpush1.msra.mxu0 0.0
        %3540 = vmatprep.subr.mxu0 0.0
        %3541 = vmatpush1.msra.mxu0 0.0
        %3542 = vmatprep.subr.mxu0 0.0
        %3543 = vmatpush1.msra.mxu0 0.0
        %3544 = vmatprep.subr.mxu0 0.0
        %3545 = vmatpush1.msra.mxu0 0.0
        %3546 = vmatprep.subr.mxu0 0.0
        %3547 = vmatpush1.msra.mxu0 0.0
        %3548 = vmatprep.subr.mxu0 0.0
        %3549 = vmatpush1.msra.mxu0 0.0
        %3550 = vmatprep.subr.mxu0 0.0
        %3551 = vmatpush1.msra.mxu0 0.0
        %3552 = vmatprep.subr.mxu0 0.0
        %3553 = vmatpush1.msra.mxu0 0.0
        %3554 = vmatprep.subr.mxu0 0.0
        %3555 = vmatpush1.msra.mxu0 0.0
        %3556 = vmatprep.subr.mxu0 0.0
        %3557 = vmatpush1.msra.mxu0 0.0
        %3558 = vmatprep.subr.mxu0 0.0
        %3559 = vmatpush1.msra.mxu0 0.0
        %3560 = vmatprep.subr.mxu0 0.0
        %3561 = vmatpush1.msra.mxu0 0.0
        %3562 = vmatprep.subr.mxu0 0.0
        %3563 = vmatpush1.msra.mxu0 0.0
        %3564 = vmatprep.subr.mxu0 0.0
        %3565 = vmatpush1.msra.mxu0 0.0
        %3566 = vmatprep.subr.mxu0 0.0
        %3567 = vmatpush1.msra.mxu0 0.0
        %3568 = vmatprep.subr.mxu0 0.0
        %3569 = vmatpush1.msra.mxu0 0.0
        %3570 = vmatprep.subr.mxu0 0.0
        %3571 = vmatpush1.msra.mxu0 0.0
        %3572 = vmatprep.subr.mxu0 0.0
        %3573 = vmatpush1.msra.mxu0 0.0
        %3574 = vmatprep.subr.mxu0 0.0
        %3575 = vmatpush1.msra.mxu0 0.0
        %3576 = vmatprep.subr.mxu0 0.0
        %3577 = vmatpush1.msra.mxu0 0.0
        %3578 = vmatprep.subr.mxu0 0.0
        %3579 = vmatpush1.msra.mxu0 0.0
        %3580 = vmatprep.subr.mxu0 0.0
        %3581 = vmatpush1.msra.mxu0 0.0
        %3582 = vmatprep.subr.mxu0 0.0
        %3583 = vmatpush1.msra.mxu0 0.0
        %3584 = vmatprep.mubr.f32.mxu0 0.0
        %3585 = vmatmul.mubr.f32.gmra.mrb[0].mxu0 %v2818
        %v3586 = vpop.f32.mrb[0].mxu0
        %v3587 = vadd.f32 %v2800, %v3586
        %v3588 = vpop.f32.mrb[0].mxu0
        %3589 = vdwg.mxu0
        %3590 = vmatprep.subr.mxu0 0.0
        %3591 = vmatpush1.msra.mxu0 %v2728
        %3592 = vmatprep.subr.mxu0 0.0
        %3593 = vmatpush1.msra.mxu0 %v2729
        %3594 = vmatprep.subr.mxu0 0.0
        %3595 = vmatpush1.msra.mxu0 %v2730
        %3596 = vmatprep.subr.mxu0 0.0
        %3597 = vmatpush1.msra.mxu0 %v2731
        %3598 = vmatprep.subr.mxu0 0.0
        %3599 = vmatpush1.msra.mxu0 0.0
        %3600 = vmatprep.subr.mxu0 0.0
        %3601 = vmatpush1.msra.mxu0 0.0
        %3602 = vmatprep.subr.mxu0 0.0
        %3603 = vmatpush1.msra.mxu0 0.0
        %3604 = vmatprep.subr.mxu0 0.0
        %3605 = vmatpush1.msra.mxu0 0.0
        %3606 = vmatprep.subr.mxu0 0.0
        %3607 = vmatpush1.msra.mxu0 0.0
        %3608 = vmatprep.subr.mxu0 0.0
        %3609 = vmatpush1.msra.mxu0 0.0
        %3610 = vmatprep.subr.mxu0 0.0
        %3611 = vmatpush1.msra.mxu0 0.0
        %3612 = vmatprep.subr.mxu0 0.0
        %3613 = vmatpush1.msra.mxu0 0.0
        %3614 = vmatprep.subr.mxu0 0.0
        %3615 = vmatpush1.msra.mxu0 0.0
        %3616 = vmatprep.subr.mxu0 0.0
        %3617 = vmatpush1.msra.mxu0 0.0
        %3618 = vmatprep.subr.mxu0 0.0
        %3619 = vmatpush1.msra.mxu0 0.0
        %3620 = vmatprep.subr.mxu0 0.0
        %3621 = vmatpush1.msra.mxu0 0.0
        %3622 = vmatprep.subr.mxu0 0.0
        %3623 = vmatpush1.msra.mxu0 0.0
        %3624 = vmatprep.subr.mxu0 0.0
        %3625 = vmatpush1.msra.mxu0 0.0
        %3626 = vmatprep.subr.mxu0 0.0
        %3627 = vmatpush1.msra.mxu0 0.0
        %3628 = vmatprep.subr.mxu0 0.0
        %3629 = vmatpush1.msra.mxu0 0.0
        %3630 = vmatprep.subr.mxu0 0.0
        %3631 = vmatpush1.msra.mxu0 0.0
        %3632 = vmatprep.subr.mxu0 0.0
        %3633 = vmatpush1.msra.mxu0 0.0
        %3634 = vmatprep.subr.mxu0 0.0
        %3635 = vmatpush1.msra.mxu0 0.0
        %3636 = vmatprep.subr.mxu0 0.0
        %3637 = vmatpush1.msra.mxu0 0.0
        %3638 = vmatprep.subr.mxu0 0.0
        %3639 = vmatpush1.msra.mxu0 0.0
        %3640 = vmatprep.subr.mxu0 0.0
        %3641 = vmatpush1.msra.mxu0 0.0
        %3642 = vmatprep.subr.mxu0 0.0
        %3643 = vmatpush1.msra.mxu0 0.0
        %3644 = vmatprep.subr.mxu0 0.0
        %3645 = vmatpush1.msra.mxu0 0.0
        %3646 = vmatprep.subr.mxu0 0.0
        %3647 = vmatpush1.msra.mxu0 0.0
        %3648 = vmatprep.subr.mxu0 0.0
        %3649 = vmatpush1.msra.mxu0 0.0
        %3650 = vmatprep.subr.mxu0 0.0
        %3651 = vmatpush1.msra.mxu0 0.0
        %3652 = vmatprep.subr.mxu0 0.0
        %3653 = vmatpush1.msra.mxu0 0.0
        %3654 = vmatprep.mubr.f32.mxu0 0.0
        %3655 = vmatmul.mubr.f32.gmra.mrb[0].mxu0 %v2818
        %v3656 = vpop.f32.mrb[0].mxu0
        %v3657 = vadd.f32 %v2804, %v3656
        %v3658 = vpop.f32.mrb[0].mxu0
        %3659 = vdwg.mxu0
        %v3661 = vsel %vm1497, %v2887, 0
        %v3664 = vsel %vm1497, %v3167, 0
        %3666 = vmatprep.subr.mxu0 0.0
        %3667 = vmatpush1.xpose.msra.mxu0 %v3664
        %3668 = vmatprep.subr.mxu0 0.0
        %3669 = vmatpush1.xpose.msra.mxu0 0.0
        %3670 = vmatprep.subr.mxu0 0.0
        %3671 = vmatpush1.xpose.msra.mxu0 0.0
        %3672 = vmatprep.subr.mxu0 0.0
        %3673 = vmatpush1.xpose.msra.mxu0 0.0
        %3674 = vmatprep.subr.mxu0 0.0
        %3675 = vmatpush1.xpose.msra.mxu0 0.0
        %3676 = vmatprep.subr.mxu0 0.0
        %3677 = vmatpush1.xpose.msra.mxu0 0.0
        %3678 = vmatprep.subr.mxu0 0.0
        %3679 = vmatpush1.xpose.msra.mxu0 0.0
        %3680 = vmatprep.subr.mxu0 0.0
        %3681 = vmatpush1.xpose.msra.mxu0 0.0
        %3682 = vmatprep.subr.mxu0 0.0
        %3683 = vmatpush1.xpose.msra.mxu0 0.0
        %3684 = vmatprep.subr.mxu0 0.0
        %3685 = vmatpush1.xpose.msra.mxu0 0.0
        %3686 = vmatprep.subr.mxu0 0.0
        %3687 = vmatpush1.xpose.msra.mxu0 0.0
        %3688 = vmatprep.subr.mxu0 0.0
        %3689 = vmatpush1.xpose.msra.mxu0 0.0
        %3690 = vmatprep.subr.mxu0 0.0
        %3691 = vmatpush1.xpose.msra.mxu0 0.0
        %3692 = vmatprep.subr.mxu0 0.0
        %3693 = vmatpush1.xpose.msra.mxu0 0.0
        %3694 = vmatprep.subr.mxu0 0.0
        %3695 = vmatpush1.xpose.msra.mxu0 0.0
        %3696 = vmatprep.subr.mxu0 0.0
        %3697 = vmatpush1.xpose.msra.mxu0 0.0
        %3698 = vmatprep.subr.mxu0 0.0
        %3699 = vmatpush1.xpose.msra.mxu0 0.0
        %3700 = vmatprep.subr.mxu0 0.0
        %3701 = vmatpush1.xpose.msra.mxu0 0.0
        %3702 = vmatprep.subr.mxu0 0.0
        %3703 = vmatpush1.xpose.msra.mxu0 0.0
        %3704 = vmatprep.subr.mxu0 0.0
        %3705 = vmatpush1.xpose.msra.mxu0 0.0
        %3706 = vmatprep.subr.mxu0 0.0
        %3707 = vmatpush1.xpose.msra.mxu0 0.0
        %3708 = vmatprep.subr.mxu0 0.0
        %3709 = vmatpush1.xpose.msra.mxu0 0.0
        %3710 = vmatprep.subr.mxu0 0.0
        %3711 = vmatpush1.xpose.msra.mxu0 0.0
        %3712 = vmatprep.subr.mxu0 0.0
        %3713 = vmatpush1.xpose.msra.mxu0 0.0
        %3714 = vmatprep.subr.mxu0 0.0
        %3715 = vmatpush1.xpose.msra.mxu0 0.0
        %3716 = vmatprep.subr.mxu0 0.0
        %3717 = vmatpush1.xpose.msra.mxu0 0.0
        %3718 = vmatprep.subr.mxu0 0.0
        %3719 = vmatpush1.xpose.msra.mxu0 0.0
        %3720 = vmatprep.subr.mxu0 0.0
        %3721 = vmatpush1.xpose.msra.mxu0 0.0
        %3722 = vmatprep.subr.mxu0 0.0
        %3723 = vmatpush1.xpose.msra.mxu0 0.0
        %3724 = vmatprep.subr.mxu0 0.0
        %3725 = vmatpush1.xpose.msra.mxu0 0.0
        %3726 = vmatprep.subr.mxu0 0.0
        %3727 = vmatpush1.xpose.msra.mxu0 0.0
        %3728 = vmatprep.subr.mxu0 0.0
        %3729 = vmatpush1.xpose.msra.mxu0 0.0
        %3730 = vmatprep.mubr.f32.mxu0 0.0
        %3731 = vmatmul.mubr.f32.gmra.mrb[0].mxu0 %v3661
        %v3732 = vpop.f32.mrb[0].mxu0
        %v3733 = vadd.f32 0.0, %v3732
        %v3734 = vpop.f32.mrb[0].mxu0
        %3735 = vdwg.mxu0
        %v3737 = vsel %vm1497, %v2957, 0
        %v3740 = vsel %vm1497, %v3237, 0
        %3742 = vmatprep.subr.mxu0 0.0
        %3743 = vmatpush1.xpose.msra.mxu0 %v3740
        %3744 = vmatprep.subr.mxu0 0.0
        %3745 = vmatpush1.xpose.msra.mxu0 0.0
        %3746 = vmatprep.subr.mxu0 0.0
        %3747 = vmatpush1.xpose.msra.mxu0 0.0
        %3748 = vmatprep.subr.mxu0 0.0
        %3749 = vmatpush1.xpose.msra.mxu0 0.0
        %3750 = vmatprep.subr.mxu0 0.0
        %3751 = vmatpush1.xpose.msra.mxu0 0.0
        %3752 = vmatprep.subr.mxu0 0.0
        %3753 = vmatpush1.xpose.msra.mxu0 0.0
        %3754 = vmatprep.subr.mxu0 0.0
        %3755 = vmatpush1.xpose.msra.mxu0 0.0
        %3756 = vmatprep.subr.mxu0 0.0
        %3757 = vmatpush1.xpose.msra.mxu0 0.0
        %3758 = vmatprep.subr.mxu0 0.0
        %3759 = vmatpush1.xpose.msra.mxu0 0.0
        %3760 = vmatprep.subr.mxu0 0.0
        %3761 = vmatpush1.xpose.msra.mxu0 0.0
        %3762 = vmatprep.subr.mxu0 0.0
        %3763 = vmatpush1.xpose.msra.mxu0 0.0
        %3764 = vmatprep.subr.mxu0 0.0
        %3765 = vmatpush1.xpose.msra.mxu0 0.0
        %3766 = vmatprep.subr.mxu0 0.0
        %3767 = vmatpush1.xpose.msra.mxu0 0.0
        %3768 = vmatprep.subr.mxu0 0.0
        %3769 = vmatpush1.xpose.msra.mxu0 0.0
        %3770 = vmatprep.subr.mxu0 0.0
        %3771 = vmatpush1.xpose.msra.mxu0 0.0
        %3772 = vmatprep.subr.mxu0 0.0
        %3773 = vmatpush1.xpose.msra.mxu0 0.0
        %3774 = vmatprep.subr.mxu0 0.0
        %3775 = vmatpush1.xpose.msra.mxu0 0.0
        %3776 = vmatprep.subr.mxu0 0.0
        %3777 = vmatpush1.xpose.msra.mxu0 0.0
        %3778 = vmatprep.subr.mxu0 0.0
        %3779 = vmatpush1.xpose.msra.mxu0 0.0
        %3780 = vmatprep.subr.mxu0 0.0
        %3781 = vmatpush1.xpose.msra.mxu0 0.0
        %3782 = vmatprep.subr.mxu0 0.0
        %3783 = vmatpush1.xpose.msra.mxu0 0.0
        %3784 = vmatprep.subr.mxu0 0.0
        %3785 = vmatpush1.xpose.msra.mxu0 0.0
        %3786 = vmatprep.subr.mxu0 0.0
        %3787 = vmatpush1.xpose.msra.mxu0 0.0
        %3788 = vmatprep.subr.mxu0 0.0
        %3789 = vmatpush1.xpose.msra.mxu0 0.0
        %3790 = vmatprep.subr.mxu0 0.0
        %3791 = vmatpush1.xpose.msra.mxu0 0.0
        %3792 = vmatprep.subr.mxu0 0.0
        %3793 = vmatpush1.xpose.msra.mxu0 0.0
        %3794 = vmatprep.subr.mxu0 0.0
        %3795 = vmatpush1.xpose.msra.mxu0 0.0
        %3796 = vmatprep.subr.mxu0 0.0
        %3797 = vmatpush1.xpose.msra.mxu0 0.0
        %3798 = vmatprep.subr.mxu0 0.0
        %3799 = vmatpush1.xpose.msra.mxu0 0.0
        %3800 = vmatprep.subr.mxu0 0.0
        %3801 = vmatpush1.xpose.msra.mxu0 0.0
        %3802 = vmatprep.subr.mxu0 0.0
        %3803 = vmatpush1.xpose.msra.mxu0 0.0
        %3804 = vmatprep.subr.mxu0 0.0
        %3805 = vmatpush1.xpose.msra.mxu0 0.0
        %3806 = vmatprep.mubr.f32.mxu0 0.0
        %3807 = vmatmul.mubr.f32.gmra.mrb[0].mxu0 %v3737
        %v3808 = vpop.f32.mrb[0].mxu0
        %v3809 = vadd.f32 0.0, %v3808
        %v3810 = vpop.f32.mrb[0].mxu0
        %3811 = vdwg.mxu0
        %v3813 = vsel %vm1497, %v3027, 0
        %v3816 = vsel %vm1497, %v3307, 0
        %3818 = vmatprep.subr.mxu0 0.0
        %3819 = vmatpush1.xpose.msra.mxu0 %v3816
        %3820 = vmatprep.subr.mxu0 0.0
        %3821 = vmatpush1.xpose.msra.mxu0 0.0
        %3822 = vmatprep.subr.mxu0 0.0
        %3823 = vmatpush1.xpose.msra.mxu0 0.0
        %3824 = vmatprep.subr.mxu0 0.0
        %3825 = vmatpush1.xpose.msra.mxu0 0.0
        %3826 = vmatprep.subr.mxu0 0.0
        %3827 = vmatpush1.xpose.msra.mxu0 0.0
        %3828 = vmatprep.subr.mxu0 0.0
        %3829 = vmatpush1.xpose.msra.mxu0 0.0
        %3830 = vmatprep.subr.mxu0 0.0
        %3831 = vmatpush1.xpose.msra.mxu0 0.0
        %3832 = vmatprep.subr.mxu0 0.0
        %3833 = vmatpush1.xpose.msra.mxu0 0.0
        %3834 = vmatprep.subr.mxu0 0.0
        %3835 = vmatpush1.xpose.msra.mxu0 0.0
        %3836 = vmatprep.subr.mxu0 0.0
        %3837 = vmatpush1.xpose.msra.mxu0 0.0
        %3838 = vmatprep.subr.mxu0 0.0
        %3839 = vmatpush1.xpose.msra.mxu0 0.0
        %3840 = vmatprep.subr.mxu0 0.0
        %3841 = vmatpush1.xpose.msra.mxu0 0.0
        %3842 = vmatprep.subr.mxu0 0.0
        %3843 = vmatpush1.xpose.msra.mxu0 0.0
        %3844 = vmatprep.subr.mxu0 0.0
        %3845 = vmatpush1.xpose.msra.mxu0 0.0
        %3846 = vmatprep.subr.mxu0 0.0
        %3847 = vmatpush1.xpose.msra.mxu0 0.0
        %3848 = vmatprep.subr.mxu0 0.0
        %3849 = vmatpush1.xpose.msra.mxu0 0.0
        %3850 = vmatprep.subr.mxu0 0.0
        %3851 = vmatpush1.xpose.msra.mxu0 0.0
        %3852 = vmatprep.subr.mxu0 0.0
        %3853 = vmatpush1.xpose.msra.mxu0 0.0
        %3854 = vmatprep.subr.mxu0 0.0
        %3855 = vmatpush1.xpose.msra.mxu0 0.0
        %3856 = vmatprep.subr.mxu0 0.0
        %3857 = vmatpush1.xpose.msra.mxu0 0.0
        %3858 = vmatprep.subr.mxu0 0.0
        %3859 = vmatpush1.xpose.msra.mxu0 0.0
        %3860 = vmatprep.subr.mxu0 0.0
        %3861 = vmatpush1.xpose.msra.mxu0 0.0
        %3862 = vmatprep.subr.mxu0 0.0
        %3863 = vmatpush1.xpose.msra.mxu0 0.0
        %3864 = vmatprep.subr.mxu0 0.0
        %3865 = vmatpush1.xpose.msra.mxu0 0.0
        %3866 = vmatprep.subr.mxu0 0.0
        %3867 = vmatpush1.xpose.msra.mxu0 0.0
        %3868 = vmatprep.subr.mxu0 0.0
        %3869 = vmatpush1.xpose.msra.mxu0 0.0
        %3870 = vmatprep.subr.mxu0 0.0
        %3871 = vmatpush1.xpose.msra.mxu0 0.0
        %3872 = vmatprep.subr.mxu0 0.0
        %3873 = vmatpush1.xpose.msra.mxu0 0.0
        %3874 = vmatprep.subr.mxu0 0.0
        %3875 = vmatpush1.xpose.msra.mxu0 0.0
        %3876 = vmatprep.subr.mxu0 0.0
        %3877 = vmatpush1.xpose.msra.mxu0 0.0
        %3878 = vmatprep.subr.mxu0 0.0
        %3879 = vmatpush1.xpose.msra.mxu0 0.0
        %3880 = vmatprep.subr.mxu0 0.0
        %3881 = vmatpush1.xpose.msra.mxu0 0.0
        %3882 = vmatprep.mubr.f32.mxu0 0.0
        %3883 = vmatmul.mubr.f32.gmra.mrb[0].mxu0 %v3813
        %v3884 = vpop.f32.mrb[0].mxu0
        %v3885 = vadd.f32 0.0, %v3884
        %v3886 = vpop.f32.mrb[0].mxu0
        %3887 = vdwg.mxu0
        %v3889 = vsel %vm1497, %v3097, 0
        %v3892 = vsel %vm1497, %v3377, 0
        %3894 = vmatprep.subr.mxu0 0.0
        %3895 = vmatpush1.xpose.msra.mxu0 %v3892
        %3896 = vmatprep.subr.mxu0 0.0
        %3897 = vmatpush1.xpose.msra.mxu0 0.0
        %3898 = vmatprep.subr.mxu0 0.0
        %3899 = vmatpush1.xpose.msra.mxu0 0.0
        %3900 = vmatprep.subr.mxu0 0.0
        %3901 = vmatpush1.xpose.msra.mxu0 0.0
        %3902 = vmatprep.subr.mxu0 0.0
        %3903 = vmatpush1.xpose.msra.mxu0 0.0
        %3904 = vmatprep.subr.mxu0 0.0
        %3905 = vmatpush1.xpose.msra.mxu0 0.0
        %3906 = vmatprep.subr.mxu0 0.0
        %3907 = vmatpush1.xpose.msra.mxu0 0.0
        %3908 = vmatprep.subr.mxu0 0.0
        %3909 = vmatpush1.xpose.msra.mxu0 0.0
        %3910 = vmatprep.subr.mxu0 0.0
        %3911 = vmatpush1.xpose.msra.mxu0 0.0
        %3912 = vmatprep.subr.mxu0 0.0
        %3913 = vmatpush1.xpose.msra.mxu0 0.0
        %3914 = vmatprep.subr.mxu0 0.0
        %3915 = vmatpush1.xpose.msra.mxu0 0.0
        %3916 = vmatprep.subr.mxu0 0.0
        %3917 = vmatpush1.xpose.msra.mxu0 0.0
        %3918 = vmatprep.subr.mxu0 0.0
        %3919 = vmatpush1.xpose.msra.mxu0 0.0
        %3920 = vmatprep.subr.mxu0 0.0
        %3921 = vmatpush1.xpose.msra.mxu0 0.0
        %3922 = vmatprep.subr.mxu0 0.0
        %3923 = vmatpush1.xpose.msra.mxu0 0.0
        %3924 = vmatprep.subr.mxu0 0.0
        %3925 = vmatpush1.xpose.msra.mxu0 0.0
        %3926 = vmatprep.subr.mxu0 0.0
        %3927 = vmatpush1.xpose.msra.mxu0 0.0
        %3928 = vmatprep.subr.mxu0 0.0
        %3929 = vmatpush1.xpose.msra.mxu0 0.0
        %3930 = vmatprep.subr.mxu0 0.0
        %3931 = vmatpush1.xpose.msra.mxu0 0.0
        %3932 = vmatprep.subr.mxu0 0.0
        %3933 = vmatpush1.xpose.msra.mxu0 0.0
        %3934 = vmatprep.subr.mxu0 0.0
        %3935 = vmatpush1.xpose.msra.mxu0 0.0
        %3936 = vmatprep.subr.mxu0 0.0
        %3937 = vmatpush1.xpose.msra.mxu0 0.0
        %3938 = vmatprep.subr.mxu0 0.0
        %3939 = vmatpush1.xpose.msra.mxu0 0.0
        %3940 = vmatprep.subr.mxu0 0.0
        %3941 = vmatpush1.xpose.msra.mxu0 0.0
        %3942 = vmatprep.subr.mxu0 0.0
        %3943 = vmatpush1.xpose.msra.mxu0 0.0
        %3944 = vmatprep.subr.mxu0 0.0
        %3945 = vmatpush1.xpose.msra.mxu0 0.0
        %3946 = vmatprep.subr.mxu0 0.0
        %3947 = vmatpush1.xpose.msra.mxu0 0.0
        %3948 = vmatprep.subr.mxu0 0.0
        %3949 = vmatpush1.xpose.msra.mxu0 0.0
        %3950 = vmatprep.subr.mxu0 0.0
        %3951 = vmatpush1.xpose.msra.mxu0 0.0
        %3952 = vmatprep.subr.mxu0 0.0
        %3953 = vmatpush1.xpose.msra.mxu0 0.0
        %3954 = vmatprep.subr.mxu0 0.0
        %3955 = vmatpush1.xpose.msra.mxu0 0.0
        %3956 = vmatprep.subr.mxu0 0.0
        %3957 = vmatpush1.xpose.msra.mxu0 0.0
        %3958 = vmatprep.mubr.f32.mxu0 0.0
        %3959 = vmatmul.mubr.f32.gmra.mrb[0].mxu0 %v3889
        %v3960 = vpop.f32.mrb[0].mxu0
        %v3961 = vadd.f32 0.0, %v3960
        %v3962 = vpop.f32.mrb[0].mxu0
        %3963 = vdwg.mxu0
        %v3964 = vsel %vm1497, %v3733, -inf
        %3965 = vmax.xlane.f32.xlu0 %v3964
        %v3966 = vpop.xlane.xlu0 %3965
        %v3967 = vsel %vm1497, %v3809, -inf
        %3968 = vmax.xlane.f32.xlu0 %v3967
        %v3969 = vpop.xlane.xlu0 %3968
        %v3970 = vsel %vm1497, %v3885, -inf
        %3971 = vmax.xlane.f32.xlu0 %v3970
        %v3972 = vpop.xlane.xlu0 %3971
        %v3973 = vsel %vm1497, %v3961, -inf
        %3974 = vmax.xlane.f32.xlu0 %v3973
        %v3975 = vpop.xlane.xlu0 %3974
        %v3976 = vsub.f32 %v3733, %v3966
        %v3977 = vsub.f32 %v3809, %v3969
        %v3978 = vsub.f32 %v3885, %v3972
        %v3979 = vsub.f32 %v3961, %v3975
        %v3980 = vmul.f32 %v3976, 1.442695
        %v3981 = vpow.pop %v3980
        %v3982 = vmul.f32 %v3977, 1.442695
        %v3983 = vpow.pop %v3982
        %v3984 = vmul.f32 %v3978, 1.442695
        %v3985 = vpow.pop %v3984
        %v3986 = vmul.f32 %v3979, 1.442695
        %v3987 = vpow.pop %v3986
        %v3988 = vsel %vm1497, %v3981, 0.0
        %3989 = vadd.xlane.f32.xlu0 %v3988
        %v3990 = vpop.xlane.xlu0 %3989
        %v3991 = vsel %vm1497, %v3983, 0.0
        %3992 = vadd.xlane.f32.xlu0 %v3991
        %v3993 = vpop.xlane.xlu0 %3992
        %v3994 = vsel %vm1497, %v3985, 0.0
        %3995 = vadd.xlane.f32.xlu0 %v3994
        %v3996 = vpop.xlane.xlu0 %3995
        %v3997 = vsel %vm1497, %v3987, 0.0
        %3998 = vadd.xlane.f32.xlu0 %v3997
        %v3999 = vpop.xlane.xlu0 %3998
        %v4000 = vrcp.pop %v3990
        %v4001 = vrcp.pop %v3993
        %v4002 = vrcp.pop %v3996
        %v4003 = vrcp.pop %v3999
        %v4004 = vmul.f32 %v3981, %v4000
        %v4005 = vmul.f32 %v3983, %v4001
        %v4006 = vmul.f32 %v3985, %v4002
        %v4007 = vmul.f32 %v3987, %v4003
        %v4009 = vsel %vm1497, %v4004, 0
        %4011 = vmatprep.subr.mxu0 0.0
        %4012 = vmatpush1.msra.mxu0 %v3447
        %4013 = vmatprep.subr.mxu0 0.0
        %4014 = vmatpush1.msra.mxu0 0.0
        %4015 = vmatprep.subr.mxu0 0.0
        %4016 = vmatpush1.msra.mxu0 0.0
        %4017 = vmatprep.subr.mxu0 0.0
        %4018 = vmatpush1.msra.mxu0 0.0
        %4019 = vmatprep.subr.mxu0 0.0
        %4020 = vmatpush1.msra.mxu0 0.0
        %4021 = vmatprep.subr.mxu0 0.0
        %4022 = vmatpush1.msra.mxu0 0.0
        %4023 = vmatprep.subr.mxu0 0.0
        %4024 = vmatpush1.msra.mxu0 0.0
        %4025 = vmatprep.subr.mxu0 0.0
        %4026 = vmatpush1.msra.mxu0 0.0
        %4027 = vmatprep.subr.mxu0 0.0
        %4028 = vmatpush1.msra.mxu0 0.0
        %4029 = vmatprep.subr.mxu0 0.0
        %4030 = vmatpush1.msra.mxu0 0.0
        %4031 = vmatprep.subr.mxu0 0.0
        %4032 = vmatpush1.msra.mxu0 0.0
        %4033 = vmatprep.subr.mxu0 0.0
        %4034 = vmatpush1.msra.mxu0 0.0
        %4035 = vmatprep.subr.mxu0 0.0
        %4036 = vmatpush1.msra.mxu0 0.0
        %4037 = vmatprep.subr.mxu0 0.0
        %4038 = vmatpush1.msra.mxu0 0.0
        %4039 = vmatprep.subr.mxu0 0.0
        %4040 = vmatpush1.msra.mxu0 0.0
        %4041 = vmatprep.subr.mxu0 0.0
        %4042 = vmatpush1.msra.mxu0 0.0
        %4043 = vmatprep.subr.mxu0 0.0
        %4044 = vmatpush1.msra.mxu0 0.0
        %4045 = vmatprep.subr.mxu0 0.0
        %4046 = vmatpush1.msra.mxu0 0.0
        %4047 = vmatprep.subr.mxu0 0.0
        %4048 = vmatpush1.msra.mxu0 0.0
        %4049 = vmatprep.subr.mxu0 0.0
        %4050 = vmatpush1.msra.mxu0 0.0
        %4051 = vmatprep.subr.mxu0 0.0
        %4052 = vmatpush1.msra.mxu0 0.0
        %4053 = vmatprep.subr.mxu0 0.0
        %4054 = vmatpush1.msra.mxu0 0.0
        %4055 = vmatprep.subr.mxu0 0.0
        %4056 = vmatpush1.msra.mxu0 0.0
        %4057 = vmatprep.subr.mxu0 0.0
        %4058 = vmatpush1.msra.mxu0 0.0
        %4059 = vmatprep.subr.mxu0 0.0
        %4060 = vmatpush1.msra.mxu0 0.0
        %4061 = vmatprep.subr.mxu0 0.0
        %4062 = vmatpush1.msra.mxu0 0.0
        %4063 = vmatprep.subr.mxu0 0.0
        %4064 = vmatpush1.msra.mxu0 0.0
        %4065 = vmatprep.subr.mxu0 0.0
        %4066 = vmatpush1.msra.mxu0 0.0
        %4067 = vmatprep.subr.mxu0 0.0
        %4068 = vmatpush1.msra.mxu0 0.0
        %4069 = vmatprep.subr.mxu0 0.0
        %4070 = vmatpush1.msra.mxu0 0.0
        %4071 = vmatprep.subr.mxu0 0.0
        %4072 = vmatpush1.msra.mxu0 0.0
        %4073 = vmatprep.subr.mxu0 0.0
        %4074 = vmatpush1.msra.mxu0 0.0
        %4075 = vmatprep.mubr.f32.mxu0 0.0
        %4076 = vmatmul.mubr.f32.gmra.mrb[0].mxu0 %v4009
        %v4077 = vpop.f32.mrb[0].mxu0
        %v4078 = vadd.f32 0.0, %v4077
        %v4079 = vpop.f32.mrb[0].mxu0
        %4080 = vdwg.mxu0
        %v4082 = vsel %vm1497, %v4005, 0
        %4084 = vmatprep.subr.mxu0 0.0
        %4085 = vmatpush1.msra.mxu0 %v3517
        %4086 = vmatprep.subr.mxu0 0.0
        %4087 = vmatpush1.msra.mxu0 0.0
        %4088 = vmatprep.subr.mxu0 0.0
        %4089 = vmatpush1.msra.mxu0 0.0
        %4090 = vmatprep.subr.mxu0 0.0
        %4091 = vmatpush1.msra.mxu0 0.0
        %4092 = vmatprep.subr.mxu0 0.0
        %4093 = vmatpush1.msra.mxu0 0.0
        %4094 = vmatprep.subr.mxu0 0.0
        %4095 = vmatpush1.msra.mxu0 0.0
        %4096 = vmatprep.subr.mxu0 0.0
        %4097 = vmatpush1.msra.mxu0 0.0
        %4098 = vmatprep.subr.mxu0 0.0
        %4099 = vmatpush1.msra.mxu0 0.0
        %4100 = vmatprep.subr.mxu0 0.0
        %4101 = vmatpush1.msra.mxu0 0.0
        %4102 = vmatprep.subr.mxu0 0.0
        %4103 = vmatpush1.msra.mxu0 0.0
        %4104 = vmatprep.subr.mxu0 0.0
        %4105 = vmatpush1.msra.mxu0 0.0
        %4106 = vmatprep.subr.mxu0 0.0
        %4107 = vmatpush1.msra.mxu0 0.0
        %4108 = vmatprep.subr.mxu0 0.0
        %4109 = vmatpush1.msra.mxu0 0.0
        %4110 = vmatprep.subr.mxu0 0.0
        %4111 = vmatpush1.msra.mxu0 0.0
        %4112 = vmatprep.subr.mxu0 0.0
        %4113 = vmatpush1.msra.mxu0 0.0
        %4114 = vmatprep.subr.mxu0 0.0
        %4115 = vmatpush1.msra.mxu0 0.0
        %4116 = vmatprep.subr.mxu0 0.0
        %4117 = vmatpush1.msra.mxu0 0.0
        %4118 = vmatprep.subr.mxu0 0.0
        %4119 = vmatpush1.msra.mxu0 0.0
        %4120 = vmatprep.subr.mxu0 0.0
        %4121 = vmatpush1.msra.mxu0 0.0
        %4122 = vmatprep.subr.mxu0 0.0
        %4123 = vmatpush1.msra.mxu0 0.0
        %4124 = vmatprep.subr.mxu0 0.0
        %4125 = vmatpush1.msra.mxu0 0.0
        %4126 = vmatprep.subr.mxu0 0.0
        %4127 = vmatpush1.msra.mxu0 0.0
        %4128 = vmatprep.subr.mxu0 0.0
        %4129 = vmatpush1.msra.mxu0 0.0
        %4130 = vmatprep.subr.mxu0 0.0
        %4131 = vmatpush1.msra.mxu0 0.0
        %4132 = vmatprep.subr.mxu0 0.0
        %4133 = vmatpush1.msra.mxu0 0.0
        %4134 = vmatprep.subr.mxu0 0.0
        %4135 = vmatpush1.msra.mxu0 0.0
        %4136 = vmatprep.subr.mxu0 0.0
        %4137 = vmatpush1.msra.mxu0 0.0
        %4138 = vmatprep.subr.mxu0 0.0
        %4139 = vmatpush1.msra.mxu0 0.0
        %4140 = vmatprep.subr.mxu0 0.0
        %4141 = vmatpush1.msra.mxu0 0.0
        %4142 = vmatprep.subr.mxu0 0.0
        %4143 = vmatpush1.msra.mxu0 0.0
        %4144 = vmatprep.subr.mxu0 0.0
        %4145 = vmatpush1.msra.mxu0 0.0
        %4146 = vmatprep.subr.mxu0 0.0
        %4147 = vmatpush1.msra.mxu0 0.0
        %4148 = vmatprep.mubr.f32.mxu0 0.0
        %4149 = vmatmul.mubr.f32.gmra.mrb[0].mxu0 %v4082
        %v4150 = vpop.f32.mrb[0].mxu0
        %v4151 = vadd.f32 0.0, %v4150
        %v4152 = vpop.f32.mrb[0].mxu0
        %4153 = vdwg.mxu0
        %v4155 = vsel %vm1497, %v4006, 0
        %4157 = vmatprep.subr.mxu0 0.0
        %4158 = vmatpush1.msra.mxu0 %v3587
        %4159 = vmatprep.subr.mxu0 0.0
        %4160 = vmatpush1.msra.mxu0 0.0
        %4161 = vmatprep.subr.mxu0 0.0
        %4162 = vmatpush1.msra.mxu0 0.0
        %4163 = vmatprep.subr.mxu0 0.0
        %4164 = vmatpush1.msra.mxu0 0.0
        %4165 = vmatprep.subr.mxu0 0.0
        %4166 = vmatpush1.msra.mxu0 0.0
        %4167 = vmatprep.subr.mxu0 0.0
        %4168 = vmatpush1.msra.mxu0 0.0
        %4169 = vmatprep.subr.mxu0 0.0
        %4170 = vmatpush1.msra.mxu0 0.0
        %4171 = vmatprep.subr.mxu0 0.0
        %4172 = vmatpush1.msra.mxu0 0.0
        %4173 = vmatprep.subr.mxu0 0.0
        %4174 = vmatpush1.msra.mxu0 0.0
        %4175 = vmatprep.subr.mxu0 0.0
        %4176 = vmatpush1.msra.mxu0 0.0
        %4177 = vmatprep.subr.mxu0 0.0
        %4178 = vmatpush1.msra.mxu0 0.0
        %4179 = vmatprep.subr.mxu0 0.0
        %4180 = vmatpush1.msra.mxu0 0.0
        %4181 = vmatprep.subr.mxu0 0.0
        %4182 = vmatpush1.msra.mxu0 0.0
        %4183 = vmatprep.subr.mxu0 0.0
        %4184 = vmatpush1.msra.mxu0 0.0
        %4185 = vmatprep.subr.mxu0 0.0
        %4186 = vmatpush1.msra.mxu0 0.0
        %4187 = vmatprep.subr.mxu0 0.0
        %4188 = vmatpush1.msra.mxu0 0.0
        %4189 = vmatprep.subr.mxu0 0.0
        %4190 = vmatpush1.msra.mxu0 0.0
        %4191 = vmatprep.subr.mxu0 0.0
        %4192 = vmatpush1.msra.mxu0 0.0
        %4193 = vmatprep.subr.mxu0 0.0
        %4194 = vmatpush1.msra.mxu0 0.0
        %4195 = vmatprep.subr.mxu0 0.0
        %4196 = vmatpush1.msra.mxu0 0.0
        %4197 = vmatprep.subr.mxu0 0.0
        %4198 = vmatpush1.msra.mxu0 0.0
        %4199 = vmatprep.subr.mxu0 0.0
        %4200 = vmatpush1.msra.mxu0 0.0
        %4201 = vmatprep.subr.mxu0 0.0
        %4202 = vmatpush1.msra.mxu0 0.0
        %4203 = vmatprep.subr.mxu0 0.0
        %4204 = vmatpush1.msra.mxu0 0.0
        %4205 = vmatprep.subr.mxu0 0.0
        %4206 = vmatpush1.msra.mxu0 0.0
        %4207 = vmatprep.subr.mxu0 0.0
        %4208 = vmatpush1.msra.mxu0 0.0
        %4209 = vmatprep.subr.mxu0 0.0
        %4210 = vmatpush1.msra.mxu0 0.0
        %4211 = vmatprep.subr.mxu0 0.0
        %4212 = vmatpush1.msra.mxu0 0.0
        %4213 = vmatprep.subr.mxu0 0.0
        %4214 = vmatpush1.msra.mxu0 0.0
        %4215 = vmatprep.subr.mxu0 0.0
        %4216 = vmatpush1.msra.mxu0 0.0
        %4217 = vmatprep.subr.mxu0 0.0
        %4218 = vmatpush1.msra.mxu0 0.0
        %4219 = vmatprep.subr.mxu0 0.0
        %4220 = vmatpush1.msra.mxu0 0.0
        %4221 = vmatprep.mubr.f32.mxu0 0.0
        %4222 = vmatmul.mubr.f32.gmra.mrb[0].mxu0 %v4155
        %v4223 = vpop.f32.mrb[0].mxu0
        %v4224 = vadd.f32 0.0, %v4223
        %v4225 = vpop.f32.mrb[0].mxu0
        %4226 = vdwg.mxu0
        %v4228 = vsel %vm1497, %v4007, 0
        %4230 = vmatprep.subr.mxu0 0.0
        %4231 = vmatpush1.msra.mxu0 %v3657
        %4232 = vmatprep.subr.mxu0 0.0
        %4233 = vmatpush1.msra.mxu0 0.0
        %4234 = vmatprep.subr.mxu0 0.0
        %4235 = vmatpush1.msra.mxu0 0.0
        %4236 = vmatprep.subr.mxu0 0.0
        %4237 = vmatpush1.msra.mxu0 0.0
        %4238 = vmatprep.subr.mxu0 0.0
        %4239 = vmatpush1.msra.mxu0 0.0
        %4240 = vmatprep.subr.mxu0 0.0
        %4241 = vmatpush1.msra.mxu0 0.0
        %4242 = vmatprep.subr.mxu0 0.0
        %4243 = vmatpush1.msra.mxu0 0.0
        %4244 = vmatprep.subr.mxu0 0.0
        %4245 = vmatpush1.msra.mxu0 0.0
        %4246 = vmatprep.subr.mxu0 0.0
        %4247 = vmatpush1.msra.mxu0 0.0
        %4248 = vmatprep.subr.mxu0 0.0
        %4249 = vmatpush1.msra.mxu0 0.0
        %4250 = vmatprep.subr.mxu0 0.0
        %4251 = vmatpush1.msra.mxu0 0.0
        %4252 = vmatprep.subr.mxu0 0.0
        %4253 = vmatpush1.msra.mxu0 0.0
        %4254 = vmatprep.subr.mxu0 0.0
        %4255 = vmatpush1.msra.mxu0 0.0
        %4256 = vmatprep.subr.mxu0 0.0
        %4257 = vmatpush1.msra.mxu0 0.0
        %4258 = vmatprep.subr.mxu0 0.0
        %4259 = vmatpush1.msra.mxu0 0.0
        %4260 = vmatprep.subr.mxu0 0.0
        %4261 = vmatpush1.msra.mxu0 0.0
        %4262 = vmatprep.subr.mxu0 0.0
        %4263 = vmatpush1.msra.mxu0 0.0
        %4264 = vmatprep.subr.mxu0 0.0
        %4265 = vmatpush1.msra.mxu0 0.0
        %4266 = vmatprep.subr.mxu0 0.0
        %4267 = vmatpush1.msra.mxu0 0.0
        %4268 = vmatprep.subr.mxu0 0.0
        %4269 = vmatpush1.msra.mxu0 0.0
        %4270 = vmatprep.subr.mxu0 0.0
        %4271 = vmatpush1.msra.mxu0 0.0
        %4272 = vmatprep.subr.mxu0 0.0
        %4273 = vmatpush1.msra.mxu0 0.0
        %4274 = vmatprep.subr.mxu0 0.0
        %4275 = vmatpush1.msra.mxu0 0.0
        %4276 = vmatprep.subr.mxu0 0.0
        %4277 = vmatpush1.msra.mxu0 0.0
        %4278 = vmatprep.subr.mxu0 0.0
        %4279 = vmatpush1.msra.mxu0 0.0
        %4280 = vmatprep.subr.mxu0 0.0
        %4281 = vmatpush1.msra.mxu0 0.0
        %4282 = vmatprep.subr.mxu0 0.0
        %4283 = vmatpush1.msra.mxu0 0.0
        %4284 = vmatprep.subr.mxu0 0.0
        %4285 = vmatpush1.msra.mxu0 0.0
        %4286 = vmatprep.subr.mxu0 0.0
        %4287 = vmatpush1.msra.mxu0 0.0
        %4288 = vmatprep.subr.mxu0 0.0
        %4289 = vmatpush1.msra.mxu0 0.0
        %4290 = vmatprep.subr.mxu0 0.0
        %4291 = vmatpush1.msra.mxu0 0.0
        %4292 = vmatprep.subr.mxu0 0.0
        %4293 = vmatpush1.msra.mxu0 0.0
        %4294 = vmatprep.mubr.f32.mxu0 0.0
        %4295 = vmatmul.mubr.f32.gmra.mrb[0].mxu0 %v4228
        %v4296 = vpop.f32.mrb[0].mxu0
        %v4297 = vadd.f32 0.0, %v4296
        %v4298 = vpop.f32.mrb[0].mxu0
        %4299 = vdwg.mxu0
        %s4300 = scalar_lea.vmem %s5, 32
        %v4301 = vld [vmem:[%s4300] sm:$0xff]
        %v4302 = vld [vmem:[%s4300 + $0x8] sm:$0xff]
        %v4303 = vld [vmem:[%s4300 + $0x10] sm:$0xff]
        %v4304 = vld [vmem:[%s4300 + $0x18] sm:$0xff]
        %v4306 = vsel %vm1497, %v4078, 0
        %4308 = vmatprep.subr.mxu0 0.0
        %4309 = vmatpush1.msra.mxu0 %v4301
        %4310 = vmatprep.subr.mxu0 0.0
        %4311 = vmatpush1.msra.mxu0 0.0
        %4312 = vmatprep.subr.mxu0 0.0
        %4313 = vmatpush1.msra.mxu0 0.0
        %4314 = vmatprep.subr.mxu0 0.0
        %4315 = vmatpush1.msra.mxu0 0.0
        %4316 = vmatprep.subr.mxu0 0.0
        %4317 = vmatpush1.msra.mxu0 0.0
        %4318 = vmatprep.subr.mxu0 0.0
        %4319 = vmatpush1.msra.mxu0 0.0
        %4320 = vmatprep.subr.mxu0 0.0
        %4321 = vmatpush1.msra.mxu0 0.0
        %4322 = vmatprep.subr.mxu0 0.0
        %4323 = vmatpush1.msra.mxu0 0.0
        %4324 = vmatprep.subr.mxu0 0.0
        %4325 = vmatpush1.msra.mxu0 0.0
        %4326 = vmatprep.subr.mxu0 0.0
        %4327 = vmatpush1.msra.mxu0 0.0
        %4328 = vmatprep.subr.mxu0 0.0
        %4329 = vmatpush1.msra.mxu0 0.0
        %4330 = vmatprep.subr.mxu0 0.0
        %4331 = vmatpush1.msra.mxu0 0.0
        %4332 = vmatprep.subr.mxu0 0.0
        %4333 = vmatpush1.msra.mxu0 0.0
        %4334 = vmatprep.subr.mxu0 0.0
        %4335 = vmatpush1.msra.mxu0 0.0
        %4336 = vmatprep.subr.mxu0 0.0
        %4337 = vmatpush1.msra.mxu0 0.0
        %4338 = vmatprep.subr.mxu0 0.0
        %4339 = vmatpush1.msra.mxu0 0.0
        %4340 = vmatprep.subr.mxu0 0.0
        %4341 = vmatpush1.msra.mxu0 0.0
        %4342 = vmatprep.subr.mxu0 0.0
        %4343 = vmatpush1.msra.mxu0 0.0
        %4344 = vmatprep.subr.mxu0 0.0
        %4345 = vmatpush1.msra.mxu0 0.0
        %4346 = vmatprep.subr.mxu0 0.0
        %4347 = vmatpush1.msra.mxu0 0.0
        %4348 = vmatprep.subr.mxu0 0.0
        %4349 = vmatpush1.msra.mxu0 0.0
        %4350 = vmatprep.subr.mxu0 0.0
        %4351 = vmatpush1.msra.mxu0 0.0
        %4352 = vmatprep.subr.mxu0 0.0
        %4353 = vmatpush1.msra.mxu0 0.0
        %4354 = vmatprep.subr.mxu0 0.0
        %4355 = vmatpush1.msra.mxu0 0.0
        %4356 = vmatprep.subr.mxu0 0.0
        %4357 = vmatpush1.msra.mxu0 0.0
        %4358 = vmatprep.subr.mxu0 0.0
        %4359 = vmatpush1.msra.mxu0 0.0
        %4360 = vmatprep.subr.mxu0 0.0
        %4361 = vmatpush1.msra.mxu0 0.0
        %4362 = vmatprep.subr.mxu0 0.0
        %4363 = vmatpush1.msra.mxu0 0.0
        %4364 = vmatprep.subr.mxu0 0.0
        %4365 = vmatpush1.msra.mxu0 0.0
        %4366 = vmatprep.subr.mxu0 0.0
        %4367 = vmatpush1.msra.mxu0 0.0
        %4368 = vmatprep.subr.mxu0 0.0
        %4369 = vmatpush1.msra.mxu0 0.0
        %4370 = vmatprep.subr.mxu0 0.0
        %4371 = vmatpush1.msra.mxu0 0.0
        %4372 = vmatprep.mubr.f32.mxu0 0.0
        %4373 = vmatmul.mubr.f32.gmra.mrb[0].mxu0 %v4306
        %v4374 = vpop.f32.mrb[0].mxu0
        %v4375 = vadd.f32 0.0, %v4374
        %v4376 = vpop.f32.mrb[0].mxu0
        %4377 = vdwg.mxu0
        %v4379 = vsel %vm1497, %v4151, 0
        %4381 = vmatprep.subr.mxu0 0.0
        %4382 = vmatpush1.msra.mxu0 %v4302
        %4383 = vmatprep.subr.mxu0 0.0
        %4384 = vmatpush1.msra.mxu0 0.0
        %4385 = vmatprep.subr.mxu0 0.0
        %4386 = vmatpush1.msra.mxu0 0.0
        %4387 = vmatprep.subr.mxu0 0.0
        %4388 = vmatpush1.msra.mxu0 0.0
        %4389 = vmatprep.subr.mxu0 0.0
        %4390 = vmatpush1.msra.mxu0 0.0
        %4391 = vmatprep.subr.mxu0 0.0
        %4392 = vmatpush1.msra.mxu0 0.0
        %4393 = vmatprep.subr.mxu0 0.0
        %4394 = vmatpush1.msra.mxu0 0.0
        %4395 = vmatprep.subr.mxu0 0.0
        %4396 = vmatpush1.msra.mxu0 0.0
        %4397 = vmatprep.subr.mxu0 0.0
        %4398 = vmatpush1.msra.mxu0 0.0
        %4399 = vmatprep.subr.mxu0 0.0
        %4400 = vmatpush1.msra.mxu0 0.0
        %4401 = vmatprep.subr.mxu0 0.0
        %4402 = vmatpush1.msra.mxu0 0.0
        %4403 = vmatprep.subr.mxu0 0.0
        %4404 = vmatpush1.msra.mxu0 0.0
        %4405 = vmatprep.subr.mxu0 0.0
        %4406 = vmatpush1.msra.mxu0 0.0
        %4407 = vmatprep.subr.mxu0 0.0
        %4408 = vmatpush1.msra.mxu0 0.0
        %4409 = vmatprep.subr.mxu0 0.0
        %4410 = vmatpush1.msra.mxu0 0.0
        %4411 = vmatprep.subr.mxu0 0.0
        %4412 = vmatpush1.msra.mxu0 0.0
        %4413 = vmatprep.subr.mxu0 0.0
        %4414 = vmatpush1.msra.mxu0 0.0
        %4415 = vmatprep.subr.mxu0 0.0
        %4416 = vmatpush1.msra.mxu0 0.0
        %4417 = vmatprep.subr.mxu0 0.0
        %4418 = vmatpush1.msra.mxu0 0.0
        %4419 = vmatprep.subr.mxu0 0.0
        %4420 = vmatpush1.msra.mxu0 0.0
        %4421 = vmatprep.subr.mxu0 0.0
        %4422 = vmatpush1.msra.mxu0 0.0
        %4423 = vmatprep.subr.mxu0 0.0
        %4424 = vmatpush1.msra.mxu0 0.0
        %4425 = vmatprep.subr.mxu0 0.0
        %4426 = vmatpush1.msra.mxu0 0.0
        %4427 = vmatprep.subr.mxu0 0.0
        %4428 = vmatpush1.msra.mxu0 0.0
        %4429 = vmatprep.subr.mxu0 0.0
        %4430 = vmatpush1.msra.mxu0 0.0
        %4431 = vmatprep.subr.mxu0 0.0
        %4432 = vmatpush1.msra.mxu0 0.0
        %4433 = vmatprep.subr.mxu0 0.0
        %4434 = vmatpush1.msra.mxu0 0.0
        %4435 = vmatprep.subr.mxu0 0.0
        %4436 = vmatpush1.msra.mxu0 0.0
        %4437 = vmatprep.subr.mxu0 0.0
        %4438 = vmatpush1.msra.mxu0 0.0
        %4439 = vmatprep.subr.mxu0 0.0
        %4440 = vmatpush1.msra.mxu0 0.0
        %4441 = vmatprep.subr.mxu0 0.0
        %4442 = vmatpush1.msra.mxu0 0.0
        %4443 = vmatprep.subr.mxu0 0.0
        %4444 = vmatpush1.msra.mxu0 0.0
        %4445 = vmatprep.mubr.f32.mxu0 0.0
        %4446 = vmatmul.mubr.f32.gmra.mrb[0].mxu0 %v4379
        %v4447 = vpop.f32.mrb[0].mxu0
        %v4448 = vadd.f32 0.0, %v4447
        %v4449 = vpop.f32.mrb[0].mxu0
        %4450 = vdwg.mxu0
        %v4452 = vsel %vm1497, %v4224, 0
        %4454 = vmatprep.subr.mxu0 0.0
        %4455 = vmatpush1.msra.mxu0 %v4303
        %4456 = vmatprep.subr.mxu0 0.0
        %4457 = vmatpush1.msra.mxu0 0.0
        %4458 = vmatprep.subr.mxu0 0.0
        %4459 = vmatpush1.msra.mxu0 0.0
        %4460 = vmatprep.subr.mxu0 0.0
        %4461 = vmatpush1.msra.mxu0 0.0
        %4462 = vmatprep.subr.mxu0 0.0
        %4463 = vmatpush1.msra.mxu0 0.0
        %4464 = vmatprep.subr.mxu0 0.0
        %4465 = vmatpush1.msra.mxu0 0.0
        %4466 = vmatprep.subr.mxu0 0.0
        %4467 = vmatpush1.msra.mxu0 0.0
        %4468 = vmatprep.subr.mxu0 0.0
        %4469 = vmatpush1.msra.mxu0 0.0
        %4470 = vmatprep.subr.mxu0 0.0
        %4471 = vmatpush1.msra.mxu0 0.0
        %4472 = vmatprep.subr.mxu0 0.0
        %4473 = vmatpush1.msra.mxu0 0.0
        %4474 = vmatprep.subr.mxu0 0.0
        %4475 = vmatpush1.msra.mxu0 0.0
        %4476 = vmatprep.subr.mxu0 0.0
        %4477 = vmatpush1.msra.mxu0 0.0
        %4478 = vmatprep.subr.mxu0 0.0
        %4479 = vmatpush1.msra.mxu0 0.0
        %4480 = vmatprep.subr.mxu0 0.0
        %4481 = vmatpush1.msra.mxu0 0.0
        %4482 = vmatprep.subr.mxu0 0.0
        %4483 = vmatpush1.msra.mxu0 0.0
        %4484 = vmatprep.subr.mxu0 0.0
        %4485 = vmatpush1.msra.mxu0 0.0
        %4486 = vmatprep.subr.mxu0 0.0
        %4487 = vmatpush1.msra.mxu0 0.0
        %4488 = vmatprep.subr.mxu0 0.0
        %4489 = vmatpush1.msra.mxu0 0.0
        %4490 = vmatprep.subr.mxu0 0.0
        %4491 = vmatpush1.msra.mxu0 0.0
        %4492 = vmatprep.subr.mxu0 0.0
        %4493 = vmatpush1.msra.mxu0 0.0
        %4494 = vmatprep.subr.mxu0 0.0
        %4495 = vmatpush1.msra.mxu0 0.0
        %4496 = vmatprep.subr.mxu0 0.0
        %4497 = vmatpush1.msra.mxu0 0.0
        %4498 = vmatprep.subr.mxu0 0.0
        %4499 = vmatpush1.msra.mxu0 0.0
        %4500 = vmatprep.subr.mxu0 0.0
        %4501 = vmatpush1.msra.mxu0 0.0
        %4502 = vmatprep.subr.mxu0 0.0
        %4503 = vmatpush1.msra.mxu0 0.0
        %4504 = vmatprep.subr.mxu0 0.0
        %4505 = vmatpush1.msra.mxu0 0.0
        %4506 = vmatprep.subr.mxu0 0.0
        %4507 = vmatpush1.msra.mxu0 0.0
        %4508 = vmatprep.subr.mxu0 0.0
        %4509 = vmatpush1.msra.mxu0 0.0
        %4510 = vmatprep.subr.mxu0 0.0
        %4511 = vmatpush1.msra.mxu0 0.0
        %4512 = vmatprep.subr.mxu0 0.0
        %4513 = vmatpush1.msra.mxu0 0.0
        %4514 = vmatprep.subr.mxu0 0.0
        %4515 = vmatpush1.msra.mxu0 0.0
        %4516 = vmatprep.subr.mxu0 0.0
        %4517 = vmatpush1.msra.mxu0 0.0
        %4518 = vmatprep.mubr.f32.mxu0 0.0
        %4519 = vmatmul.mubr.f32.gmra.mrb[0].mxu0 %v4452
        %v4520 = vpop.f32.mrb[0].mxu0
        %v4521 = vadd.f32 0.0, %v4520
        %v4522 = vpop.f32.mrb[0].mxu0
        %4523 = vdwg.mxu0
        %v4525 = vsel %vm1497, %v4297, 0
        %4527 = vmatprep.subr.mxu0 0.0
        %4528 = vmatpush1.msra.mxu0 %v4304
        %4529 = vmatprep.subr.mxu0 0.0
        %4530 = vmatpush1.msra.mxu0 0.0
        %4531 = vmatprep.subr.mxu0 0.0
        %4532 = vmatpush1.msra.mxu0 0.0
        %4533 = vmatprep.subr.mxu0 0.0
        %4534 = vmatpush1.msra.mxu0 0.0
        %4535 = vmatprep.subr.mxu0 0.0
        %4536 = vmatpush1.msra.mxu0 0.0
        %4537 = vmatprep.subr.mxu0 0.0
        %4538 = vmatpush1.msra.mxu0 0.0
        %4539 = vmatprep.subr.mxu0 0.0
        %4540 = vmatpush1.msra.mxu0 0.0
        %4541 = vmatprep.subr.mxu0 0.0
        %4542 = vmatpush1.msra.mxu0 0.0
        %4543 = vmatprep.subr.mxu0 0.0
        %4544 = vmatpush1.msra.mxu0 0.0
        %4545 = vmatprep.subr.mxu0 0.0
        %4546 = vmatpush1.msra.mxu0 0.0
        %4547 = vmatprep.subr.mxu0 0.0
        %4548 = vmatpush1.msra.mxu0 0.0
        %4549 = vmatprep.subr.mxu0 0.0
        %4550 = vmatpush1.msra.mxu0 0.0
        %4551 = vmatprep.subr.mxu0 0.0
        %4552 = vmatpush1.msra.mxu0 0.0
        %4553 = vmatprep.subr.mxu0 0.0
        %4554 = vmatpush1.msra.mxu0 0.0
        %4555 = vmatprep.subr.mxu0 0.0
        %4556 = vmatpush1.msra.mxu0 0.0
        %4557 = vmatprep.subr.mxu0 0.0
        %4558 = vmatpush1.msra.mxu0 0.0
        %4559 = vmatprep.subr.mxu0 0.0
        %4560 = vmatpush1.msra.mxu0 0.0
        %4561 = vmatprep.subr.mxu0 0.0
        %4562 = vmatpush1.msra.mxu0 0.0
        %4563 = vmatprep.subr.mxu0 0.0
        %4564 = vmatpush1.msra.mxu0 0.0
        %4565 = vmatprep.subr.mxu0 0.0
        %4566 = vmatpush1.msra.mxu0 0.0
        %4567 = vmatprep.subr.mxu0 0.0
        %4568 = vmatpush1.msra.mxu0 0.0
        %4569 = vmatprep.subr.mxu0 0.0
        %4570 = vmatpush1.msra.mxu0 0.0
        %4571 = vmatprep.subr.mxu0 0.0
        %4572 = vmatpush1.msra.mxu0 0.0
        %4573 = vmatprep.subr.mxu0 0.0
        %4574 = vmatpush1.msra.mxu0 0.0
        %4575 = vmatprep.subr.mxu0 0.0
        %4576 = vmatpush1.msra.mxu0 0.0
        %4577 = vmatprep.subr.mxu0 0.0
        %4578 = vmatpush1.msra.mxu0 0.0
        %4579 = vmatprep.subr.mxu0 0.0
        %4580 = vmatpush1.msra.mxu0 0.0
        %4581 = vmatprep.subr.mxu0 0.0
        %4582 = vmatpush1.msra.mxu0 0.0
        %4583 = vmatprep.subr.mxu0 0.0
        %4584 = vmatpush1.msra.mxu0 0.0
        %4585 = vmatprep.subr.mxu0 0.0
        %4586 = vmatpush1.msra.mxu0 0.0
        %4587 = vmatprep.subr.mxu0 0.0
        %4588 = vmatpush1.msra.mxu0 0.0
        %4589 = vmatprep.subr.mxu0 0.0
        %4590 = vmatpush1.msra.mxu0 0.0
        %4591 = vmatprep.mubr.f32.mxu0 0.0
        %4592 = vmatmul.mubr.f32.gmra.mrb[0].mxu0 %v4525
        %v4593 = vpop.f32.mrb[0].mxu0
        %v4594 = vadd.f32 0.0, %v4593
        %v4595 = vpop.f32.mrb[0].mxu0
        %4596 = vdwg.mxu0
        %v4597 = vsel %vm493, %v4375, 0.0
        %v4598 = vsel %vm493, %v4448, 0.0
        %v4599 = vadd.f32 %v4597, %v4598
        %v4600 = vsel %vm493, %v4521, 0.0
        %v4601 = vadd.f32 %v4599, %v4600
        %v4602 = vsel %vm493, %v4594, 0.0
        %v4603 = vadd.f32 %v4601, %v4602
        %s4604 = scalar_lea.vmem %s6, 1
        %v4605 = vld [vmem:[%s4604] sm:$0x1]
        %v4607 = vlaneseq
        %v4608 = vshrl.u32 %v4607, 7
        %v4609 = vsub.s32 0, %v4608
        %v4610 = vrot.slane %v4605, %v4609
        %v4612 = vadd.f32 %v4603, %v4610
        %v4613 = vadd.f32 %v4612, %v2682
        %s4614 = scalar_lea.vmem %s7, 1
        %v4615 = vld [vmem:[%s4614] sm:$0x1]
        %s4616 = scalar_lea.vmem %s8, 1
        %v4617 = vld [vmem:[%s4616] sm:$0x1]
        %v4618 = vsel %vm493, %v4613, 0.0
        %4619 = vadd.xlane.f32.xlu0 %v4618
        %v4620 = vpop.xlane.xlu0 %4619
        %v4621 = vmul.f32 %v4620, %v497
        %v4622 = vsub.f32 %v4613, %v4621
        %v4623 = vmul.f32 %v4622, %v4622
        %v4624 = vsel %vm493, %v4623, 0.0
        %4625 = vadd.xlane.f32.xlu0 %v4624
        %v4626 = vpop.xlane.xlu0 %4625
        %v4627 = vmul.f32 %v4626, %v497
        %v4628 = vadd.f32 %v4627, 1e-05
        %v4629 = vrsqrt.pop %v4628
        %v4630 = vmul.f32 %v4622, %v4629
        %v4632 = vlaneseq
        %v4633 = vshrl.u32 %v4632, 7
        %v4634 = vsub.s32 0, %v4633
        %v4635 = vrot.slane %v4615, %v4634
        %v4637 = vmul.f32 %v4630, %v4635
        %v4639 = vlaneseq
        %v4640 = vshrl.u32 %v4639, 7
        %v4641 = vsub.s32 0, %v4640
        %v4642 = vrot.slane %v4617, %v4641
        %v4644 = vadd.f32 %v4637, %v4642
        %s4645 = scalar_lea.vmem %s9, 32
        %v4646 = vld [vmem:[%s4645] sm:$0xff]
        %v4647 = vld [vmem:[%s4645 + $0x8] sm:$0xff]
        %v4648 = vld [vmem:[%s4645 + $0x10] sm:$0xff]
        %v4649 = vld [vmem:[%s4645 + $0x18] sm:$0xff]
        %s4650 = scalar_lea.vmem %s10, 1
        %v4651 = vld [vmem:[%s4650] sm:$0x1]
        %v4653 = vlaneseq
        %v4654 = vshrl.u32 %v4653, 7
        %v4655 = vsub.s32 0, %v4654
        %v4656 = vrot.slane %v4651, %v4655
        %v4659 = vsel %vm493, %v4644, 0
        %4661 = vmatprep.subr.mxu0 0.0
        %4662 = vmatpush1.msra.mxu0 %v4646
        %4663 = vmatprep.subr.mxu0 0.0
        %4664 = vmatpush1.msra.mxu0 %v4647
        %4665 = vmatprep.subr.mxu0 0.0
        %4666 = vmatpush1.msra.mxu0 %v4648
        %4667 = vmatprep.subr.mxu0 0.0
        %4668 = vmatpush1.msra.mxu0 %v4649
        %4669 = vmatprep.subr.mxu0 0.0
        %4670 = vmatpush1.msra.mxu0 0.0
        %4671 = vmatprep.subr.mxu0 0.0
        %4672 = vmatpush1.msra.mxu0 0.0
        %4673 = vmatprep.subr.mxu0 0.0
        %4674 = vmatpush1.msra.mxu0 0.0
        %4675 = vmatprep.subr.mxu0 0.0
        %4676 = vmatpush1.msra.mxu0 0.0
        %4677 = vmatprep.subr.mxu0 0.0
        %4678 = vmatpush1.msra.mxu0 0.0
        %4679 = vmatprep.subr.mxu0 0.0
        %4680 = vmatpush1.msra.mxu0 0.0
        %4681 = vmatprep.subr.mxu0 0.0
        %4682 = vmatpush1.msra.mxu0 0.0
        %4683 = vmatprep.subr.mxu0 0.0
        %4684 = vmatpush1.msra.mxu0 0.0
        %4685 = vmatprep.subr.mxu0 0.0
        %4686 = vmatpush1.msra.mxu0 0.0
        %4687 = vmatprep.subr.mxu0 0.0
        %4688 = vmatpush1.msra.mxu0 0.0
        %4689 = vmatprep.subr.mxu0 0.0
        %4690 = vmatpush1.msra.mxu0 0.0
        %4691 = vmatprep.subr.mxu0 0.0
        %4692 = vmatpush1.msra.mxu0 0.0
        %4693 = vmatprep.subr.mxu0 0.0
        %4694 = vmatpush1.msra.mxu0 0.0
        %4695 = vmatprep.subr.mxu0 0.0
        %4696 = vmatpush1.msra.mxu0 0.0
        %4697 = vmatprep.subr.mxu0 0.0
        %4698 = vmatpush1.msra.mxu0 0.0
        %4699 = vmatprep.subr.mxu0 0.0
        %4700 = vmatpush1.msra.mxu0 0.0
        %4701 = vmatprep.subr.mxu0 0.0
        %4702 = vmatpush1.msra.mxu0 0.0
        %4703 = vmatprep.subr.mxu0 0.0
        %4704 = vmatpush1.msra.mxu0 0.0
        %4705 = vmatprep.subr.mxu0 0.0
        %4706 = vmatpush1.msra.mxu0 0.0
        %4707 = vmatprep.subr.mxu0 0.0
        %4708 = vmatpush1.msra.mxu0 0.0
        %4709 = vmatprep.subr.mxu0 0.0
        %4710 = vmatpush1.msra.mxu0 0.0
        %4711 = vmatprep.subr.mxu0 0.0
        %4712 = vmatpush1.msra.mxu0 0.0
        %4713 = vmatprep.subr.mxu0 0.0
        %4714 = vmatpush1.msra.mxu0 0.0
        %4715 = vmatprep.subr.mxu0 0.0
        %4716 = vmatpush1.msra.mxu0 0.0
        %4717 = vmatprep.subr.mxu0 0.0
        %4718 = vmatpush1.msra.mxu0 0.0
        %4719 = vmatprep.subr.mxu0 0.0
        %4720 = vmatpush1.msra.mxu0 0.0
        %4721 = vmatprep.subr.mxu0 0.0
        %4722 = vmatpush1.msra.mxu0 0.0
        %4723 = vmatprep.subr.mxu0 0.0
        %4724 = vmatpush1.msra.mxu0 0.0
        %4725 = vmatprep.mubr.f32.mxu0 0.0
        %4726 = vmatmul.mubr.f32.gmra.mrb[0].mxu0 %v4659
        %v4727 = vpop.f32.mrb[0].mxu0
        %v4728 = vadd.f32 %v4656, %v4727
        %v4729 = vpop.f32.mrb[0].mxu0
        %4730 = vdwg.mxu0
        %v4731 = vmax.f32 %v4728, 0.0
        %s4732 = scalar_lea.vmem %s11, 64
        %v4733 = vld [vmem:[%s4732] sm:$0xff]
        %v4734 = vld [vmem:[%s4732 + $0x8] sm:$0xff]
        %v4735 = vld [vmem:[%s4732 + $0x10] sm:$0xff]
        %v4736 = vld [vmem:[%s4732 + $0x18] sm:$0xff]
        %v4737 = vld [vmem:[%s4732 + $0x20] sm:$0xff]
        %v4738 = vld [vmem:[%s4732 + $0x28] sm:$0xff]
        %v4739 = vld [vmem:[%s4732 + $0x30] sm:$0xff]
        %v4740 = vld [vmem:[%s4732 + $0x38] sm:$0xff]
        %s4741 = scalar_lea.vmem %s12, 1
        %v4742 = vld [vmem:[%s4741] sm:$0x1]
        %v4744 = vlaneseq
        %v4745 = vshrl.u32 %v4744, 7
        %v4746 = vsub.s32 0, %v4745
        %v4747 = vrot.slane %v4742, %v4746
        %v4750 = vsel %vm2579, %v4731, 0
        %4752 = vmatprep.subr.mxu0 0.0
        %4753 = vmatpush1.msra.mxu0 %v4733
        %4754 = vmatprep.subr.mxu0 0.0
        %4755 = vmatpush1.msra.mxu0 %v4734
        %4756 = vmatprep.subr.mxu0 0.0
        %4757 = vmatpush1.msra.mxu0 %v4735
        %4758 = vmatprep.subr.mxu0 0.0
        %4759 = vmatpush1.msra.mxu0 %v4736
        %4760 = vmatprep.subr.mxu0 0.0
        %4761 = vmatpush1.msra.mxu0 %v4737
        %4762 = vmatprep.subr.mxu0 0.0
        %4763 = vmatpush1.msra.mxu0 %v4738
        %4764 = vmatprep.subr.mxu0 0.0
        %4765 = vmatpush1.msra.mxu0 %v4739
        %4766 = vmatprep.subr.mxu0 0.0
        %4767 = vmatpush1.msra.mxu0 %v4740
        %4768 = vmatprep.subr.mxu0 0.0
        %4769 = vmatpush1.msra.mxu0 0.0
        %4770 = vmatprep.subr.mxu0 0.0
        %4771 = vmatpush1.msra.mxu0 0.0
        %4772 = vmatprep.subr.mxu0 0.0
        %4773 = vmatpush1.msra.mxu0 0.0
        %4774 = vmatprep.subr.mxu0 0.0
        %4775 = vmatpush1.msra.mxu0 0.0
        %4776 = vmatprep.subr.mxu0 0.0
        %4777 = vmatpush1.msra.mxu0 0.0
        %4778 = vmatprep.subr.mxu0 0.0
        %4779 = vmatpush1.msra.mxu0 0.0
        %4780 = vmatprep.subr.mxu0 0.0
        %4781 = vmatpush1.msra.mxu0 0.0
        %4782 = vmatprep.subr.mxu0 0.0
        %4783 = vmatpush1.msra.mxu0 0.0
        %4784 = vmatprep.subr.mxu0 0.0
        %4785 = vmatpush1.msra.mxu0 0.0
        %4786 = vmatprep.subr.mxu0 0.0
        %4787 = vmatpush1.msra.mxu0 0.0
        %4788 = vmatprep.subr.mxu0 0.0
        %4789 = vmatpush1.msra.mxu0 0.0
        %4790 = vmatprep.subr.mxu0 0.0
        %4791 = vmatpush1.msra.mxu0 0.0
        %4792 = vmatprep.subr.mxu0 0.0
        %4793 = vmatpush1.msra.mxu0 0.0
        %4794 = vmatprep.subr.mxu0 0.0
        %4795 = vmatpush1.msra.mxu0 0.0
        %4796 = vmatprep.subr.mxu0 0.0
        %4797 = vmatpush1.msra.mxu0 0.0
        %4798 = vmatprep.subr.mxu0 0.0
        %4799 = vmatpush1.msra.mxu0 0.0
        %4800 = vmatprep.subr.mxu0 0.0
        %4801 = vmatpush1.msra.mxu0 0.0
        %4802 = vmatprep.subr.mxu0 0.0
        %4803 = vmatpush1.msra.mxu0 0.0
        %4804 = vmatprep.subr.mxu0 0.0
        %4805 = vmatpush1.msra.mxu0 0.0
        %4806 = vmatprep.subr.mxu0 0.0
        %4807 = vmatpush1.msra.mxu0 0.0
        %4808 = vmatprep.subr.mxu0 0.0
        %4809 = vmatpush1.msra.mxu0 0.0
        %4810 = vmatprep.subr.mxu0 0.0
        %4811 = vmatpush1.msra.mxu0 0.0
        %4812 = vmatprep.subr.mxu0 0.0
        %4813 = vmatpush1.msra.mxu0 0.0
        %4814 = vmatprep.subr.mxu0 0.0
        %4815 = vmatpush1.msra.mxu0 0.0
        %4816 = vmatprep.mubr.f32.mxu0 0.0
        %4817 = vmatmul.mubr.f32.gmra.mrb[0].mxu0 %v4750
        %v4818 = vpop.f32.mrb[0].mxu0
        %v4819 = vadd.f32 %v4747, %v4818
        %v4820 = vpop.f32.mrb[0].mxu0
        %4821 = vdwg.mxu0
        %v4822 = vadd.f32 %v4819, %v4644
        %s4823 = scalar_lea.vmem %s13, 1
        %v4824 = vld [vmem:[%s4823] sm:$0x1]
        %s4825 = scalar_lea.vmem %s14, 1
        %v4826 = vld [vmem:[%s4825] sm:$0x1]
        %v4827 = vsel %vm493, %v4822, 0.0
        %4828 = vadd.xlane.f32.xlu0 %v4827
        %v4829 = vpop.xlane.xlu0 %4828
        %v4830 = vmul.f32 %v4829, %v497
        %v4831 = vsub.f32 %v4822, %v4830
        %v4832 = vmul.f32 %v4831, %v4831
        %v4833 = vsel %vm493, %v4832, 0.0
        %4834 = vadd.xlane.f32.xlu0 %v4833
        %v4835 = vpop.xlane.xlu0 %4834
        %v4836 = vmul.f32 %v4835, %v497
        %v4837 = vadd.f32 %v4836, 1e-05
        %v4838 = vrsqrt.pop %v4837
        %v4839 = vmul.f32 %v4831, %v4838
        %v4841 = vlaneseq
        %v4842 = vshrl.u32 %v4841, 7
        %v4843 = vsub.s32 0, %v4842
        %v4844 = vrot.slane %v4824, %v4843
        %v4846 = vmul.f32 %v4839, %v4844
        %v4848 = vlaneseq
        %v4849 = vshrl.u32 %v4848, 7
        %v4850 = vsub.s32 0, %v4849
        %v4851 = vrot.slane %v4826, %v4850
        %v4853 = vadd.f32 %v4846, %v4851
        %4854 = vst.msk [vmem:[%s485] sm:$0xff] %vm493, %v4853
        %s4855 = sand.u32 %s357, 1
        %s4856 = scalar_lea.sflag [#allocation3], %s4855
        %s4857 = sand.u32 %s357, 1
        %s4858 = smul.addr %s4857, 8
        %s4859 = scalar_lea.vmem [#allocation2], %s4858
        // Predicated region
        $region81: #{tpu_custom_call.1} parent=79 // pred_check
          %p4860 = pneg %p367
        $region82: #{tpu_custom_call.1} parent=79 // pred_check_branch
          %4862 = sbr.rel (%p4860) target = $region84
        $region83: #{tpu_custom_call.1} parent=79 // pred_region
          %s4864 = ssub.s32 128, 128
          %4865 = vsyncadd %s4856, %s4864
          %s4866 = smul.addr %s29, 128
          %s4867 = scalar_lea.hbm %s15, %s4866
          %s4869 = sshll.u32 %s4859, 4
          %s4870 = int_to_ptr.vmem [resolvable:$true] %s4869
          %4872 = dma.vmem_to_hbm [thread:$0]  %s4870, 128, %s4867, %s4856
        $region84: #{tpu_custom_call.1} parent=79 // pred_fallthru
          _
      $region80: #{tpu_custom_call.1} parent=5 // pred_fallthru
        _
      %p4873 = scmp.le.s32.totalorder 2, %s24
      // Predicated region
      $region85: #{tpu_custom_call.1} parent=5 // pred_check
        %p4874 = pneg %p4873
      $region86: #{tpu_custom_call.1} parent=5 // pred_check_branch
        %4876 = sbr.rel (%p4874) target = $region88
      $region87: #{tpu_custom_call.1} parent=5 // pred_region
        %s4877 = ssub.s32 %s24, 2
        // Predicated region
        $region89: #{tpu_custom_call.1} parent=87 // pred_check
          %p4878 = pneg %p373
        $region90: #{tpu_custom_call.1} parent=87 // pred_check_branch
          %4880 = sbr.rel (%p4878) target = $region92
        $region91: #{tpu_custom_call.1} parent=87 // pred_region
          %s4881 = sand.u32 %s358, 1
          %s4882 = scalar_lea.sflag [#allocation3], %s4881
          %s4883 = sand.u32 %s358, 1
          %s4884 = smul.addr %s4883, 8
          %s4885 = scalar_lea.vmem [#allocation2], %s4884
          %4886 = dma.done %s4882, 128
        $region92: #{tpu_custom_call.1} parent=87 // pred_fallthru
          _
      $region88: #{tpu_custom_call.1} parent=5 // pred_fallthru
        _
    $region6: #{tpu_custom_call.1} parent=1 // loop_footer
      %s28 = sadd.s32 1, %s24
    $region7: #{tpu_custom_call.1} parent=1 // loop_footer_branch
      %23 = sbr.rel target = $region3
    $region8: #{tpu_custom_call.1} parent=1 // loop_exit
      _
    %4887 = vsyncpa [#allocation3], 1
    %s4888 = scalar_lea.sflag [#allocation3], 1
    %4889 = vsyncpa %s4888, 1

</llo_original>
